<compile_context>
chip_gen: v7x
topology: tpu7x:2x2x1
jax: 0.10.0
libtpu: 0.0.40
codegen_flags: <defaults>
</compile_context>

<pallas_src>
import math
import functools

import numpy as np
import jax
import jax.numpy as jnp
from jax import lax
from jax.experimental import pallas as pl
from jax.experimental.pallas import tpu as pltpu


# Matmul operands are cast to this dtype (MXU-native); accumulation is always
# f32.  Set to jnp.float32 to restore an exact-f32 validation path.
_MATMUL_DTYPE = jnp.bfloat16

_STACK_KEYS = (
    "s_wq", "s_wk", "s_wv", "s_bq", "s_bk", "s_bv", "s_wo", "s_bo", "s_lng", "s_lnb",
    "c_wq", "c_wk", "c_wv", "c_bq", "c_bk", "c_bv", "c_wo", "c_bo", "c_lng", "c_lnb",
    "f_w1", "f_b1", "f_w2", "f_b2", "f_lng", "f_lnb",
)
_N_FIXED = 7  # dec0, enc, nopad, ypad, xpad, enc-LN gamma, enc-LN beta


# -----------------------------------------------------------------------------
# Positional encoding table (frozen, padding row zeroed) -- plain numpy setup.
# -----------------------------------------------------------------------------
def positional_encoding(n_pos, d_model, pad_idx):
    pos = np.arange(n_pos, dtype=np.float64)[:, None]
    i = np.arange(d_model, dtype=np.float64)[None, :]
    angle = pos / np.power(10000.0, 2.0 * (i // 2) / d_model)
    table = np.zeros((n_pos, d_model), dtype=np.float64)
    table[:, 0::2] = np.sin(angle[:, 0::2])
    table[:, 1::2] = np.cos(angle[:, 1::2])
    table[pad_idx] = 0.0
    return jnp.asarray(table, jnp.float32)


# -----------------------------------------------------------------------------
# In-kernel helpers.
# -----------------------------------------------------------------------------
def _ln(x, g, b, eps=1e-6):
    mu = jnp.mean(x, axis=-1, keepdims=True)
    var = jnp.mean((x - mu) ** 2, axis=-1, keepdims=True)
    return (x - mu) * lax.rsqrt(var + eps) * g + b


def _fused_mha(q_in, kv_in, bias, nopad, ctx_buf,
               wq, wk, wv, bq, bk, bv, wo, bo, lng, lnb,
               *, n_head, d_k, d_v):
    """Multi-head attention with fused projections + residual + LayerNorm + pad zeroing.

    q_in:(Bb,Lq,D) kv_in:(Bb,Lk,D) f32; bias:(Bb,{Lq|1},Lk) additive mask (0/-1e9);
    nopad:(Bb,Lq,1) f32; ctx_buf: VMEM ref (Bb*Lq, H*dv) f32.
    wq/wk:(D,H*dk), wv:(D,H*dv), wo:(H*dv,D) in _MATMUL_DTYPE (1/sqrt(dk) is
    pre-folded into wq/bq); biases / LayerNorm params f32.
    """
    Bb, Lq, D = q_in.shape
    Lk = kv_in.shape[1]
    mm = _MATMUL_DTYPE
    residual = q_in

    x2 = q_in.reshape(Bb * Lq, D).astype(mm)
    kv2 = kv_in.reshape(Bb * Lk, D).astype(mm)

    # Fused projections: one wide (M = Bb*L, N = H*dk | H*dv) matmul each.
    q = jnp.dot(x2, wq, preferred_element_type=jnp.float32) + bq
    k = jnp.dot(kv2, wk, preferred_element_type=jnp.float32) + bk
    v = jnp.dot(kv2, wv, preferred_element_type=jnp.float32) + bv
    q = q.reshape(Bb, Lq, n_head * d_k).astype(mm)
    k = k.reshape(Bb, Lk, n_head * d_k).astype(mm)
    v = v.reshape(Bb, Lk, n_head * d_v).astype(mm)

    # Per-head scores / softmax / context (static lane slices, batched over Bb).
    # TODO(synk): switch to a KV-chunked online softmax when H*Lq*Lk*4B
    # approaches the VMEM budget (long sequences, esp. v7x's 64 MiB).
    for h in range(n_head):
        qh = q[:, :, h * d_k:(h + 1) * d_k]
        kh = k[:, :, h * d_k:(h + 1) * d_k]
        vh = v[:, :, h * d_v:(h + 1) * d_v]
        s = jnp.einsum("bqd,bkd->bqk", qh, kh,
                       preferred_element_type=jnp.float32)
        s = s + bias                                        # additive mask (0 / -1e9)
        m = jnp.max(s, axis=-1, keepdims=True)
        e = jnp.exp(s - m)
        p = e * pl.reciprocal(jnp.sum(e, axis=-1, keepdims=True), approx=True)
        ctx_h = jnp.einsum("bqk,bkv->bqv", p.astype(mm), vh,
                           preferred_element_type=jnp.float32)
        ctx_buf[:, h * d_v:(h + 1) * d_v] = ctx_h.reshape(Bb * Lq, d_v)

    # Fused output projection: contract all heads on the MXU K dim.
    ctx = ctx_buf[...]                                       # (Bb*Lq, H*dv)
    o = jnp.dot(ctx.astype(mm), wo, preferred_element_type=jnp.float32) + bo
    o = o.reshape(Bb, Lq, D)
    return _ln(o + residual, lng, lnb) * nopad


# -----------------------------------------------------------------------------
# Fused decoder-stack kernel.  Grid = (batch_blocks, layer); layer innermost.
# -----------------------------------------------------------------------------
def _decoder_stack_kernel(*refs, n_head, d_k, d_v):
    n_stack = len(_STACK_KEYS)
    dec0_ref, enc_ref, nopad_ref, ypad_ref, xpad_ref, eg_ref, eb_ref = refs[:_N_FIXED]
    lp = dict(zip(_STACK_KEYS, refs[_N_FIXED:_N_FIXED + n_stack]))
    out_ref = refs[_N_FIXED + n_stack]
    dec_acc, enc_norm, self_bias, cross_bias, ctx_buf = refs[_N_FIXED + n_stack + 1:]

    layer = pl.program_id(1)
    Bb, Lyp, D = dec_acc.shape
    Lxp = enc_norm.shape[1]
    mm = _MATMUL_DTYPE

    # Once per batch block: LayerNorm the encoder output, load the initial decoder
    # activation, and build the additive attention-mask biases (reused across layers).
    @pl.when(layer == 0)
    def _init():
        enc_norm[...] = _ln(enc_ref[...], eg_ref[...], eb_ref[...])
        dec_acc[...] = dec0_ref[...]
        row = lax.broadcasted_iota(jnp.int32, (Lyp, Lyp), 0)
        col = lax.broadcasted_iota(jnp.int32, (Lyp, Lyp), 1)
        causal = (col > row).astype(jnp.float32)[None]            # (1, Lyp, Lyp)
        self_bias[...] = jnp.where(causal + ypad_ref[...] > 0.0, -1e9, 0.0)
        cross_bias[...] = jnp.where(xpad_ref[...] > 0.0, -1e9, 0.0)

    x = dec_acc[...]                 # (Bb, Lyp, D) f32, resident across layers
    enc = enc_norm[...]              # (Bb, Lxp, D) f32
    nopad = nopad_ref[...]           # (Bb, Lyp, 1)  1.0 where y != pad
    sbias = self_bias[...]           # (Bb, Lyp, Lyp) additive mask
    cbias = cross_bias[...]          # (Bb, 1, Lxp)   additive mask

    # --- masked self attention ---
    x = _fused_mha(x, x, sbias, nopad, ctx_buf,
                   lp["s_wq"][0], lp["s_wk"][0], lp["s_wv"][0],
                   lp["s_bq"][0], lp["s_bk"][0], lp["s_bv"][0],
                   lp["s_wo"][0], lp["s_bo"][0], lp["s_lng"][0], lp["s_lnb"][0],
                   n_head=n_head, d_k=d_k, d_v=d_v)

    # --- encoder-decoder attention ---
    x = _fused_mha(x, enc, cbias, nopad, ctx_buf,
                   lp["c_wq"][0], lp["c_wk"][0], lp["c_wv"][0],
                   lp["c_bq"][0], lp["c_bk"][0], lp["c_bv"][0],
                   lp["c_wo"][0], lp["c_bo"][0], lp["c_lng"][0], lp["c_lnb"][0],
                   n_head=n_head, d_k=d_k, d_v=d_v)

    # --- position-wise feed forward ---
    residual = x
    x2 = x.reshape(Bb * Lyp, D).astype(mm)
    h = jnp.dot(x2, lp["f_w1"][0], preferred_element_type=jnp.float32) + lp["f_b1"][0]
    h = jnp.maximum(h, 0.0).astype(mm)
    o = jnp.dot(h, lp["f_w2"][0], preferred_element_type=jnp.float32) + lp["f_b2"][0]
    x = _ln(o.reshape(Bb, Lyp, D) + residual,
            lp["f_lng"][0], lp["f_lnb"][0]) * nopad

    dec_acc[...] = x

    @pl.when(layer == pl.num_programs(1) - 1)
    def _finalize():
        # TODO(synk): for D not a multiple of 128, pad/fold D (with count-aware
        # LayerNorm) so this store is lane-dense (avoids masked vst epilogue).
        out_ref[...] = x.astype(out_ref.dtype)


def _stack_spec(arr):
    """BlockSpec selecting the current layer's slice of a stacked param."""
    n_rest = arr.ndim - 1
    block = (1,) + tuple(arr.shape[1:])

    def idx(b, l):
        return (l,) + (0,) * n_rest

    return pl.BlockSpec(block, idx)


def _pick_batch_block(B, cap=8):
    """Largest divisor of B that is <= cap (amortizes layer-weight streaming)."""
    # TODO(synk): on v7x, if B // Bb < 2 the second TensorCore idles; trade a
    # smaller Bb (more weight re-streaming) for 2-core occupancy when needed.
    bb = min(B, cap)
    while B % bb:
        bb -= 1
    return max(bb, 1)


def _vmem_limit_bytes():
    cap = 64 * 1024 * 1024
    try:
        cap = int(getattr(pltpu.get_tpu_info(), "vmem_capacity_bytes", cap))
    except Exception:
        pass
    # ~96 MiB on v5e/v6e (128 MiB physical), ~48 MiB on v7x (64 MiB physical).
    return int(min(cap * 3 // 4, 100 * 1024 * 1024))


def decoder_stack(dec0, enc, nopad, ypad, xpad, ln_g, ln_b, stacked, *,
                  n_layer, n_head, d_k, d_v, batch_block=None):
    B, Lyp, D = dec0.shape
    Lxp = enc.shape[1]
    Bb = batch_block if batch_block is not None else _pick_batch_block(B)
    assert B % Bb == 0

    fixed_specs = [
        pl.BlockSpec((Bb, Lyp, D), lambda b, l: (b, 0, 0)),   # dec0
        pl.BlockSpec((Bb, Lxp, D), lambda b, l: (b, 0, 0)),   # enc (raw)
        pl.BlockSpec((Bb, Lyp, 1), lambda b, l: (b, 0, 0)),   # nopad
        pl.BlockSpec((Bb, 1, Lyp), lambda b, l: (b, 0, 0)),   # y key-pad
        pl.BlockSpec((Bb, 1, Lxp), lambda b, l: (b, 0, 0)),   # x key-pad
        pl.BlockSpec((1, D), lambda b, l: (0, 0)),            # enc-LN gamma
        pl.BlockSpec((1, D), lambda b, l: (0, 0)),            # enc-LN beta
    ]
    stack_specs = [_stack_spec(stacked[k]) for k in _STACK_KEYS]

    # TODO(synk): for large D/d_ff on v7x (64 MiB VMEM), K-tile f_w1/f_w2 and
    # the attention weight specs (extra grid axis / pltpu.emit_pipeline) and/or
    # quantize weights (int8 on v5e/v6e, fp8 on v7x) if weight-DMA-bound.
    return pl.pallas_call(
        functools.partial(_decoder_stack_kernel, n_head=n_head, d_k=d_k, d_v=d_v),
        out_shape=jax.ShapeDtypeStruct((B, Lyp, D), jnp.float32),
        grid=(B // Bb, n_layer),
        in_specs=fixed_specs + stack_specs,
        out_specs=pl.BlockSpec((Bb, Lyp, D), lambda b, l: (b, 0, 0)),
        scratch_shapes=[
            pltpu.VMEM((Bb, Lyp, D), jnp.float32),       # decoder activation (layer-resident)
            pltpu.VMEM((Bb, Lxp, D), jnp.float32),       # LayerNorm'd encoder output
            pltpu.VMEM((Bb, Lyp, Lyp), jnp.float32),     # self-attn additive mask bias
            pltpu.VMEM((Bb, 1, Lxp), jnp.float32),       # cross-attn additive mask bias
            pltpu.VMEM((Bb * Lyp, n_head * d_v), jnp.float32),  # per-head ctx staging
        ],
        compiler_params=pltpu.CompilerParams(
            dimension_semantics=("parallel", "arbitrary"),
            vmem_limit_bytes=_vmem_limit_bytes(),
        ),
    )(dec0, enc, nopad, ypad, xpad, ln_g, ln_b, *[stacked[k] for k in _STACK_KEYS])


# -----------------------------------------------------------------------------
# Pack per-layer params ONCE: stack on a leading n_layer axis, keep QKV fused
# (D, H*dk)/(D, H*dv) and WO fused (H*dv, D), fold 1/sqrt(d_k) into Wq/bq.
# -----------------------------------------------------------------------------
def _pack_layers(layers, n_head, d_k, d_v):
    hdk, hdv = n_head * d_k, n_head * d_v
    mm = _MATMUL_DTYPE
    inv_temp = 1.0 / math.sqrt(d_k)

    def stack(fn, dtype=jnp.float32):
        return jnp.stack([fn(lp) for lp in layers], axis=0).astype(dtype)

    packed = {}
    for pfx in ("s_", "c_"):
        wqkv_key, bqkv_key = pfx + "wqkv", pfx + "bqkv"
        packed[pfx + "wq"] = stack(lambda lp: lp[wqkv_key][:, :hdk] * inv_temp, mm)
        packed[pfx + "wk"] = stack(lambda lp: lp[wqkv_key][:, hdk:2 * hdk], mm)
        packed[pfx + "wv"] = stack(lambda lp: lp[wqkv_key][:, 2 * hdk:2 * hdk + hdv], mm)
        packed[pfx + "bq"] = stack(lambda lp: lp[bqkv_key][:, :hdk] * inv_temp)
        packed[pfx + "bk"] = stack(lambda lp: lp[bqkv_key][:, hdk:2 * hdk])
        packed[pfx + "bv"] = stack(lambda lp: lp[bqkv_key][:, 2 * hdk:2 * hdk + hdv])
        packed[pfx + "wo"] = stack(lambda lp: lp[pfx + "wo"], mm)
        packed[pfx + "bo"] = stack(lambda lp: lp[pfx + "bo"])
        packed[pfx + "lng"] = stack(lambda lp: lp[pfx + "lng"])
        packed[pfx + "lnb"] = stack(lambda lp: lp[pfx + "lnb"])
    packed["f_w1"] = stack(lambda lp: lp["f_w1"], mm)
    packed["f_b1"] = stack(lambda lp: lp["f_b1"])
    packed["f_w2"] = stack(lambda lp: lp["f_w2"], mm)
    packed["f_b2"] = stack(lambda lp: lp["f_b2"])
    packed["f_lng"] = stack(lambda lp: lp["f_lng"])
    packed["f_lnb"] = stack(lambda lp: lp["f_lnb"])
    return packed


# -----------------------------------------------------------------------------
# Parameter init (deterministic, synthetic).  Packing happens ONCE here.
# -----------------------------------------------------------------------------
def init_params(key, *, vocab, D, n_layer, n_head, d_k, d_v, d_ff, s_len, pad):
    keys = jax.random.split(key, 1 + n_layer)
    params = {
        "embedding": jax.random.normal(keys[0], (vocab, D), jnp.float32) * 0.1,
        "pos_table": positional_encoding(s_len + 1, D, pad),
        "ln_g": jnp.ones((D,), jnp.float32),
        "ln_b": jnp.zeros((D,), jnp.float32),
        "layers": [],
    }
    for l in range(n_layer):
        ks = jax.random.split(keys[1 + l], 4)
        nrm = lambda k, s: jax.random.normal(k, s, jnp.float32) * 0.05
        lp = {
            "s_wqkv": nrm(ks[0], (D, 2 * n_head * d_k + n_head * d_v)),
            "s_bqkv": jnp.zeros((1, 2 * n_head * d_k + n_head * d_v), jnp.float32),
            "s_wo": nrm(ks[1], (n_head * d_v, D)),
            "s_bo": jnp.zeros((1, D), jnp.float32),
            "s_lng": jnp.ones((1, D), jnp.float32),
            "s_lnb": jnp.zeros((1, D), jnp.float32),
            "c_wqkv": nrm(ks[2], (D, 2 * n_head * d_k + n_head * d_v)),
            "c_bqkv": jnp.zeros((1, 2 * n_head * d_k + n_head * d_v), jnp.float32),
            "c_wo": nrm(ks[3], (n_head * d_v, D)),
            "c_bo": jnp.zeros((1, D), jnp.float32),
            "c_lng": jnp.ones((1, D), jnp.float32),
            "c_lnb": jnp.zeros((1, D), jnp.float32),
            "f_w1": nrm(jax.random.fold_in(ks[0], 7), (D, d_ff)),
            "f_b1": jnp.zeros((1, d_ff), jnp.float32),
            "f_w2": nrm(jax.random.fold_in(ks[1], 7), (d_ff, D)),
            "f_b2": jnp.zeros((1, D), jnp.float32),
            "f_lng": jnp.ones((1, D), jnp.float32),
            "f_lnb": jnp.zeros((1, D), jnp.float32),
        }
        params["layers"].append(lp)
    # Pack / stack / cast weights once (not per forward call).
    params["stacked"] = _pack_layers(params["layers"], n_head, d_k, d_v)
    return params


# -----------------------------------------------------------------------------
# Full Decoder.forward
# -----------------------------------------------------------------------------
def _pad_to(arr, axis, multiple, value):
    size = arr.shape[axis]
    target = -(-size // multiple) * multiple
    if target == size:
        return arr
    widths = [(0, 0)] * arr.ndim
    widths[axis] = (0, target - size)
    return jnp.pad(arr, widths, constant_values=value)


def decoder_forward(params, x, y, pos, enc_output, cfg, dec_output=None):
    pad, D = cfg["pad"], cfg["model_size"]
    B, Ly = y.shape

    # TODO(synk): embedding / positional-table gathers kept in plain JAX glue.
    if dec_output is None:
        dec_output = params["embedding"][y] * math.sqrt(D) + params["pos_table"][pos]
    dec_output = dec_output.astype(jnp.float32)

    # Pad sequence axes up to multiples of 8 (sublane): keeps in-kernel
    # (Bb, L, D) <-> (Bb*L, D) reshapes layout-trivial; padded positions are
    # flagged as pad tokens so masks / nopad zero them out, and the extra
    # output rows are sliced off below.
    y_p = _pad_to(y, 1, 8, pad)
    x_p = _pad_to(x, 1, 8, pad)
    dec0 = _pad_to(dec_output, 1, 8, 0.0)
    enc = _pad_to(enc_output.astype(jnp.float32), 1, 8, 0.0)

    # O(L) pad vectors; the O(L^2) causal/self mask bias is built in the kernel.
    nopad = (y_p != pad).astype(jnp.float32)[:, :, None]    # (B, Lyp, 1)
    ypad = (y_p == pad).astype(jnp.float32)[:, None, :]     # (B, 1, Lyp)
    xpad = (x_p == pad).astype(jnp.float32)[:, None, :]     # (B, 1, Lxp)

    stacked = params.get("stacked")
    if stacked is None:  # fallback; normally packed once at init time
        stacked = _pack_layers(params["layers"], cfg["n_head"], cfg["d_k"], cfg["d_v"])

    out = decoder_stack(dec0, enc, nopad, ypad, xpad,
                        params["ln_g"].reshape(1, D), params["ln_b"].reshape(1, D),
                        stacked, n_layer=cfg["n_layer"], n_head=cfg["n_head"],
                        d_k=cfg["d_k"], d_v=cfg["d_v"])
    return out[:, :Ly, :]


# -----------------------------------------------------------------------------
if __name__ == "__main__":
    cfg = dict(pad=0, tgt_vocab_size=50, model_size=32, s_len=8,
               n_layer=2, n_head=4, d_k=8, d_v=8, d_inner=64)
    B, Ly, Lx, D = 2, 8, 10, cfg["model_size"]

    key = jax.random.PRNGKey(0)
    kp, k1, k2, k3 = jax.random.split(key, 4)

    params = init_params(kp, vocab=cfg["tgt_vocab_size"], D=D,
                         n_layer=cfg["n_layer"], n_head=cfg["n_head"],
                         d_k=cfg["d_k"], d_v=cfg["d_v"], d_ff=cfg["d_inner"],
                         s_len=cfg["s_len"], pad=cfg["pad"])

    # target tokens (with trailing pad in the second example)
    y = jax.random.randint(k1, (B, Ly), 1, cfg["tgt_vocab_size"], dtype=jnp.int32)
    y = y.at[1, 6:].set(cfg["pad"])
    # source tokens (with trailing pad in the second example)
    x = jax.random.randint(k2, (B, Lx), 1, 30, dtype=jnp.int32)
    x = x.at[1, 8:].set(cfg["pad"])
    # positions: 1..Ly, 0 where padded
    pos = jnp.broadcast_to(jnp.arange(1, Ly + 1, dtype=jnp.int32)[None, :], (B, Ly))
    pos = jnp.where(y == cfg["pad"], 0, pos)
    # encoder output
    enc_output = jax.random.normal(k3, (B, Lx, D), jnp.float32)

    out = decoder_forward(params, x, y, pos, enc_output, cfg)
    out = jax.block_until_ready(out)
    assert out.shape == (B, Ly, D) and out.dtype == jnp.float32
    assert bool(jnp.all(jnp.isfinite(out)))
    print("KERNEL_OK")
</pallas_src>

<mosaic_0001>
module attributes {stable_mosaic.version = 11 : i64} {
  func.func @_decoder_stack_kernel(%arg0: i32, %arg1: i32, %arg2: memref<2x8x32xf32, #tpu.memory_space<vmem>>, %arg3: memref<2x16x32xf32, #tpu.memory_space<vmem>>, %arg4: memref<2x8x1xf32, #tpu.memory_space<vmem>>, %arg5: memref<2x1x8xf32, #tpu.memory_space<vmem>>, %arg6: memref<2x1x16xf32, #tpu.memory_space<vmem>>, %arg7: memref<1x32xf32, #tpu.memory_space<vmem>>, %arg8: memref<1x32xf32, #tpu.memory_space<vmem>>, %arg9: memref<1x32x32xbf16, #tpu.memory_space<vmem>>, %arg10: memref<1x32x32xbf16, #tpu.memory_space<vmem>>, %arg11: memref<1x32x32xbf16, #tpu.memory_space<vmem>>, %arg12: memref<1x1x32xf32, #tpu.memory_space<vmem>>, %arg13: memref<1x1x32xf32, #tpu.memory_space<vmem>>, %arg14: memref<1x1x32xf32, #tpu.memory_space<vmem>>, %arg15: memref<1x32x32xbf16, #tpu.memory_space<vmem>>, %arg16: memref<1x1x32xf32, #tpu.memory_space<vmem>>, %arg17: memref<1x1x32xf32, #tpu.memory_space<vmem>>, %arg18: memref<1x1x32xf32, #tpu.memory_space<vmem>>, %arg19: memref<1x32x32xbf16, #tpu.memory_space<vmem>>, %arg20: memref<1x32x32xbf16, #tpu.memory_space<vmem>>, %arg21: memref<1x32x32xbf16, #tpu.memory_space<vmem>>, %arg22: memref<1x1x32xf32, #tpu.memory_space<vmem>>, %arg23: memref<1x1x32xf32, #tpu.memory_space<vmem>>, %arg24: memref<1x1x32xf32, #tpu.memory_space<vmem>>, %arg25: memref<1x32x32xbf16, #tpu.memory_space<vmem>>, %arg26: memref<1x1x32xf32, #tpu.memory_space<vmem>>, %arg27: memref<1x1x32xf32, #tpu.memory_space<vmem>>, %arg28: memref<1x1x32xf32, #tpu.memory_space<vmem>>, %arg29: memref<1x32x64xbf16, #tpu.memory_space<vmem>>, %arg30: memref<1x1x64xf32, #tpu.memory_space<vmem>>, %arg31: memref<1x64x32xbf16, #tpu.memory_space<vmem>>, %arg32: memref<1x1x32xf32, #tpu.memory_space<vmem>>, %arg33: memref<1x1x32xf32, #tpu.memory_space<vmem>>, %arg34: memref<1x1x32xf32, #tpu.memory_space<vmem>>, %arg35: memref<2x8x32xf32, #tpu.memory_space<vmem>>, %arg36: memref<2x8x32xf32, #tpu.memory_space<vmem>>, %arg37: memref<2x16x32xf32, #tpu.memory_space<vmem>>, %arg38: memref<2x8x8xf32, #tpu.memory_space<vmem>>, %arg39: memref<2x1x16xf32, #tpu.memory_space<vmem>>, %arg40: memref<16x32xf32, #tpu.memory_space<vmem>>) attributes {dimension_semantics = [#tpu.dimension_semantics<parallel>, #tpu.dimension_semantics<arbitrary>], iteration_bounds = array<i64: 1, 2>, scalar_prefetch = 0 : i64, scratch_operands = 5 : i64, tpu.core_type = #tpu.core_type<tc>, window_params = [{transform_indices = @transform_0, window_bounds = array<i64: 2, 8, 32>}, {transform_indices = @transform_1, window_bounds = array<i64: 2, 16, 32>}, {transform_indices = @transform_2, window_bounds = array<i64: 2, 8, 1>}, {transform_indices = @transform_3, window_bounds = array<i64: 2, 1, 8>}, {transform_indices = @transform_4, window_bounds = array<i64: 2, 1, 16>}, {pipeline_mode = #tpu.pipeline_mode<synchronous>, transform_indices = @transform_5, window_bounds = array<i64: 1, 32>}, {pipeline_mode = #tpu.pipeline_mode<synchronous>, transform_indices = @transform_6, window_bounds = array<i64: 1, 32>}, {transform_indices = @transform_7, window_bounds = array<i64: 1, 32, 32>}, {transform_indices = @transform_8, window_bounds = array<i64: 1, 32, 32>}, {transform_indices = @transform_9, window_bounds = array<i64: 1, 32, 32>}, {transform_indices = @transform_10, window_bounds = array<i64: 1, 1, 32>}, {transform_indices = @transform_11, window_bounds = array<i64: 1, 1, 32>}, {transform_indices = @transform_12, window_bounds = array<i64: 1, 1, 32>}, {transform_indices = @transform_13, window_bounds = array<i64: 1, 32, 32>}, {transform_indices = @transform_14, window_bounds = array<i64: 1, 1, 32>}, {transform_indices = @transform_15, window_bounds = array<i64: 1, 1, 32>}, {transform_indices = @transform_16, window_bounds = array<i64: 1, 1, 32>}, {transform_indices = @transform_17, window_bounds = array<i64: 1, 32, 32>}, {transform_indices = @transform_18, window_bounds = array<i64: 1, 32, 32>}, {transform_indices = @transform_19, window_bounds = array<i64: 1, 32, 32>}, {transform_indices = @transform_20, window_bounds = array<i64: 1, 1, 32>}, {transform_indices = @transform_21, window_bounds = array<i64: 1, 1, 32>}, {transform_indices = @transform_22, window_bounds = array<i64: 1, 1, 32>}, {transform_indices = @transform_23, window_bounds = array<i64: 1, 32, 32>}, {transform_indices = @transform_24, window_bounds = array<i64: 1, 1, 32>}, {transform_indices = @transform_25, window_bounds = array<i64: 1, 1, 32>}, {transform_indices = @transform_26, window_bounds = array<i64: 1, 1, 32>}, {transform_indices = @transform_27, window_bounds = array<i64: 1, 32, 64>}, {transform_indices = @transform_28, window_bounds = array<i64: 1, 1, 64>}, {transform_indices = @transform_29, window_bounds = array<i64: 1, 64, 32>}, {transform_indices = @transform_30, window_bounds = array<i64: 1, 1, 32>}, {transform_indices = @transform_31, window_bounds = array<i64: 1, 1, 32>}, {transform_indices = @transform_32, window_bounds = array<i64: 1, 1, 32>}, {transform_indices = @transform_33, window_bounds = array<i64: 2, 8, 32>}]} {
    %c0_i32 = arith.constant 0 : i32
    %0 = arith.cmpi eq, %arg1, %c0_i32 : i32
    %1 = arith.extui %0 : i1 to i32
    %c0_i32_0 = arith.constant 0 : i32
    %2 = arith.cmpi ne, %1, %c0_i32_0 : i32
    scf.if %2 {
      %c0_171 = arith.constant 0 : index
      %c0_172 = arith.constant 0 : index
      %c0_173 = arith.constant 0 : index
      %363 = vector.load %arg3[%c0_171, %c0_172, %c0_173] : memref<2x16x32xf32, #tpu.memory_space<vmem>>, vector<2x16x32xf32>
      %c0_174 = arith.constant 0 : index
      %c0_175 = arith.constant 0 : index
      %364 = vector.load %arg7[%c0_174, %c0_175] : memref<1x32xf32, #tpu.memory_space<vmem>>, vector<1x32xf32>
      %c0_176 = arith.constant 0 : index
      %c0_177 = arith.constant 0 : index
      %365 = vector.load %arg8[%c0_176, %c0_177] : memref<1x32xf32, #tpu.memory_space<vmem>>, vector<1x32xf32>
      %cst_178 = arith.constant dense<0.000000e+00> : vector<2x16xf32>
      %366 = vector.multi_reduction <add>, %363, %cst_178 [2] : vector<2x16x32xf32> to vector<2x16xf32>
      %367 = vector.shape_cast %366 : vector<2x16xf32> to vector<2x16x1xf32>
      %cst_179 = arith.constant 3.200000e+01 : f32
      %368 = vector.broadcast %cst_179 : f32 to vector<2x16x1xf32>
      %369 = arith.divf %367, %368 : vector<2x16x1xf32>
      %370 = vector.broadcast %369 : vector<2x16x1xf32> to vector<2x16x32xf32>
      %371 = arith.subf %363, %370 : vector<2x16x32xf32>
      %372 = arith.mulf %371, %371 : vector<2x16x32xf32>
      %cst_180 = arith.constant dense<0.000000e+00> : vector<2x16xf32>
      %373 = vector.multi_reduction <add>, %372, %cst_180 [2] : vector<2x16x32xf32> to vector<2x16xf32>
      %374 = vector.shape_cast %373 : vector<2x16xf32> to vector<2x16x1xf32>
      %cst_181 = arith.constant 3.200000e+01 : f32
      %375 = vector.broadcast %cst_181 : f32 to vector<2x16x1xf32>
      %376 = arith.divf %374, %375 : vector<2x16x1xf32>
      %377 = vector.broadcast %369 : vector<2x16x1xf32> to vector<2x16x32xf32>
      %378 = arith.subf %363, %377 : vector<2x16x32xf32>
      %cst_182 = arith.constant 9.99999997E-7 : f32
      %379 = vector.broadcast %cst_182 : f32 to vector<2x16x1xf32>
      %380 = arith.addf %376, %379 : vector<2x16x1xf32>
      %381 = math.rsqrt %380 : vector<2x16x1xf32>
      %382 = vector.broadcast %381 : vector<2x16x1xf32> to vector<2x16x32xf32>
      %383 = arith.mulf %378, %382 : vector<2x16x32xf32>
      %384 = vector.shape_cast %364 : vector<1x32xf32> to vector<1x1x32xf32>
      %385 = vector.broadcast %384 : vector<1x1x32xf32> to vector<2x16x32xf32>
      %386 = arith.mulf %383, %385 : vector<2x16x32xf32>
      %387 = vector.shape_cast %365 : vector<1x32xf32> to vector<1x1x32xf32>
      %388 = vector.broadcast %387 : vector<1x1x32xf32> to vector<2x16x32xf32>
      %389 = arith.addf %386, %388 : vector<2x16x32xf32>
      %c0_183 = arith.constant 0 : index
      %c0_184 = arith.constant 0 : index
      %c0_185 = arith.constant 0 : index
      %390 = vector.load %arg37[%c0_183, %c0_184, %c0_185] : memref<2x16x32xf32, #tpu.memory_space<vmem>>, vector<2x16x32xf32>
      tpu.vector_store %arg37[%c0_183, %c0_184, %c0_185], %389 {strides = array<i32>} : memref<2x16x32xf32, #tpu.memory_space<vmem>>, vector<2x16x32xf32>,
      %c0_186 = arith.constant 0 : index
      %c0_187 = arith.constant 0 : index
      %c0_188 = arith.constant 0 : index
      %391 = vector.load %arg2[%c0_186, %c0_187, %c0_188] : memref<2x8x32xf32, #tpu.memory_space<vmem>>, vector<2x8x32xf32>
      %c0_189 = arith.constant 0 : index
      %c0_190 = arith.constant 0 : index
      %c0_191 = arith.constant 0 : index
      %392 = vector.load %arg36[%c0_189, %c0_190, %c0_191] : memref<2x8x32xf32, #tpu.memory_space<vmem>>, vector<2x8x32xf32>
      tpu.vector_store %arg36[%c0_189, %c0_190, %c0_191], %391 {strides = array<i32>} : memref<2x8x32xf32, #tpu.memory_space<vmem>>, vector<2x8x32xf32>,
      %393 = tpu.iota {dimensions = array<i32: 0>} : vector<8x8xi32>
      %394 = tpu.iota {dimensions = array<i32: 1>} : vector<8x8xi32>
      %395 = arith.cmpi sgt, %394, %393 : vector<8x8xi32>
      %396 = arith.extui %395 : vector<8x8xi1> to vector<8x8xi32>
      %397 = arith.sitofp %396 : vector<8x8xi32> to vector<8x8xf32>
      %398 = vector.shape_cast %397 : vector<8x8xf32> to vector<1x8x8xf32>
      %c0_192 = arith.constant 0 : index
      %c0_193 = arith.constant 0 : index
      %c0_194 = arith.constant 0 : index
      %399 = vector.load %arg5[%c0_192, %c0_193, %c0_194] : memref<2x1x8xf32, #tpu.memory_space<vmem>>, vector<2x1x8xf32>
      %400 = vector.broadcast %398 : vector<1x8x8xf32> to vector<2x8x8xf32>
      %401 = vector.broadcast %399 : vector<2x1x8xf32> to vector<2x8x8xf32>
      %402 = arith.addf %400, %401 : vector<2x8x8xf32>
      %cst_195 = arith.constant 0.000000e+00 : f32
      %403 = vector.broadcast %cst_195 : f32 to vector<2x8x8xf32>
      %404 = arith.cmpf ogt, %402, %403 : vector<2x8x8xf32>
      %cst_196 = arith.constant -1.000000e+09 : f32
      %cst_197 = arith.constant 0.000000e+00 : f32
      %405 = vector.broadcast %cst_196 : f32 to vector<2x8x8xf32>
      %406 = vector.broadcast %cst_197 : f32 to vector<2x8x8xf32>
      %407 = arith.select %404, %405, %406 : vector<2x8x8xi1>, vector<2x8x8xf32>
      %c0_198 = arith.constant 0 : index
      %c0_199 = arith.constant 0 : index
      %c0_200 = arith.constant 0 : index
      %408 = vector.load %arg38[%c0_198, %c0_199, %c0_200] : memref<2x8x8xf32, #tpu.memory_space<vmem>>, vector<2x8x8xf32>
      tpu.vector_store %arg38[%c0_198, %c0_199, %c0_200], %407 {strides = array<i32>} : memref<2x8x8xf32, #tpu.memory_space<vmem>>, vector<2x8x8xf32>,
      %c0_201 = arith.constant 0 : index
      %c0_202 = arith.constant 0 : index
      %c0_203 = arith.constant 0 : index
      %409 = vector.load %arg6[%c0_201, %c0_202, %c0_203] : memref<2x1x16xf32, #tpu.memory_space<vmem>>, vector<2x1x16xf32>
      %cst_204 = arith.constant 0.000000e+00 : f32
      %410 = vector.broadcast %cst_204 : f32 to vector<2x1x16xf32>
      %411 = arith.cmpf ogt, %409, %410 : vector<2x1x16xf32>
      %cst_205 = arith.constant -1.000000e+09 : f32
      %cst_206 = arith.constant 0.000000e+00 : f32
      %412 = vector.broadcast %cst_205 : f32 to vector<2x1x16xf32>
      %413 = vector.broadcast %cst_206 : f32 to vector<2x1x16xf32>
      %414 = arith.select %411, %412, %413 : vector<2x1x16xi1>, vector<2x1x16xf32>
      %c0_207 = arith.constant 0 : index
      %c0_208 = arith.constant 0 : index
      %c0_209 = arith.constant 0 : index
      %415 = vector.load %arg39[%c0_207, %c0_208, %c0_209] : memref<2x1x16xf32, #tpu.memory_space<vmem>>, vector<2x1x16xf32>
      tpu.vector_store %arg39[%c0_207, %c0_208, %c0_209], %414 {strides = array<i32>} : memref<2x1x16xf32, #tpu.memory_space<vmem>>, vector<2x1x16xf32>,
    } else {
    }
    %c0 = arith.constant 0 : index
    %c0_1 = arith.constant 0 : index
    %c0_2 = arith.constant 0 : index
    %3 = vector.load %arg36[%c0, %c0_1, %c0_2] : memref<2x8x32xf32, #tpu.memory_space<vmem>>, vector<2x8x32xf32>
    %c0_3 = arith.constant 0 : index
    %c0_4 = arith.constant 0 : index
    %c0_5 = arith.constant 0 : index
    %4 = vector.load %arg37[%c0_3, %c0_4, %c0_5] : memref<2x16x32xf32, #tpu.memory_space<vmem>>, vector<2x16x32xf32>
    %c0_6 = arith.constant 0 : index
    %c0_7 = arith.constant 0 : index
    %c0_8 = arith.constant 0 : index
    %5 = vector.load %arg4[%c0_6, %c0_7, %c0_8] : memref<2x8x1xf32, #tpu.memory_space<vmem>>, vector<2x8x1xf32>
    %c0_9 = arith.constant 0 : index
    %c0_10 = arith.constant 0 : index
    %c0_11 = arith.constant 0 : index
    %6 = vector.load %arg38[%c0_9, %c0_10, %c0_11] : memref<2x8x8xf32, #tpu.memory_space<vmem>>, vector<2x8x8xf32>
    %c0_12 = arith.constant 0 : index
    %c0_13 = arith.constant 0 : index
    %c0_14 = arith.constant 0 : index
    %7 = vector.load %arg39[%c0_12, %c0_13, %c0_14] : memref<2x1x16xf32, #tpu.memory_space<vmem>>, vector<2x1x16xf32>
    %c0_15 = arith.constant 0 : index
    %c0_16 = arith.constant 0 : index
    %c0_17 = arith.constant 0 : index
    %8 = vector.load %arg9[%c0_15, %c0_16, %c0_17] : memref<1x32x32xbf16, #tpu.memory_space<vmem>>, vector<1x32x32xbf16>
    %9 = vector.shape_cast %8 : vector<1x32x32xbf16> to vector<32x32xbf16>
    %c0_18 = arith.constant 0 : index
    %c0_19 = arith.constant 0 : index
    %c0_20 = arith.constant 0 : index
    %10 = vector.load %arg10[%c0_18, %c0_19, %c0_20] : memref<1x32x32xbf16, #tpu.memory_space<vmem>>, vector<1x32x32xbf16>
    %11 = vector.shape_cast %10 : vector<1x32x32xbf16> to vector<32x32xbf16>
    %c0_21 = arith.constant 0 : index
    %c0_22 = arith.constant 0 : index
    %c0_23 = arith.constant 0 : index
    %12 = vector.load %arg11[%c0_21, %c0_22, %c0_23] : memref<1x32x32xbf16, #tpu.memory_space<vmem>>, vector<1x32x32xbf16>
    %13 = vector.shape_cast %12 : vector<1x32x32xbf16> to vector<32x32xbf16>
    %c0_24 = arith.constant 0 : index
    %c0_25 = arith.constant 0 : index
    %c0_26 = arith.constant 0 : index
    %14 = vector.load %arg12[%c0_24, %c0_25, %c0_26] : memref<1x1x32xf32, #tpu.memory_space<vmem>>, vector<1x1x32xf32>
    %15 = vector.shape_cast %14 : vector<1x1x32xf32> to vector<1x32xf32>
    %c0_27 = arith.constant 0 : index
    %c0_28 = arith.constant 0 : index
    %c0_29 = arith.constant 0 : index
    %16 = vector.load %arg13[%c0_27, %c0_28, %c0_29] : memref<1x1x32xf32, #tpu.memory_space<vmem>>, vector<1x1x32xf32>
    %17 = vector.shape_cast %16 : vector<1x1x32xf32> to vector<1x32xf32>
    %c0_30 = arith.constant 0 : index
    %c0_31 = arith.constant 0 : index
    %c0_32 = arith.constant 0 : index
    %18 = vector.load %arg14[%c0_30, %c0_31, %c0_32] : memref<1x1x32xf32, #tpu.memory_space<vmem>>, vector<1x1x32xf32>
    %19 = vector.shape_cast %18 : vector<1x1x32xf32> to vector<1x32xf32>
    %c0_33 = arith.constant 0 : index
    %c0_34 = arith.constant 0 : index
    %c0_35 = arith.constant 0 : index
    %20 = vector.load %arg15[%c0_33, %c0_34, %c0_35] : memref<1x32x32xbf16, #tpu.memory_space<vmem>>, vector<1x32x32xbf16>
    %21 = vector.shape_cast %20 : vector<1x32x32xbf16> to vector<32x32xbf16>
    %c0_36 = arith.constant 0 : index
    %c0_37 = arith.constant 0 : index
    %c0_38 = arith.constant 0 : index
    %22 = vector.load %arg16[%c0_36, %c0_37, %c0_38] : memref<1x1x32xf32, #tpu.memory_space<vmem>>, vector<1x1x32xf32>
    %23 = vector.shape_cast %22 : vector<1x1x32xf32> to vector<1x32xf32>
    %c0_39 = arith.constant 0 : index
    %c0_40 = arith.constant 0 : index
    %c0_41 = arith.constant 0 : index
    %24 = vector.load %arg17[%c0_39, %c0_40, %c0_41] : memref<1x1x32xf32, #tpu.memory_space<vmem>>, vector<1x1x32xf32>
    %25 = vector.shape_cast %24 : vector<1x1x32xf32> to vector<1x32xf32>
    %c0_42 = arith.constant 0 : index
    %c0_43 = arith.constant 0 : index
    %c0_44 = arith.constant 0 : index
    %26 = vector.load %arg18[%c0_42, %c0_43, %c0_44] : memref<1x1x32xf32, #tpu.memory_space<vmem>>, vector<1x1x32xf32>
    %27 = vector.shape_cast %26 : vector<1x1x32xf32> to vector<1x32xf32>
    %28 = vector.shape_cast %3 : vector<2x8x32xf32> to vector<16x32xf32>
    %29 = arith.truncf %28 : vector<16x32xf32> to vector<16x32xbf16>
    %30 = vector.shape_cast %3 : vector<2x8x32xf32> to vector<16x32xf32>
    %31 = arith.truncf %30 : vector<16x32xf32> to vector<16x32xbf16>
    %cst = arith.constant dense<0.000000e+00> : vector<16x32xf32>
    %32 = tpu.matmul %29, %9, %cst {dimension_numbers = #tpu.dot_dimension_numbers<[1], [0], [0], [1], [0, 0, 1, 1], [], []>} : vector<16x32xbf16>, vector<32x32xbf16>, vector<16x32xf32> -> vector<16x32xf32>
    %33 = vector.broadcast %15 : vector<1x32xf32> to vector<16x32xf32>
    %34 = arith.addf %32, %33 : vector<16x32xf32>
    %cst_45 = arith.constant dense<0.000000e+00> : vector<16x32xf32>
    %35 = tpu.matmul %31, %11, %cst_45 {dimension_numbers = #tpu.dot_dimension_numbers<[1], [0], [0], [1], [0, 0, 1, 1], [], []>} : vector<16x32xbf16>, vector<32x32xbf16>, vector<16x32xf32> -> vector<16x32xf32>
    %36 = vector.broadcast %17 : vector<1x32xf32> to vector<16x32xf32>
    %37 = arith.addf %35, %36 : vector<16x32xf32>
    %cst_46 = arith.constant dense<0.000000e+00> : vector<16x32xf32>
    %38 = tpu.matmul %31, %13, %cst_46 {dimension_numbers = #tpu.dot_dimension_numbers<[1], [0], [0], [1], [0, 0, 1, 1], [], []>} : vector<16x32xbf16>, vector<32x32xbf16>, vector<16x32xf32> -> vector<16x32xf32>
    %39 = vector.broadcast %19 : vector<1x32xf32> to vector<16x32xf32>
    %40 = arith.addf %38, %39 : vector<16x32xf32>
    %41 = vector.shape_cast %34 : vector<16x32xf32> to vector<2x8x32xf32>
    %42 = arith.truncf %41 : vector<2x8x32xf32> to vector<2x8x32xbf16>
    %43 = vector.shape_cast %37 : vector<16x32xf32> to vector<2x8x32xf32>
    %44 = arith.truncf %43 : vector<2x8x32xf32> to vector<2x8x32xbf16>
    %45 = vector.shape_cast %40 : vector<16x32xf32> to vector<2x8x32xf32>
    %46 = arith.truncf %45 : vector<2x8x32xf32> to vector<2x8x32xbf16>
    %47 = vector.extract_strided_slice %42 {offsets = [0, 0, 0], sizes = [2, 8, 8], strides = [1, 1, 1]} : vector<2x8x32xbf16> to vector<2x8x8xbf16>
    %48 = vector.extract_strided_slice %44 {offsets = [0, 0, 0], sizes = [2, 8, 8], strides = [1, 1, 1]} : vector<2x8x32xbf16> to vector<2x8x8xbf16>
    %49 = vector.extract_strided_slice %46 {offsets = [0, 0, 0], sizes = [2, 8, 8], strides = [1, 1, 1]} : vector<2x8x32xbf16> to vector<2x8x8xbf16>
    "tpu.trace_start"() <{level = 10 : i32, message = "bqd,bkd->bqk"}> : () -> ()
    %cst_47 = arith.constant dense<0.000000e+00> : vector<2x8x8xf32>
    %50 = tpu.matmul %47, %48, %cst_47 {dimension_numbers = #tpu.dot_dimension_numbers<[2], [2], [1], [1], [0, 0, 0, 1, 1, 1], [0], [0]>} : vector<2x8x8xbf16>, vector<2x8x8xbf16>, vector<2x8x8xf32> -> vector<2x8x8xf32>
    "tpu.trace_stop"() : () -> ()
    %51 = arith.addf %50, %6 : vector<2x8x8xf32>
    %cst_48 = arith.constant dense<0xFF800000> : vector<2x8xf32>
    %52 = vector.multi_reduction <maximumf>, %51, %cst_48 [2] : vector<2x8x8xf32> to vector<2x8xf32>
    %53 = vector.shape_cast %52 : vector<2x8xf32> to vector<2x8x1xf32>
    %54 = vector.broadcast %53 : vector<2x8x1xf32> to vector<2x8x8xf32>
    %55 = arith.subf %51, %54 : vector<2x8x8xf32>
    %56 = math.exp %55 : vector<2x8x8xf32>
    %cst_49 = arith.constant dense<0.000000e+00> : vector<2x8xf32>
    %57 = vector.multi_reduction <add>, %56, %cst_49 [2] : vector<2x8x8xf32> to vector<2x8xf32>
    %58 = vector.shape_cast %57 : vector<2x8xf32> to vector<2x8x1xf32>
    %59 = tpu.reciprocal %58 {approx = true} : vector<2x8x1xf32> -> vector<2x8x1xf32>
    %60 = vector.broadcast %59 : vector<2x8x1xf32> to vector<2x8x8xf32>
    %61 = arith.mulf %56, %60 : vector<2x8x8xf32>
    %62 = arith.truncf %61 : vector<2x8x8xf32> to vector<2x8x8xbf16>
    "tpu.trace_start"() <{level = 10 : i32, message = "bqk,bkv->bqv"}> : () -> ()
    %cst_50 = arith.constant dense<0.000000e+00> : vector<2x8x8xf32>
    %63 = tpu.matmul %62, %49, %cst_50 {dimension_numbers = #tpu.dot_dimension_numbers<[2], [1], [1], [2], [0, 0, 0, 1, 1, 2], [0], [0]>} : vector<2x8x8xbf16>, vector<2x8x8xbf16>, vector<2x8x8xf32> -> vector<2x8x8xf32>
    "tpu.trace_stop"() : () -> ()
    %64 = vector.shape_cast %63 : vector<2x8x8xf32> to vector<16x8xf32>
    %c0_51 = arith.constant 0 : index
    %c0_52 = arith.constant 0 : index
    %65 = vector.load %arg40[%c0_51, %c0_52] : memref<16x32xf32, #tpu.memory_space<vmem>>, vector<16x8xf32>
    tpu.vector_store %arg40[%c0_51, %c0_52], %64 {strides = array<i32>} : memref<16x32xf32, #tpu.memory_space<vmem>>, vector<16x8xf32>,
    %66 = vector.extract_strided_slice %42 {offsets = [0, 0, 8], sizes = [2, 8, 8], strides = [1, 1, 1]} : vector<2x8x32xbf16> to vector<2x8x8xbf16>
    %67 = vector.extract_strided_slice %44 {offsets = [0, 0, 8], sizes = [2, 8, 8], strides = [1, 1, 1]} : vector<2x8x32xbf16> to vector<2x8x8xbf16>
    %68 = vector.extract_strided_slice %46 {offsets = [0, 0, 8], sizes = [2, 8, 8], strides = [1, 1, 1]} : vector<2x8x32xbf16> to vector<2x8x8xbf16>
    "tpu.trace_start"() <{level = 10 : i32, message = "bqd,bkd->bqk"}> : () -> ()
    %cst_53 = arith.constant dense<0.000000e+00> : vector<2x8x8xf32>
    %69 = tpu.matmul %66, %67, %cst_53 {dimension_numbers = #tpu.dot_dimension_numbers<[2], [2], [1], [1], [0, 0, 0, 1, 1, 1], [0], [0]>} : vector<2x8x8xbf16>, vector<2x8x8xbf16>, vector<2x8x8xf32> -> vector<2x8x8xf32>
    "tpu.trace_stop"() : () -> ()
    %70 = arith.addf %69, %6 : vector<2x8x8xf32>
    %cst_54 = arith.constant dense<0xFF800000> : vector<2x8xf32>
    %71 = vector.multi_reduction <maximumf>, %70, %cst_54 [2] : vector<2x8x8xf32> to vector<2x8xf32>
    %72 = vector.shape_cast %71 : vector<2x8xf32> to vector<2x8x1xf32>
    %73 = vector.broadcast %72 : vector<2x8x1xf32> to vector<2x8x8xf32>
    %74 = arith.subf %70, %73 : vector<2x8x8xf32>
    %75 = math.exp %74 : vector<2x8x8xf32>
    %cst_55 = arith.constant dense<0.000000e+00> : vector<2x8xf32>
    %76 = vector.multi_reduction <add>, %75, %cst_55 [2] : vector<2x8x8xf32> to vector<2x8xf32>
    %77 = vector.shape_cast %76 : vector<2x8xf32> to vector<2x8x1xf32>
    %78 = tpu.reciprocal %77 {approx = true} : vector<2x8x1xf32> -> vector<2x8x1xf32>
    %79 = vector.broadcast %78 : vector<2x8x1xf32> to vector<2x8x8xf32>
    %80 = arith.mulf %75, %79 : vector<2x8x8xf32>
    %81 = arith.truncf %80 : vector<2x8x8xf32> to vector<2x8x8xbf16>
    "tpu.trace_start"() <{level = 10 : i32, message = "bqk,bkv->bqv"}> : () -> ()
    %cst_56 = arith.constant dense<0.000000e+00> : vector<2x8x8xf32>
    %82 = tpu.matmul %81, %68, %cst_56 {dimension_numbers = #tpu.dot_dimension_numbers<[2], [1], [1], [2], [0, 0, 0, 1, 1, 2], [0], [0]>} : vector<2x8x8xbf16>, vector<2x8x8xbf16>, vector<2x8x8xf32> -> vector<2x8x8xf32>
    "tpu.trace_stop"() : () -> ()
    %83 = vector.shape_cast %82 : vector<2x8x8xf32> to vector<16x8xf32>
    %c0_57 = arith.constant 0 : index
    %c8 = arith.constant 8 : index
    %84 = vector.load %arg40[%c0_57, %c8] : memref<16x32xf32, #tpu.memory_space<vmem>>, vector<16x8xf32>
    tpu.vector_store %arg40[%c0_57, %c8], %83 {strides = array<i32>} : memref<16x32xf32, #tpu.memory_space<vmem>>, vector<16x8xf32>,
    %85 = vector.extract_strided_slice %42 {offsets = [0, 0, 16], sizes = [2, 8, 8], strides = [1, 1, 1]} : vector<2x8x32xbf16> to vector<2x8x8xbf16>
    %86 = vector.extract_strided_slice %44 {offsets = [0, 0, 16], sizes = [2, 8, 8], strides = [1, 1, 1]} : vector<2x8x32xbf16> to vector<2x8x8xbf16>
    %87 = vector.extract_strided_slice %46 {offsets = [0, 0, 16], sizes = [2, 8, 8], strides = [1, 1, 1]} : vector<2x8x32xbf16> to vector<2x8x8xbf16>
    "tpu.trace_start"() <{level = 10 : i32, message = "bqd,bkd->bqk"}> : () -> ()
    %cst_58 = arith.constant dense<0.000000e+00> : vector<2x8x8xf32>
    %88 = tpu.matmul %85, %86, %cst_58 {dimension_numbers = #tpu.dot_dimension_numbers<[2], [2], [1], [1], [0, 0, 0, 1, 1, 1], [0], [0]>} : vector<2x8x8xbf16>, vector<2x8x8xbf16>, vector<2x8x8xf32> -> vector<2x8x8xf32>
    "tpu.trace_stop"() : () -> ()
    %89 = arith.addf %88, %6 : vector<2x8x8xf32>
    %cst_59 = arith.constant dense<0xFF800000> : vector<2x8xf32>
    %90 = vector.multi_reduction <maximumf>, %89, %cst_59 [2] : vector<2x8x8xf32> to vector<2x8xf32>
    %91 = vector.shape_cast %90 : vector<2x8xf32> to vector<2x8x1xf32>
    %92 = vector.broadcast %91 : vector<2x8x1xf32> to vector<2x8x8xf32>
    %93 = arith.subf %89, %92 : vector<2x8x8xf32>
    %94 = math.exp %93 : vector<2x8x8xf32>
    %cst_60 = arith.constant dense<0.000000e+00> : vector<2x8xf32>
    %95 = vector.multi_reduction <add>, %94, %cst_60 [2] : vector<2x8x8xf32> to vector<2x8xf32>
    %96 = vector.shape_cast %95 : vector<2x8xf32> to vector<2x8x1xf32>
    %97 = tpu.reciprocal %96 {approx = true} : vector<2x8x1xf32> -> vector<2x8x1xf32>
    %98 = vector.broadcast %97 : vector<2x8x1xf32> to vector<2x8x8xf32>
    %99 = arith.mulf %94, %98 : vector<2x8x8xf32>
    %100 = arith.truncf %99 : vector<2x8x8xf32> to vector<2x8x8xbf16>
    "tpu.trace_start"() <{level = 10 : i32, message = "bqk,bkv->bqv"}> : () -> ()
    %cst_61 = arith.constant dense<0.000000e+00> : vector<2x8x8xf32>
    %101 = tpu.matmul %100, %87, %cst_61 {dimension_numbers = #tpu.dot_dimension_numbers<[2], [1], [1], [2], [0, 0, 0, 1, 1, 2], [0], [0]>} : vector<2x8x8xbf16>, vector<2x8x8xbf16>, vector<2x8x8xf32> -> vector<2x8x8xf32>
    "tpu.trace_stop"() : () -> ()
    %102 = vector.shape_cast %101 : vector<2x8x8xf32> to vector<16x8xf32>
    %c0_62 = arith.constant 0 : index
    %c16 = arith.constant 16 : index
    %103 = vector.load %arg40[%c0_62, %c16] : memref<16x32xf32, #tpu.memory_space<vmem>>, vector<16x8xf32>
    tpu.vector_store %arg40[%c0_62, %c16], %102 {strides = array<i32>} : memref<16x32xf32, #tpu.memory_space<vmem>>, vector<16x8xf32>,
    %104 = vector.extract_strided_slice %42 {offsets = [0, 0, 24], sizes = [2, 8, 8], strides = [1, 1, 1]} : vector<2x8x32xbf16> to vector<2x8x8xbf16>
    %105 = vector.extract_strided_slice %44 {offsets = [0, 0, 24], sizes = [2, 8, 8], strides = [1, 1, 1]} : vector<2x8x32xbf16> to vector<2x8x8xbf16>
    %106 = vector.extract_strided_slice %46 {offsets = [0, 0, 24], sizes = [2, 8, 8], strides = [1, 1, 1]} : vector<2x8x32xbf16> to vector<2x8x8xbf16>
    "tpu.trace_start"() <{level = 10 : i32, message = "bqd,bkd->bqk"}> : () -> ()
    %cst_63 = arith.constant dense<0.000000e+00> : vector<2x8x8xf32>
    %107 = tpu.matmul %104, %105, %cst_63 {dimension_numbers = #tpu.dot_dimension_numbers<[2], [2], [1], [1], [0, 0, 0, 1, 1, 1], [0], [0]>} : vector<2x8x8xbf16>, vector<2x8x8xbf16>, vector<2x8x8xf32> -> vector<2x8x8xf32>
    "tpu.trace_stop"() : () -> ()
    %108 = arith.addf %107, %6 : vector<2x8x8xf32>
    %cst_64 = arith.constant dense<0xFF800000> : vector<2x8xf32>
    %109 = vector.multi_reduction <maximumf>, %108, %cst_64 [2] : vector<2x8x8xf32> to vector<2x8xf32>
    %110 = vector.shape_cast %109 : vector<2x8xf32> to vector<2x8x1xf32>
    %111 = vector.broadcast %110 : vector<2x8x1xf32> to vector<2x8x8xf32>
    %112 = arith.subf %108, %111 : vector<2x8x8xf32>
    %113 = math.exp %112 : vector<2x8x8xf32>
    %cst_65 = arith.constant dense<0.000000e+00> : vector<2x8xf32>
    %114 = vector.multi_reduction <add>, %113, %cst_65 [2] : vector<2x8x8xf32> to vector<2x8xf32>
    %115 = vector.shape_cast %114 : vector<2x8xf32> to vector<2x8x1xf32>
    %116 = tpu.reciprocal %115 {approx = true} : vector<2x8x1xf32> -> vector<2x8x1xf32>
    %117 = vector.broadcast %116 : vector<2x8x1xf32> to vector<2x8x8xf32>
    %118 = arith.mulf %113, %117 : vector<2x8x8xf32>
    %119 = arith.truncf %118 : vector<2x8x8xf32> to vector<2x8x8xbf16>
    "tpu.trace_start"() <{level = 10 : i32, message = "bqk,bkv->bqv"}> : () -> ()
    %cst_66 = arith.constant dense<0.000000e+00> : vector<2x8x8xf32>
    %120 = tpu.matmul %119, %106, %cst_66 {dimension_numbers = #tpu.dot_dimension_numbers<[2], [1], [1], [2], [0, 0, 0, 1, 1, 2], [0], [0]>} : vector<2x8x8xbf16>, vector<2x8x8xbf16>, vector<2x8x8xf32> -> vector<2x8x8xf32>
    "tpu.trace_stop"() : () -> ()
    %121 = vector.shape_cast %120 : vector<2x8x8xf32> to vector<16x8xf32>
    %c0_67 = arith.constant 0 : index
    %c24 = arith.constant 24 : index
    %122 = vector.load %arg40[%c0_67, %c24] : memref<16x32xf32, #tpu.memory_space<vmem>>, vector<16x8xf32>
    tpu.vector_store %arg40[%c0_67, %c24], %121 {strides = array<i32>} : memref<16x32xf32, #tpu.memory_space<vmem>>, vector<16x8xf32>,
    %c0_68 = arith.constant 0 : index
    %c0_69 = arith.constant 0 : index
    %123 = vector.load %arg40[%c0_68, %c0_69] : memref<16x32xf32, #tpu.memory_space<vmem>>, vector<16x32xf32>
    %124 = arith.truncf %123 : vector<16x32xf32> to vector<16x32xbf16>
    %cst_70 = arith.constant dense<0.000000e+00> : vector<16x32xf32>
    %125 = tpu.matmul %124, %21, %cst_70 {dimension_numbers = #tpu.dot_dimension_numbers<[1], [0], [0], [1], [0, 0, 1, 1], [], []>} : vector<16x32xbf16>, vector<32x32xbf16>, vector<16x32xf32> -> vector<16x32xf32>
    %126 = vector.broadcast %23 : vector<1x32xf32> to vector<16x32xf32>
    %127 = arith.addf %125, %126 : vector<16x32xf32>
    %128 = vector.shape_cast %127 : vector<16x32xf32> to vector<2x8x32xf32>
    %129 = arith.addf %128, %3 : vector<2x8x32xf32>
    %cst_71 = arith.constant dense<0.000000e+00> : vector<2x8xf32>
    %130 = vector.multi_reduction <add>, %129, %cst_71 [2] : vector<2x8x32xf32> to vector<2x8xf32>
    %131 = vector.shape_cast %130 : vector<2x8xf32> to vector<2x8x1xf32>
    %cst_72 = arith.constant 3.200000e+01 : f32
    %132 = vector.broadcast %cst_72 : f32 to vector<2x8x1xf32>
    %133 = arith.divf %131, %132 : vector<2x8x1xf32>
    %134 = vector.broadcast %133 : vector<2x8x1xf32> to vector<2x8x32xf32>
    %135 = arith.subf %129, %134 : vector<2x8x32xf32>
    %136 = arith.mulf %135, %135 : vector<2x8x32xf32>
    %cst_73 = arith.constant dense<0.000000e+00> : vector<2x8xf32>
    %137 = vector.multi_reduction <add>, %136, %cst_73 [2] : vector<2x8x32xf32> to vector<2x8xf32>
    %138 = vector.shape_cast %137 : vector<2x8xf32> to vector<2x8x1xf32>
    %cst_74 = arith.constant 3.200000e+01 : f32
    %139 = vector.broadcast %cst_74 : f32 to vector<2x8x1xf32>
    %140 = arith.divf %138, %139 : vector<2x8x1xf32>
    %141 = vector.broadcast %133 : vector<2x8x1xf32> to vector<2x8x32xf32>
    %142 = arith.subf %129, %141 : vector<2x8x32xf32>
    %cst_75 = arith.constant 9.99999997E-7 : f32
    %143 = vector.broadcast %cst_75 : f32 to vector<2x8x1xf32>
    %144 = arith.addf %140, %143 : vector<2x8x1xf32>
    %145 = math.rsqrt %144 : vector<2x8x1xf32>
    %146 = vector.broadcast %145 : vector<2x8x1xf32> to vector<2x8x32xf32>
    %147 = arith.mulf %142, %146 : vector<2x8x32xf32>
    %148 = vector.shape_cast %25 : vector<1x32xf32> to vector<1x1x32xf32>
    %149 = vector.broadcast %148 : vector<1x1x32xf32> to vector<2x8x32xf32>
    %150 = arith.mulf %147, %149 : vector<2x8x32xf32>
    %151 = vector.shape_cast %27 : vector<1x32xf32> to vector<1x1x32xf32>
    %152 = vector.broadcast %151 : vector<1x1x32xf32> to vector<2x8x32xf32>
    %153 = arith.addf %150, %152 : vector<2x8x32xf32>
    %154 = vector.broadcast %5 : vector<2x8x1xf32> to vector<2x8x32xf32>
    %155 = arith.mulf %153, %154 : vector<2x8x32xf32>
    %c0_76 = arith.constant 0 : index
    %c0_77 = arith.constant 0 : index
    %c0_78 = arith.constant 0 : index
    %156 = vector.load %arg19[%c0_76, %c0_77, %c0_78] : memref<1x32x32xbf16, #tpu.memory_space<vmem>>, vector<1x32x32xbf16>
    %157 = vector.shape_cast %156 : vector<1x32x32xbf16> to vector<32x32xbf16>
    %c0_79 = arith.constant 0 : index
    %c0_80 = arith.constant 0 : index
    %c0_81 = arith.constant 0 : index
    %158 = vector.load %arg20[%c0_79, %c0_80, %c0_81] : memref<1x32x32xbf16, #tpu.memory_space<vmem>>, vector<1x32x32xbf16>
    %159 = vector.shape_cast %158 : vector<1x32x32xbf16> to vector<32x32xbf16>
    %c0_82 = arith.constant 0 : index
    %c0_83 = arith.constant 0 : index
    %c0_84 = arith.constant 0 : index
    %160 = vector.load %arg21[%c0_82, %c0_83, %c0_84] : memref<1x32x32xbf16, #tpu.memory_space<vmem>>, vector<1x32x32xbf16>
    %161 = vector.shape_cast %160 : vector<1x32x32xbf16> to vector<32x32xbf16>
    %c0_85 = arith.constant 0 : index
    %c0_86 = arith.constant 0 : index
    %c0_87 = arith.constant 0 : index
    %162 = vector.load %arg22[%c0_85, %c0_86, %c0_87] : memref<1x1x32xf32, #tpu.memory_space<vmem>>, vector<1x1x32xf32>
    %163 = vector.shape_cast %162 : vector<1x1x32xf32> to vector<1x32xf32>
    %c0_88 = arith.constant 0 : index
    %c0_89 = arith.constant 0 : index
    %c0_90 = arith.constant 0 : index
    %164 = vector.load %arg23[%c0_88, %c0_89, %c0_90] : memref<1x1x32xf32, #tpu.memory_space<vmem>>, vector<1x1x32xf32>
    %165 = vector.shape_cast %164 : vector<1x1x32xf32> to vector<1x32xf32>
    %c0_91 = arith.constant 0 : index
    %c0_92 = arith.constant 0 : index
    %c0_93 = arith.constant 0 : index
    %166 = vector.load %arg24[%c0_91, %c0_92, %c0_93] : memref<1x1x32xf32, #tpu.memory_space<vmem>>, vector<1x1x32xf32>
    %167 = vector.shape_cast %166 : vector<1x1x32xf32> to vector<1x32xf32>
    %c0_94 = arith.constant 0 : index
    %c0_95 = arith.constant 0 : index
    %c0_96 = arith.constant 0 : index
    %168 = vector.load %arg25[%c0_94, %c0_95, %c0_96] : memref<1x32x32xbf16, #tpu.memory_space<vmem>>, vector<1x32x32xbf16>
    %169 = vector.shape_cast %168 : vector<1x32x32xbf16> to vector<32x32xbf16>
    %c0_97 = arith.constant 0 : index
    %c0_98 = arith.constant 0 : index
    %c0_99 = arith.constant 0 : index
    %170 = vector.load %arg26[%c0_97, %c0_98, %c0_99] : memref<1x1x32xf32, #tpu.memory_space<vmem>>, vector<1x1x32xf32>
    %171 = vector.shape_cast %170 : vector<1x1x32xf32> to vector<1x32xf32>
    %c0_100 = arith.constant 0 : index
    %c0_101 = arith.constant 0 : index
    %c0_102 = arith.constant 0 : index
    %172 = vector.load %arg27[%c0_100, %c0_101, %c0_102] : memref<1x1x32xf32, #tpu.memory_space<vmem>>, vector<1x1x32xf32>
    %173 = vector.shape_cast %172 : vector<1x1x32xf32> to vector<1x32xf32>
    %c0_103 = arith.constant 0 : index
    %c0_104 = arith.constant 0 : index
    %c0_105 = arith.constant 0 : index
    %174 = vector.load %arg28[%c0_103, %c0_104, %c0_105] : memref<1x1x32xf32, #tpu.memory_space<vmem>>, vector<1x1x32xf32>
    %175 = vector.shape_cast %174 : vector<1x1x32xf32> to vector<1x32xf32>
    %176 = vector.shape_cast %155 : vector<2x8x32xf32> to vector<16x32xf32>
    %177 = arith.truncf %176 : vector<16x32xf32> to vector<16x32xbf16>
    %178 = vector.shape_cast %4 : vector<2x16x32xf32> to vector<32x32xf32>
    %179 = arith.truncf %178 : vector<32x32xf32> to vector<32x32xbf16>
    %cst_106 = arith.constant dense<0.000000e+00> : vector<16x32xf32>
    %180 = tpu.matmul %177, %157, %cst_106 {dimension_numbers = #tpu.dot_dimension_numbers<[1], [0], [0], [1], [0, 0, 1, 1], [], []>} : vector<16x32xbf16>, vector<32x32xbf16>, vector<16x32xf32> -> vector<16x32xf32>
    %181 = vector.broadcast %163 : vector<1x32xf32> to vector<16x32xf32>
    %182 = arith.addf %180, %181 : vector<16x32xf32>
    %cst_107 = arith.constant dense<0.000000e+00> : vector<32x32xf32>
    %183 = tpu.matmul %179, %159, %cst_107 {dimension_numbers = #tpu.dot_dimension_numbers<[1], [0], [0], [1], [0, 0, 1, 1], [], []>} : vector<32x32xbf16>, vector<32x32xbf16>, vector<32x32xf32> -> vector<32x32xf32>
    %184 = vector.broadcast %165 : vector<1x32xf32> to vector<32x32xf32>
    %185 = arith.addf %183, %184 : vector<32x32xf32>
    %cst_108 = arith.constant dense<0.000000e+00> : vector<32x32xf32>
    %186 = tpu.matmul %179, %161, %cst_108 {dimension_numbers = #tpu.dot_dimension_numbers<[1], [0], [0], [1], [0, 0, 1, 1], [], []>} : vector<32x32xbf16>, vector<32x32xbf16>, vector<32x32xf32> -> vector<32x32xf32>
    %187 = vector.broadcast %167 : vector<1x32xf32> to vector<32x32xf32>
    %188 = arith.addf %186, %187 : vector<32x32xf32>
    %189 = vector.shape_cast %182 : vector<16x32xf32> to vector<2x8x32xf32>
    %190 = arith.truncf %189 : vector<2x8x32xf32> to vector<2x8x32xbf16>
    %191 = vector.shape_cast %185 : vector<32x32xf32> to vector<2x16x32xf32>
    %192 = arith.truncf %191 : vector<2x16x32xf32> to vector<2x16x32xbf16>
    %193 = vector.shape_cast %188 : vector<32x32xf32> to vector<2x16x32xf32>
    %194 = arith.truncf %193 : vector<2x16x32xf32> to vector<2x16x32xbf16>
    %195 = vector.extract_strided_slice %190 {offsets = [0, 0, 0], sizes = [2, 8, 8], strides = [1, 1, 1]} : vector<2x8x32xbf16> to vector<2x8x8xbf16>
    %196 = vector.extract_strided_slice %192 {offsets = [0, 0, 0], sizes = [2, 16, 8], strides = [1, 1, 1]} : vector<2x16x32xbf16> to vector<2x16x8xbf16>
    %197 = vector.extract_strided_slice %194 {offsets = [0, 0, 0], sizes = [2, 16, 8], strides = [1, 1, 1]} : vector<2x16x32xbf16> to vector<2x16x8xbf16>
    "tpu.trace_start"() <{level = 10 : i32, message = "bqd,bkd->bqk"}> : () -> ()
    %cst_109 = arith.constant dense<0.000000e+00> : vector<2x8x16xf32>
    %198 = tpu.matmul %195, %196, %cst_109 {dimension_numbers = #tpu.dot_dimension_numbers<[2], [2], [1], [1], [0, 0, 0, 1, 1, 1], [0], [0]>} : vector<2x8x8xbf16>, vector<2x16x8xbf16>, vector<2x8x16xf32> -> vector<2x8x16xf32>
    "tpu.trace_stop"() : () -> ()
    %199 = vector.broadcast %7 : vector<2x1x16xf32> to vector<2x8x16xf32>
    %200 = arith.addf %198, %199 : vector<2x8x16xf32>
    %cst_110 = arith.constant dense<0xFF800000> : vector<2x8xf32>
    %201 = vector.multi_reduction <maximumf>, %200, %cst_110 [2] : vector<2x8x16xf32> to vector<2x8xf32>
    %202 = vector.shape_cast %201 : vector<2x8xf32> to vector<2x8x1xf32>
    %203 = vector.broadcast %202 : vector<2x8x1xf32> to vector<2x8x16xf32>
    %204 = arith.subf %200, %203 : vector<2x8x16xf32>
    %205 = math.exp %204 : vector<2x8x16xf32>
    %cst_111 = arith.constant dense<0.000000e+00> : vector<2x8xf32>
    %206 = vector.multi_reduction <add>, %205, %cst_111 [2] : vector<2x8x16xf32> to vector<2x8xf32>
    %207 = vector.shape_cast %206 : vector<2x8xf32> to vector<2x8x1xf32>
    %208 = tpu.reciprocal %207 {approx = true} : vector<2x8x1xf32> -> vector<2x8x1xf32>
    %209 = vector.broadcast %208 : vector<2x8x1xf32> to vector<2x8x16xf32>
    %210 = arith.mulf %205, %209 : vector<2x8x16xf32>
    %211 = arith.truncf %210 : vector<2x8x16xf32> to vector<2x8x16xbf16>
    "tpu.trace_start"() <{level = 10 : i32, message = "bqk,bkv->bqv"}> : () -> ()
    %cst_112 = arith.constant dense<0.000000e+00> : vector<2x8x8xf32>
    %212 = tpu.matmul %211, %197, %cst_112 {dimension_numbers = #tpu.dot_dimension_numbers<[2], [1], [1], [2], [0, 0, 0, 1, 1, 2], [0], [0]>} : vector<2x8x16xbf16>, vector<2x16x8xbf16>, vector<2x8x8xf32> -> vector<2x8x8xf32>
    "tpu.trace_stop"() : () -> ()
    %213 = vector.shape_cast %212 : vector<2x8x8xf32> to vector<16x8xf32>
    %c0_113 = arith.constant 0 : index
    %c0_114 = arith.constant 0 : index
    %214 = vector.load %arg40[%c0_113, %c0_114] : memref<16x32xf32, #tpu.memory_space<vmem>>, vector<16x8xf32>
    tpu.vector_store %arg40[%c0_113, %c0_114], %213 {strides = array<i32>} : memref<16x32xf32, #tpu.memory_space<vmem>>, vector<16x8xf32>,
    %215 = vector.extract_strided_slice %190 {offsets = [0, 0, 8], sizes = [2, 8, 8], strides = [1, 1, 1]} : vector<2x8x32xbf16> to vector<2x8x8xbf16>
    %216 = vector.extract_strided_slice %192 {offsets = [0, 0, 8], sizes = [2, 16, 8], strides = [1, 1, 1]} : vector<2x16x32xbf16> to vector<2x16x8xbf16>
    %217 = vector.extract_strided_slice %194 {offsets = [0, 0, 8], sizes = [2, 16, 8], strides = [1, 1, 1]} : vector<2x16x32xbf16> to vector<2x16x8xbf16>
    "tpu.trace_start"() <{level = 10 : i32, message = "bqd,bkd->bqk"}> : () -> ()
    %cst_115 = arith.constant dense<0.000000e+00> : vector<2x8x16xf32>
    %218 = tpu.matmul %215, %216, %cst_115 {dimension_numbers = #tpu.dot_dimension_numbers<[2], [2], [1], [1], [0, 0, 0, 1, 1, 1], [0], [0]>} : vector<2x8x8xbf16>, vector<2x16x8xbf16>, vector<2x8x16xf32> -> vector<2x8x16xf32>
    "tpu.trace_stop"() : () -> ()
    %219 = vector.broadcast %7 : vector<2x1x16xf32> to vector<2x8x16xf32>
    %220 = arith.addf %218, %219 : vector<2x8x16xf32>
    %cst_116 = arith.constant dense<0xFF800000> : vector<2x8xf32>
    %221 = vector.multi_reduction <maximumf>, %220, %cst_116 [2] : vector<2x8x16xf32> to vector<2x8xf32>
    %222 = vector.shape_cast %221 : vector<2x8xf32> to vector<2x8x1xf32>
    %223 = vector.broadcast %222 : vector<2x8x1xf32> to vector<2x8x16xf32>
    %224 = arith.subf %220, %223 : vector<2x8x16xf32>
    %225 = math.exp %224 : vector<2x8x16xf32>
    %cst_117 = arith.constant dense<0.000000e+00> : vector<2x8xf32>
    %226 = vector.multi_reduction <add>, %225, %cst_117 [2] : vector<2x8x16xf32> to vector<2x8xf32>
    %227 = vector.shape_cast %226 : vector<2x8xf32> to vector<2x8x1xf32>
    %228 = tpu.reciprocal %227 {approx = true} : vector<2x8x1xf32> -> vector<2x8x1xf32>
    %229 = vector.broadcast %228 : vector<2x8x1xf32> to vector<2x8x16xf32>
    %230 = arith.mulf %225, %229 : vector<2x8x16xf32>
    %231 = arith.truncf %230 : vector<2x8x16xf32> to vector<2x8x16xbf16>
    "tpu.trace_start"() <{level = 10 : i32, message = "bqk,bkv->bqv"}> : () -> ()
    %cst_118 = arith.constant dense<0.000000e+00> : vector<2x8x8xf32>
    %232 = tpu.matmul %231, %217, %cst_118 {dimension_numbers = #tpu.dot_dimension_numbers<[2], [1], [1], [2], [0, 0, 0, 1, 1, 2], [0], [0]>} : vector<2x8x16xbf16>, vector<2x16x8xbf16>, vector<2x8x8xf32> -> vector<2x8x8xf32>
    "tpu.trace_stop"() : () -> ()
    %233 = vector.shape_cast %232 : vector<2x8x8xf32> to vector<16x8xf32>
    %c0_119 = arith.constant 0 : index
    %c8_120 = arith.constant 8 : index
    %234 = vector.load %arg40[%c0_119, %c8_120] : memref<16x32xf32, #tpu.memory_space<vmem>>, vector<16x8xf32>
    tpu.vector_store %arg40[%c0_119, %c8_120], %233 {strides = array<i32>} : memref<16x32xf32, #tpu.memory_space<vmem>>, vector<16x8xf32>,
    %235 = vector.extract_strided_slice %190 {offsets = [0, 0, 16], sizes = [2, 8, 8], strides = [1, 1, 1]} : vector<2x8x32xbf16> to vector<2x8x8xbf16>
    %236 = vector.extract_strided_slice %192 {offsets = [0, 0, 16], sizes = [2, 16, 8], strides = [1, 1, 1]} : vector<2x16x32xbf16> to vector<2x16x8xbf16>
    %237 = vector.extract_strided_slice %194 {offsets = [0, 0, 16], sizes = [2, 16, 8], strides = [1, 1, 1]} : vector<2x16x32xbf16> to vector<2x16x8xbf16>
    "tpu.trace_start"() <{level = 10 : i32, message = "bqd,bkd->bqk"}> : () -> ()
    %cst_121 = arith.constant dense<0.000000e+00> : vector<2x8x16xf32>
    %238 = tpu.matmul %235, %236, %cst_121 {dimension_numbers = #tpu.dot_dimension_numbers<[2], [2], [1], [1], [0, 0, 0, 1, 1, 1], [0], [0]>} : vector<2x8x8xbf16>, vector<2x16x8xbf16>, vector<2x8x16xf32> -> vector<2x8x16xf32>
    "tpu.trace_stop"() : () -> ()
    %239 = vector.broadcast %7 : vector<2x1x16xf32> to vector<2x8x16xf32>
    %240 = arith.addf %238, %239 : vector<2x8x16xf32>
    %cst_122 = arith.constant dense<0xFF800000> : vector<2x8xf32>
    %241 = vector.multi_reduction <maximumf>, %240, %cst_122 [2] : vector<2x8x16xf32> to vector<2x8xf32>
    %242 = vector.shape_cast %241 : vector<2x8xf32> to vector<2x8x1xf32>
    %243 = vector.broadcast %242 : vector<2x8x1xf32> to vector<2x8x16xf32>
    %244 = arith.subf %240, %243 : vector<2x8x16xf32>
    %245 = math.exp %244 : vector<2x8x16xf32>
    %cst_123 = arith.constant dense<0.000000e+00> : vector<2x8xf32>
    %246 = vector.multi_reduction <add>, %245, %cst_123 [2] : vector<2x8x16xf32> to vector<2x8xf32>
    %247 = vector.shape_cast %246 : vector<2x8xf32> to vector<2x8x1xf32>
    %248 = tpu.reciprocal %247 {approx = true} : vector<2x8x1xf32> -> vector<2x8x1xf32>
    %249 = vector.broadcast %248 : vector<2x8x1xf32> to vector<2x8x16xf32>
    %250 = arith.mulf %245, %249 : vector<2x8x16xf32>
    %251 = arith.truncf %250 : vector<2x8x16xf32> to vector<2x8x16xbf16>
    "tpu.trace_start"() <{level = 10 : i32, message = "bqk,bkv->bqv"}> : () -> ()
    %cst_124 = arith.constant dense<0.000000e+00> : vector<2x8x8xf32>
    %252 = tpu.matmul %251, %237, %cst_124 {dimension_numbers = #tpu.dot_dimension_numbers<[2], [1], [1], [2], [0, 0, 0, 1, 1, 2], [0], [0]>} : vector<2x8x16xbf16>, vector<2x16x8xbf16>, vector<2x8x8xf32> -> vector<2x8x8xf32>
    "tpu.trace_stop"() : () -> ()
    %253 = vector.shape_cast %252 : vector<2x8x8xf32> to vector<16x8xf32>
    %c0_125 = arith.constant 0 : index
    %c16_126 = arith.constant 16 : index
    %254 = vector.load %arg40[%c0_125, %c16_126] : memref<16x32xf32, #tpu.memory_space<vmem>>, vector<16x8xf32>
    tpu.vector_store %arg40[%c0_125, %c16_126], %253 {strides = array<i32>} : memref<16x32xf32, #tpu.memory_space<vmem>>, vector<16x8xf32>,
    %255 = vector.extract_strided_slice %190 {offsets = [0, 0, 24], sizes = [2, 8, 8], strides = [1, 1, 1]} : vector<2x8x32xbf16> to vector<2x8x8xbf16>
    %256 = vector.extract_strided_slice %192 {offsets = [0, 0, 24], sizes = [2, 16, 8], strides = [1, 1, 1]} : vector<2x16x32xbf16> to vector<2x16x8xbf16>
    %257 = vector.extract_strided_slice %194 {offsets = [0, 0, 24], sizes = [2, 16, 8], strides = [1, 1, 1]} : vector<2x16x32xbf16> to vector<2x16x8xbf16>
    "tpu.trace_start"() <{level = 10 : i32, message = "bqd,bkd->bqk"}> : () -> ()
    %cst_127 = arith.constant dense<0.000000e+00> : vector<2x8x16xf32>
    %258 = tpu.matmul %255, %256, %cst_127 {dimension_numbers = #tpu.dot_dimension_numbers<[2], [2], [1], [1], [0, 0, 0, 1, 1, 1], [0], [0]>} : vector<2x8x8xbf16>, vector<2x16x8xbf16>, vector<2x8x16xf32> -> vector<2x8x16xf32>
    "tpu.trace_stop"() : () -> ()
    %259 = vector.broadcast %7 : vector<2x1x16xf32> to vector<2x8x16xf32>
    %260 = arith.addf %258, %259 : vector<2x8x16xf32>
    %cst_128 = arith.constant dense<0xFF800000> : vector<2x8xf32>
    %261 = vector.multi_reduction <maximumf>, %260, %cst_128 [2] : vector<2x8x16xf32> to vector<2x8xf32>
    %262 = vector.shape_cast %261 : vector<2x8xf32> to vector<2x8x1xf32>
    %263 = vector.broadcast %262 : vector<2x8x1xf32> to vector<2x8x16xf32>
    %264 = arith.subf %260, %263 : vector<2x8x16xf32>
    %265 = math.exp %264 : vector<2x8x16xf32>
    %cst_129 = arith.constant dense<0.000000e+00> : vector<2x8xf32>
    %266 = vector.multi_reduction <add>, %265, %cst_129 [2] : vector<2x8x16xf32> to vector<2x8xf32>
    %267 = vector.shape_cast %266 : vector<2x8xf32> to vector<2x8x1xf32>
    %268 = tpu.reciprocal %267 {approx = true} : vector<2x8x1xf32> -> vector<2x8x1xf32>
    %269 = vector.broadcast %268 : vector<2x8x1xf32> to vector<2x8x16xf32>
    %270 = arith.mulf %265, %269 : vector<2x8x16xf32>
    %271 = arith.truncf %270 : vector<2x8x16xf32> to vector<2x8x16xbf16>
    "tpu.trace_start"() <{level = 10 : i32, message = "bqk,bkv->bqv"}> : () -> ()
    %cst_130 = arith.constant dense<0.000000e+00> : vector<2x8x8xf32>
    %272 = tpu.matmul %271, %257, %cst_130 {dimension_numbers = #tpu.dot_dimension_numbers<[2], [1], [1], [2], [0, 0, 0, 1, 1, 2], [0], [0]>} : vector<2x8x16xbf16>, vector<2x16x8xbf16>, vector<2x8x8xf32> -> vector<2x8x8xf32>
    "tpu.trace_stop"() : () -> ()
    %273 = vector.shape_cast %272 : vector<2x8x8xf32> to vector<16x8xf32>
    %c0_131 = arith.constant 0 : index
    %c24_132 = arith.constant 24 : index
    %274 = vector.load %arg40[%c0_131, %c24_132] : memref<16x32xf32, #tpu.memory_space<vmem>>, vector<16x8xf32>
    tpu.vector_store %arg40[%c0_131, %c24_132], %273 {strides = array<i32>} : memref<16x32xf32, #tpu.memory_space<vmem>>, vector<16x8xf32>,
    %c0_133 = arith.constant 0 : index
    %c0_134 = arith.constant 0 : index
    %275 = vector.load %arg40[%c0_133, %c0_134] : memref<16x32xf32, #tpu.memory_space<vmem>>, vector<16x32xf32>
    %276 = arith.truncf %275 : vector<16x32xf32> to vector<16x32xbf16>
    %cst_135 = arith.constant dense<0.000000e+00> : vector<16x32xf32>
    %277 = tpu.matmul %276, %169, %cst_135 {dimension_numbers = #tpu.dot_dimension_numbers<[1], [0], [0], [1], [0, 0, 1, 1], [], []>} : vector<16x32xbf16>, vector<32x32xbf16>, vector<16x32xf32> -> vector<16x32xf32>
    %278 = vector.broadcast %171 : vector<1x32xf32> to vector<16x32xf32>
    %279 = arith.addf %277, %278 : vector<16x32xf32>
    %280 = vector.shape_cast %279 : vector<16x32xf32> to vector<2x8x32xf32>
    %281 = arith.addf %280, %155 : vector<2x8x32xf32>
    %cst_136 = arith.constant dense<0.000000e+00> : vector<2x8xf32>
    %282 = vector.multi_reduction <add>, %281, %cst_136 [2] : vector<2x8x32xf32> to vector<2x8xf32>
    %283 = vector.shape_cast %282 : vector<2x8xf32> to vector<2x8x1xf32>
    %cst_137 = arith.constant 3.200000e+01 : f32
    %284 = vector.broadcast %cst_137 : f32 to vector<2x8x1xf32>
    %285 = arith.divf %283, %284 : vector<2x8x1xf32>
    %286 = vector.broadcast %285 : vector<2x8x1xf32> to vector<2x8x32xf32>
    %287 = arith.subf %281, %286 : vector<2x8x32xf32>
    %288 = arith.mulf %287, %287 : vector<2x8x32xf32>
    %cst_138 = arith.constant dense<0.000000e+00> : vector<2x8xf32>
    %289 = vector.multi_reduction <add>, %288, %cst_138 [2] : vector<2x8x32xf32> to vector<2x8xf32>
    %290 = vector.shape_cast %289 : vector<2x8xf32> to vector<2x8x1xf32>
    %cst_139 = arith.constant 3.200000e+01 : f32
    %291 = vector.broadcast %cst_139 : f32 to vector<2x8x1xf32>
    %292 = arith.divf %290, %291 : vector<2x8x1xf32>
    %293 = vector.broadcast %285 : vector<2x8x1xf32> to vector<2x8x32xf32>
    %294 = arith.subf %281, %293 : vector<2x8x32xf32>
    %cst_140 = arith.constant 9.99999997E-7 : f32
    %295 = vector.broadcast %cst_140 : f32 to vector<2x8x1xf32>
    %296 = arith.addf %292, %295 : vector<2x8x1xf32>
    %297 = math.rsqrt %296 : vector<2x8x1xf32>
    %298 = vector.broadcast %297 : vector<2x8x1xf32> to vector<2x8x32xf32>
    %299 = arith.mulf %294, %298 : vector<2x8x32xf32>
    %300 = vector.shape_cast %173 : vector<1x32xf32> to vector<1x1x32xf32>
    %301 = vector.broadcast %300 : vector<1x1x32xf32> to vector<2x8x32xf32>
    %302 = arith.mulf %299, %301 : vector<2x8x32xf32>
    %303 = vector.shape_cast %175 : vector<1x32xf32> to vector<1x1x32xf32>
    %304 = vector.broadcast %303 : vector<1x1x32xf32> to vector<2x8x32xf32>
    %305 = arith.addf %302, %304 : vector<2x8x32xf32>
    %306 = vector.broadcast %5 : vector<2x8x1xf32> to vector<2x8x32xf32>
    %307 = arith.mulf %305, %306 : vector<2x8x32xf32>
    %308 = vector.shape_cast %307 : vector<2x8x32xf32> to vector<16x32xf32>
    %309 = arith.truncf %308 : vector<16x32xf32> to vector<16x32xbf16>
    %c0_141 = arith.constant 0 : index
    %c0_142 = arith.constant 0 : index
    %c0_143 = arith.constant 0 : index
    %310 = vector.load %arg29[%c0_141, %c0_142, %c0_143] : memref<1x32x64xbf16, #tpu.memory_space<vmem>>, vector<1x32x64xbf16>
    %311 = vector.shape_cast %310 : vector<1x32x64xbf16> to vector<32x64xbf16>
    %cst_144 = arith.constant dense<0.000000e+00> : vector<16x64xf32>
    %312 = tpu.matmul %309, %311, %cst_144 {dimension_numbers = #tpu.dot_dimension_numbers<[1], [0], [0], [1], [0, 0, 1, 1], [], []>} : vector<16x32xbf16>, vector<32x64xbf16>, vector<16x64xf32> -> vector<16x64xf32>
    %c0_145 = arith.constant 0 : index
    %c0_146 = arith.constant 0 : index
    %c0_147 = arith.constant 0 : index
    %313 = vector.load %arg30[%c0_145, %c0_146, %c0_147] : memref<1x1x64xf32, #tpu.memory_space<vmem>>, vector<1x1x64xf32>
    %314 = vector.shape_cast %313 : vector<1x1x64xf32> to vector<1x64xf32>
    %315 = vector.broadcast %314 : vector<1x64xf32> to vector<16x64xf32>
    %316 = arith.addf %312, %315 : vector<16x64xf32>
    %cst_148 = arith.constant 0.000000e+00 : f32
    %317 = vector.broadcast %cst_148 : f32 to vector<16x64xf32>
    %318 = arith.maximumf %316, %317 : vector<16x64xf32>
    %319 = arith.truncf %318 : vector<16x64xf32> to vector<16x64xbf16>
    %c0_149 = arith.constant 0 : index
    %c0_150 = arith.constant 0 : index
    %c0_151 = arith.constant 0 : index
    %320 = vector.load %arg31[%c0_149, %c0_150, %c0_151] : memref<1x64x32xbf16, #tpu.memory_space<vmem>>, vector<1x64x32xbf16>
    %321 = vector.shape_cast %320 : vector<1x64x32xbf16> to vector<64x32xbf16>
    %cst_152 = arith.constant dense<0.000000e+00> : vector<16x32xf32>
    %322 = tpu.matmul %319, %321, %cst_152 {dimension_numbers = #tpu.dot_dimension_numbers<[1], [0], [0], [1], [0, 0, 1, 1], [], []>} : vector<16x64xbf16>, vector<64x32xbf16>, vector<16x32xf32> -> vector<16x32xf32>
    %c0_153 = arith.constant 0 : index
    %c0_154 = arith.constant 0 : index
    %c0_155 = arith.constant 0 : index
    %323 = vector.load %arg32[%c0_153, %c0_154, %c0_155] : memref<1x1x32xf32, #tpu.memory_space<vmem>>, vector<1x1x32xf32>
    %324 = vector.shape_cast %323 : vector<1x1x32xf32> to vector<1x32xf32>
    %325 = vector.broadcast %324 : vector<1x32xf32> to vector<16x32xf32>
    %326 = arith.addf %322, %325 : vector<16x32xf32>
    %327 = vector.shape_cast %326 : vector<16x32xf32> to vector<2x8x32xf32>
    %328 = arith.addf %327, %307 : vector<2x8x32xf32>
    %c0_156 = arith.constant 0 : index
    %c0_157 = arith.constant 0 : index
    %c0_158 = arith.constant 0 : index
    %329 = vector.load %arg33[%c0_156, %c0_157, %c0_158] : memref<1x1x32xf32, #tpu.memory_space<vmem>>, vector<1x1x32xf32>
    %330 = vector.shape_cast %329 : vector<1x1x32xf32> to vector<1x32xf32>
    %c0_159 = arith.constant 0 : index
    %c0_160 = arith.constant 0 : index
    %c0_161 = arith.constant 0 : index
    %331 = vector.load %arg34[%c0_159, %c0_160, %c0_161] : memref<1x1x32xf32, #tpu.memory_space<vmem>>, vector<1x1x32xf32>
    %332 = vector.shape_cast %331 : vector<1x1x32xf32> to vector<1x32xf32>
    %cst_162 = arith.constant dense<0.000000e+00> : vector<2x8xf32>
    %333 = vector.multi_reduction <add>, %328, %cst_162 [2] : vector<2x8x32xf32> to vector<2x8xf32>
    %334 = vector.shape_cast %333 : vector<2x8xf32> to vector<2x8x1xf32>
    %cst_163 = arith.constant 3.200000e+01 : f32
    %335 = vector.broadcast %cst_163 : f32 to vector<2x8x1xf32>
    %336 = arith.divf %334, %335 : vector<2x8x1xf32>
    %337 = vector.broadcast %336 : vector<2x8x1xf32> to vector<2x8x32xf32>
    %338 = arith.subf %328, %337 : vector<2x8x32xf32>
    %339 = arith.mulf %338, %338 : vector<2x8x32xf32>
    %cst_164 = arith.constant dense<0.000000e+00> : vector<2x8xf32>
    %340 = vector.multi_reduction <add>, %339, %cst_164 [2] : vector<2x8x32xf32> to vector<2x8xf32>
    %341 = vector.shape_cast %340 : vector<2x8xf32> to vector<2x8x1xf32>
    %cst_165 = arith.constant 3.200000e+01 : f32
    %342 = vector.broadcast %cst_165 : f32 to vector<2x8x1xf32>
    %343 = arith.divf %341, %342 : vector<2x8x1xf32>
    %344 = vector.broadcast %336 : vector<2x8x1xf32> to vector<2x8x32xf32>
    %345 = arith.subf %328, %344 : vector<2x8x32xf32>
    %cst_166 = arith.constant 9.99999997E-7 : f32
    %346 = vector.broadcast %cst_166 : f32 to vector<2x8x1xf32>
    %347 = arith.addf %343, %346 : vector<2x8x1xf32>
    %348 = math.rsqrt %347 : vector<2x8x1xf32>
    %349 = vector.broadcast %348 : vector<2x8x1xf32> to vector<2x8x32xf32>
    %350 = arith.mulf %345, %349 : vector<2x8x32xf32>
    %351 = vector.shape_cast %330 : vector<1x32xf32> to vector<1x1x32xf32>
    %352 = vector.broadcast %351 : vector<1x1x32xf32> to vector<2x8x32xf32>
    %353 = arith.mulf %350, %352 : vector<2x8x32xf32>
    %354 = vector.shape_cast %332 : vector<1x32xf32> to vector<1x1x32xf32>
    %355 = vector.broadcast %354 : vector<1x1x32xf32> to vector<2x8x32xf32>
    %356 = arith.addf %353, %355 : vector<2x8x32xf32>
    %357 = vector.broadcast %5 : vector<2x8x1xf32> to vector<2x8x32xf32>
    %358 = arith.mulf %356, %357 : vector<2x8x32xf32>
    %c0_167 = arith.constant 0 : index
    %c0_168 = arith.constant 0 : index
    %c0_169 = arith.constant 0 : index
    %359 = vector.load %arg36[%c0_167, %c0_168, %c0_169] : memref<2x8x32xf32, #tpu.memory_space<vmem>>, vector<2x8x32xf32>
    tpu.vector_store %arg36[%c0_167, %c0_168, %c0_169], %358 {strides = array<i32>} : memref<2x8x32xf32, #tpu.memory_space<vmem>>, vector<2x8x32xf32>,
    %c1_i32 = arith.constant 1 : i32
    %360 = arith.cmpi eq, %arg1, %c1_i32 : i32
    %361 = arith.extui %360 : i1 to i32
    %c0_i32_170 = arith.constant 0 : i32
    %362 = arith.cmpi ne, %361, %c0_i32_170 : i32
    scf.if %362 {
      %c0_171 = arith.constant 0 : index
      %c0_172 = arith.constant 0 : index
      %c0_173 = arith.constant 0 : index
      %363 = vector.load %arg35[%c0_171, %c0_172, %c0_173] : memref<2x8x32xf32, #tpu.memory_space<vmem>>, vector<2x8x32xf32>
      tpu.vector_store %arg35[%c0_171, %c0_172, %c0_173], %358 {strides = array<i32>} : memref<2x8x32xf32, #tpu.memory_space<vmem>>, vector<2x8x32xf32>,
    } else {
    }
    return
  }
  func.func @transform_0(%arg0: i32, %arg1: i32) -> (i32, i32, i32) {
    %c0_i32 = arith.constant 0 : i32
    %c0_i32_0 = arith.constant 0 : i32
    %c0_i32_1 = arith.constant 0 : i32
    return %arg0, %c0_i32, %c0_i32_0 : i32, i32, i32
  }
  func.func @transform_1(%arg0: i32, %arg1: i32) -> (i32, i32, i32) {
    %c0_i32 = arith.constant 0 : i32
    %c0_i32_0 = arith.constant 0 : i32
    %c0_i32_1 = arith.constant 0 : i32
    return %arg0, %c0_i32, %c0_i32_0 : i32, i32, i32
  }
  func.func @transform_2(%arg0: i32, %arg1: i32) -> (i32, i32, i32) {
    %c0_i32 = arith.constant 0 : i32
    %c0_i32_0 = arith.constant 0 : i32
    %c0_i32_1 = arith.constant 0 : i32
    return %arg0, %c0_i32, %c0_i32_0 : i32, i32, i32
  }
  func.func @transform_3(%arg0: i32, %arg1: i32) -> (i32, i32, i32) {
    %c0_i32 = arith.constant 0 : i32
    %c0_i32_0 = arith.constant 0 : i32
    %c0_i32_1 = arith.constant 0 : i32
    return %arg0, %c0_i32, %c0_i32_0 : i32, i32, i32
  }
  func.func @transform_4(%arg0: i32, %arg1: i32) -> (i32, i32, i32) {
    %c0_i32 = arith.constant 0 : i32
    %c0_i32_0 = arith.constant 0 : i32
    %c0_i32_1 = arith.constant 0 : i32
    return %arg0, %c0_i32, %c0_i32_0 : i32, i32, i32
  }
  func.func @transform_5(%arg0: i32, %arg1: i32) -> (i32, i32) {
    %c0_i32 = arith.constant 0 : i32
    %c0_i32_0 = arith.constant 0 : i32
    %c0_i32_1 = arith.constant 0 : i32
    return %c0_i32, %c0_i32_0 : i32, i32
  }
  func.func @transform_6(%arg0: i32, %arg1: i32) -> (i32, i32) {
    %c0_i32 = arith.constant 0 : i32
    %c0_i32_0 = arith.constant 0 : i32
    %c0_i32_1 = arith.constant 0 : i32
    return %c0_i32, %c0_i32_0 : i32, i32
  }
  func.func @transform_7(%arg0: i32, %arg1: i32) -> (i32, i32, i32) {
    %c0_i32 = arith.constant 0 : i32
    %c0_i32_0 = arith.constant 0 : i32
    %c0_i32_1 = arith.constant 0 : i32
    return %arg1, %c0_i32, %c0_i32_0 : i32, i32, i32
  }
  func.func @transform_8(%arg0: i32, %arg1: i32) -> (i32, i32, i32) {
    %c0_i32 = arith.constant 0 : i32
    %c0_i32_0 = arith.constant 0 : i32
    %c0_i32_1 = arith.constant 0 : i32
    return %arg1, %c0_i32, %c0_i32_0 : i32, i32, i32
  }
  func.func @transform_9(%arg0: i32, %arg1: i32) -> (i32, i32, i32) {
    %c0_i32 = arith.constant 0 : i32
    %c0_i32_0 = arith.constant 0 : i32
    %c0_i32_1 = arith.constant 0 : i32
    return %arg1, %c0_i32, %c0_i32_0 : i32, i32, i32
  }
  func.func @transform_10(%arg0: i32, %arg1: i32) -> (i32, i32, i32) {
    %c0_i32 = arith.constant 0 : i32
    %c0_i32_0 = arith.constant 0 : i32
    %c0_i32_1 = arith.constant 0 : i32
    return %arg1, %c0_i32, %c0_i32_0 : i32, i32, i32
  }
  func.func @transform_11(%arg0: i32, %arg1: i32) -> (i32, i32, i32) {
    %c0_i32 = arith.constant 0 : i32
    %c0_i32_0 = arith.constant 0 : i32
    %c0_i32_1 = arith.constant 0 : i32
    return %arg1, %c0_i32, %c0_i32_0 : i32, i32, i32
  }
  func.func @transform_12(%arg0: i32, %arg1: i32) -> (i32, i32, i32) {
    %c0_i32 = arith.constant 0 : i32
    %c0_i32_0 = arith.constant 0 : i32
    %c0_i32_1 = arith.constant 0 : i32
    return %arg1, %c0_i32, %c0_i32_0 : i32, i32, i32
  }
  func.func @transform_13(%arg0: i32, %arg1: i32) -> (i32, i32, i32) {
    %c0_i32 = arith.constant 0 : i32
    %c0_i32_0 = arith.constant 0 : i32
    %c0_i32_1 = arith.constant 0 : i32
    return %arg1, %c0_i32, %c0_i32_0 : i32, i32, i32
  }
  func.func @transform_14(%arg0: i32, %arg1: i32) -> (i32, i32, i32) {
    %c0_i32 = arith.constant 0 : i32
    %c0_i32_0 = arith.constant 0 : i32
    %c0_i32_1 = arith.constant 0 : i32
    return %arg1, %c0_i32, %c0_i32_0 : i32, i32, i32
  }
  func.func @transform_15(%arg0: i32, %arg1: i32) -> (i32, i32, i32) {
    %c0_i32 = arith.constant 0 : i32
    %c0_i32_0 = arith.constant 0 : i32
    %c0_i32_1 = arith.constant 0 : i32
    return %arg1, %c0_i32, %c0_i32_0 : i32, i32, i32
  }
  func.func @transform_16(%arg0: i32, %arg1: i32) -> (i32, i32, i32) {
    %c0_i32 = arith.constant 0 : i32
    %c0_i32_0 = arith.constant 0 : i32
    %c0_i32_1 = arith.constant 0 : i32
    return %arg1, %c0_i32, %c0_i32_0 : i32, i32, i32
  }
  func.func @transform_17(%arg0: i32, %arg1: i32) -> (i32, i32, i32) {
    %c0_i32 = arith.constant 0 : i32
    %c0_i32_0 = arith.constant 0 : i32
    %c0_i32_1 = arith.constant 0 : i32
    return %arg1, %c0_i32, %c0_i32_0 : i32, i32, i32
  }
  func.func @transform_18(%arg0: i32, %arg1: i32) -> (i32, i32, i32) {
    %c0_i32 = arith.constant 0 : i32
    %c0_i32_0 = arith.constant 0 : i32
    %c0_i32_1 = arith.constant 0 : i32
    return %arg1, %c0_i32, %c0_i32_0 : i32, i32, i32
  }
  func.func @transform_19(%arg0: i32, %arg1: i32) -> (i32, i32, i32) {
    %c0_i32 = arith.constant 0 : i32
    %c0_i32_0 = arith.constant 0 : i32
    %c0_i32_1 = arith.constant 0 : i32
    return %arg1, %c0_i32, %c0_i32_0 : i32, i32, i32
  }
  func.func @transform_20(%arg0: i32, %arg1: i32) -> (i32, i32, i32) {
    %c0_i32 = arith.constant 0 : i32
    %c0_i32_0 = arith.constant 0 : i32
    %c0_i32_1 = arith.constant 0 : i32
    return %arg1, %c0_i32, %c0_i32_0 : i32, i32, i32
  }
  func.func @transform_21(%arg0: i32, %arg1: i32) -> (i32, i32, i32) {
    %c0_i32 = arith.constant 0 : i32
    %c0_i32_0 = arith.constant 0 : i32
    %c0_i32_1 = arith.constant 0 : i32
    return %arg1, %c0_i32, %c0_i32_0 : i32, i32, i32
  }
  func.func @transform_22(%arg0: i32, %arg1: i32) -> (i32, i32, i32) {
    %c0_i32 = arith.constant 0 : i32
    %c0_i32_0 = arith.constant 0 : i32
    %c0_i32_1 = arith.constant 0 : i32
    return %arg1, %c0_i32, %c0_i32_0 : i32, i32, i32
  }
  func.func @transform_23(%arg0: i32, %arg1: i32) -> (i32, i32, i32) {
    %c0_i32 = arith.constant 0 : i32
    %c0_i32_0 = arith.constant 0 : i32
    %c0_i32_1 = arith.constant 0 : i32
    return %arg1, %c0_i32, %c0_i32_0 : i32, i32, i32
  }
  func.func @transform_24(%arg0: i32, %arg1: i32) -> (i32, i32, i32) {
    %c0_i32 = arith.constant 0 : i32
    %c0_i32_0 = arith.constant 0 : i32
    %c0_i32_1 = arith.constant 0 : i32
    return %arg1, %c0_i32, %c0_i32_0 : i32, i32, i32
  }
  func.func @transform_25(%arg0: i32, %arg1: i32) -> (i32, i32, i32) {
    %c0_i32 = arith.constant 0 : i32
    %c0_i32_0 = arith.constant 0 : i32
    %c0_i32_1 = arith.constant 0 : i32
    return %arg1, %c0_i32, %c0_i32_0 : i32, i32, i32
  }
  func.func @transform_26(%arg0: i32, %arg1: i32) -> (i32, i32, i32) {
    %c0_i32 = arith.constant 0 : i32
    %c0_i32_0 = arith.constant 0 : i32
    %c0_i32_1 = arith.constant 0 : i32
    return %arg1, %c0_i32, %c0_i32_0 : i32, i32, i32
  }
  func.func @transform_27(%arg0: i32, %arg1: i32) -> (i32, i32, i32) {
    %c0_i32 = arith.constant 0 : i32
    %c0_i32_0 = arith.constant 0 : i32
    %c0_i32_1 = arith.constant 0 : i32
    return %arg1, %c0_i32, %c0_i32_0 : i32, i32, i32
  }
  func.func @transform_28(%arg0: i32, %arg1: i32) -> (i32, i32, i32) {
    %c0_i32 = arith.constant 0 : i32
    %c0_i32_0 = arith.constant 0 : i32
    %c0_i32_1 = arith.constant 0 : i32
    return %arg1, %c0_i32, %c0_i32_0 : i32, i32, i32
  }
  func.func @transform_29(%arg0: i32, %arg1: i32) -> (i32, i32, i32) {
    %c0_i32 = arith.constant 0 : i32
    %c0_i32_0 = arith.constant 0 : i32
    %c0_i32_1 = arith.constant 0 : i32
    return %arg1, %c0_i32, %c0_i32_0 : i32, i32, i32
  }
  func.func @transform_30(%arg0: i32, %arg1: i32) -> (i32, i32, i32) {
    %c0_i32 = arith.constant 0 : i32
    %c0_i32_0 = arith.constant 0 : i32
    %c0_i32_1 = arith.constant 0 : i32
    return %arg1, %c0_i32, %c0_i32_0 : i32, i32, i32
  }
  func.func @transform_31(%arg0: i32, %arg1: i32) -> (i32, i32, i32) {
    %c0_i32 = arith.constant 0 : i32
    %c0_i32_0 = arith.constant 0 : i32
    %c0_i32_1 = arith.constant 0 : i32
    return %arg1, %c0_i32, %c0_i32_0 : i32, i32, i32
  }
  func.func @transform_32(%arg0: i32, %arg1: i32) -> (i32, i32, i32) {
    %c0_i32 = arith.constant 0 : i32
    %c0_i32_0 = arith.constant 0 : i32
    %c0_i32_1 = arith.constant 0 : i32
    return %arg1, %c0_i32, %c0_i32_0 : i32, i32, i32
  }
  func.func @transform_33(%arg0: i32, %arg1: i32) -> (i32, i32, i32) {
    %c0_i32 = arith.constant 0 : i32
    %c0_i32_0 = arith.constant 0 : i32
    %c0_i32_1 = arith.constant 0 : i32
    return %arg0, %c0_i32, %c0_i32_0 : i32, i32, i32
  }
}

</mosaic_0001>

<llo_original>
// kernel: tpu_custom_call.1
$region0: #{tpu_custom_call.1}
  #allocation0 [shape = 'u32[]', space=smem, size = 0x4, offset = 0x4, fixed_abs, tag = 'smem constant byte address 0x4 - core index']
  #allocation1 [shape = 'u32[144,128]{1,0:T(1,128)}', space=vmem, size = 0x12000, scoped, tag = 'internal scratch']
  #allocation2 [shape = 'f32[2,8,32]{2,1,0:T(8,128)}', space=vmem, size = 0x2000, scoped, tag = 'scratch operand']
  #allocation3 [shape = 'f32[2,16,32]{2,1,0:T(8,128)}', space=vmem, size = 0x4000, scoped, tag = 'scratch operand']
  #allocation4 [shape = 'f32[2,8,8]{2,1,0:T(8,128)}', space=vmem, size = 0x2000, scoped, tag = 'scratch operand']
  #allocation5 [shape = 'f32[2,1,16]{2,1,0:T(1,128)}', space=vmem, size = 0x400, scoped, tag = 'scratch operand']
  #allocation6 [shape = 'f32[16,32]{1,0:T(8,128)}', space=vmem, size = 0x2000, scoped, tag = 'scratch operand']
  %s0 = inlined_call_operand.smem [shape: u32[34], index: -1, kind: input, shape index: {}]
  %s1 = sld [smem:[%s0]]
  %s2 = scalar_lea.smem %s0, 1
  %s3 = sld [smem:[%s2]]
  %s4 = scalar_lea.smem %s0, 2
  %s5 = sld [smem:[%s4]]
  %s6 = scalar_lea.smem %s0, 3
  %s7 = sld [smem:[%s6]]
  %s8 = scalar_lea.smem %s0, 4
  %s9 = sld [smem:[%s8]]
  %s10 = scalar_lea.smem %s0, 5
  %s11 = sld [smem:[%s10]]
  %s12 = scalar_lea.smem %s0, 6
  %s13 = sld [smem:[%s12]]
  %s14 = scalar_lea.smem %s0, 7
  %s15 = sld [smem:[%s14]]
  %s16 = scalar_lea.smem %s0, 8
  %s17 = sld [smem:[%s16]]
  %s18 = scalar_lea.smem %s0, 9
  %s19 = sld [smem:[%s18]]
  %s20 = scalar_lea.smem %s0, 10
  %s21 = sld [smem:[%s20]]
  %s22 = scalar_lea.smem %s0, 11
  %s23 = sld [smem:[%s22]]
  %s24 = scalar_lea.smem %s0, 12
  %s25 = sld [smem:[%s24]]
  %s26 = scalar_lea.smem %s0, 13
  %s27 = sld [smem:[%s26]]
  %s28 = scalar_lea.smem %s0, 14
  %s29 = sld [smem:[%s28]]
  %s30 = scalar_lea.smem %s0, 15
  %s31 = sld [smem:[%s30]]
  %s32 = scalar_lea.smem %s0, 16
  %s33 = sld [smem:[%s32]]
  %s34 = scalar_lea.smem %s0, 17
  %s35 = sld [smem:[%s34]]
  %s36 = scalar_lea.smem %s0, 18
  %s37 = sld [smem:[%s36]]
  %s38 = scalar_lea.smem %s0, 19
  %s39 = sld [smem:[%s38]]
  %s40 = scalar_lea.smem %s0, 20
  %s41 = sld [smem:[%s40]]
  %s42 = scalar_lea.smem %s0, 21
  %s43 = sld [smem:[%s42]]
  %s44 = scalar_lea.smem %s0, 22
  %s45 = sld [smem:[%s44]]
  %s46 = scalar_lea.smem %s0, 23
  %s47 = sld [smem:[%s46]]
  %s48 = scalar_lea.smem %s0, 24
  %s49 = sld [smem:[%s48]]
  %s50 = scalar_lea.smem %s0, 25
  %s51 = sld [smem:[%s50]]
  %s52 = scalar_lea.smem %s0, 26
  %s53 = sld [smem:[%s52]]
  %s54 = scalar_lea.smem %s0, 27
  %s55 = sld [smem:[%s54]]
  %s56 = scalar_lea.smem %s0, 28
  %s57 = sld [smem:[%s56]]
  %s58 = scalar_lea.smem %s0, 29
  %s59 = sld [smem:[%s58]]
  %s60 = scalar_lea.smem %s0, 30
  %s61 = sld [smem:[%s60]]
  %s62 = scalar_lea.smem %s0, 31
  %s63 = sld [smem:[%s62]]
  %s64 = scalar_lea.smem %s0, 32
  %s65 = sld [smem:[%s64]]
  %s66 = scalar_lea.smem %s0, 33
  %s67 = sld [smem:[%s66]]
  %s68 = sld [smem:[#allocation0]]
  $region245: #{tpu_custom_call.1} parent=0
    _
  %s70 = ssub.s32 1, %s68
  %s71 = scalar_select 0, %s70, %s68
  $region1: #{tpu_custom_call.1} parent=0
    #allocation7 [shape = 'u8[8192]{0}', space=vmem, size = 0x2000, scoped, tag = 'input window, operand 0, single buffered']
    #allocation8 [shape = 's32[2]{0}', space=sflag, size = 0x8, scoped, tag = 'scoped memory for tpu_custom_call.1']
    #allocation9 [shape = 's32[2]{0}', space=sflag, size = 0x8, scoped, tag = 'scoped memory for tpu_custom_call.1']
    #allocation10 [shape = 'u8[1024]{0}', space=vmem, size = 0x400, scoped, tag = 'input window, operand 3, single buffered']
    #allocation11 [shape = 's32[1]{0}', space=sflag, size = 0x4, scoped, tag = 'scoped memory for tpu_custom_call.1']
    #allocation12 [shape = 'u8[1024]{0}', space=vmem, size = 0x400, scoped, tag = 'input window, operand 4, single buffered']
    #allocation13 [shape = 'u8[512]{0}', space=vmem, size = 0x400, scoped, tag = 'input window, operand 5, single buffered']
    #allocation14 [shape = 's32[1]{0}', space=sflag, size = 0x4, scoped, tag = 'scoped memory for tpu_custom_call.1']
    #allocation15 [shape = 'u8[512]{0}', space=vmem, size = 0x400, scoped, tag = 'input window, operand 6, single buffered']
    #allocation16 [shape = 'u8[16384]{0}', space=vmem, size = 0x4000, scoped, tag = 'input window, operand 9']
    #allocation17 [shape = 's32[2]{0}', space=sflag, size = 0x8, scoped, tag = 'scoped memory for tpu_custom_call.1']
    #allocation18 [shape = 'u8[1024]{0}', space=vmem, size = 0x400, scoped, tag = 'input window, operand 10']
    #allocation19 [shape = 'u8[1024]{0}', space=vmem, size = 0x400, scoped, tag = 'input window, operand 11']
    #allocation20 [shape = 's32[2]{0}', space=sflag, size = 0x8, scoped, tag = 'scoped memory for tpu_custom_call.1']
    #allocation21 [shape = 'u8[1024]{0}', space=vmem, size = 0x400, scoped, tag = 'input window, operand 12']
    #allocation22 [shape = 'u8[1024]{0}', space=vmem, size = 0x400, scoped, tag = 'input window, operand 14']
    #allocation23 [shape = 's32[2]{0}', space=sflag, size = 0x8, scoped, tag = 'scoped memory for tpu_custom_call.1']
    #allocation24 [shape = 'u8[1024]{0}', space=vmem, size = 0x400, scoped, tag = 'input window, operand 15']
    #allocation25 [shape = 'u8[1024]{0}', space=vmem, size = 0x400, scoped, tag = 'input window, operand 16']
    #allocation26 [shape = 's32[2]{0}', space=sflag, size = 0x8, scoped, tag = 'scoped memory for tpu_custom_call.1']
    #allocation27 [shape = 'u8[16384]{0}', space=vmem, size = 0x4000, scoped, tag = 'input window, operand 17']
    #allocation28 [shape = 'u8[16384]{0}', space=vmem, size = 0x4000, scoped, tag = 'input window, operand 18']
    #allocation29 [shape = 's32[2]{0}', space=sflag, size = 0x8, scoped, tag = 'scoped memory for tpu_custom_call.1']
    #allocation30 [shape = 'u8[16384]{0}', space=vmem, size = 0x4000, scoped, tag = 'input window, operand 19']
    #allocation31 [shape = 'u8[1024]{0}', space=vmem, size = 0x400, scoped, tag = 'input window, operand 20']
    #allocation32 [shape = 's32[2]{0}', space=sflag, size = 0x8, scoped, tag = 'scoped memory for tpu_custom_call.1']
    #allocation33 [shape = 'u8[1024]{0}', space=vmem, size = 0x400, scoped, tag = 'input window, operand 21']
    #allocation34 [shape = 'u8[16384]{0}', space=vmem, size = 0x4000, scoped, tag = 'input window, operand 27']
    #allocation35 [shape = 's32[2]{0}', space=sflag, size = 0x8, scoped, tag = 'scoped memory for tpu_custom_call.1']
    #allocation36 [shape = 'u8[8192]{0}', space=vmem, size = 0x2000, scoped, tag = 'output window, operand 0, single buffered']
    %72 = vsyncpa [#allocation8], 0
    %73 = vsyncpa [#allocation11], 0
    %74 = vsyncpa [#allocation14], 0
    %75 = vsyncpa [#allocation17], 0
    %s76 = scalar_lea.sflag [#allocation17], 1
    %77 = vsyncpa %s76, 0
    %78 = vsyncpa [#allocation20], 0
    %s79 = scalar_lea.sflag [#allocation20], 1
    %80 = vsyncpa %s79, 0
    %81 = vsyncpa [#allocation23], 0
    %s82 = scalar_lea.sflag [#allocation23], 1
    %83 = vsyncpa %s82, 0
    %84 = vsyncpa [#allocation26], 0
    %s85 = scalar_lea.sflag [#allocation26], 1
    %86 = vsyncpa %s85, 0
    %87 = vsyncpa [#allocation29], 0
    %s88 = scalar_lea.sflag [#allocation29], 1
    %89 = vsyncpa %s88, 0
    %90 = vsyncpa [#allocation32], 0
    %s91 = scalar_lea.sflag [#allocation32], 1
    %92 = vsyncpa %s91, 0
    %93 = vsyncpa [#allocation35], 0
    %s94 = scalar_lea.sflag [#allocation35], 1
    %95 = vsyncpa %s94, 0
    %96 = vsyncpa [#allocation9], 0
    loop: start=0, step=1, limit=4
    $region2: #{tpu_custom_call.1} parent=1 // loop_pre_header
      _
    $region3: #{tpu_custom_call.1} parent=1 // loop_header
      %s98 = sphi 0, %s102
      %p99 = scmp.ge.s32.totalorder %s98, 4
      %s105 = sphi 0, %s117
      %s106 = sphi 0, %s113
      %s107 = sphi 0, %s105
      %s108 = sphi 0, %s106
      %s109 = sphi 0, %s107
      %s110 = sphi 0, %s108
      %s120 = sphi 0, %s122
      %s123 = sphi 0, %s120
      %s124 = sphi 0, %s123
      %s140 = sphi 0, %s124
      %s146 = sphi 0, %s148
      %s149 = sphi 0, %s146
      %s150 = sphi 0, %s149
      %s166 = sphi 0, %s150
      %s172 = sphi 0, %s174
      %s175 = sphi 0, %s172
      %s176 = sphi 0, %s175
      %s192 = sphi 0, %s176
      %s198 = sphi 0, %s200
      %s201 = sphi 0, %s198
      %s202 = sphi 0, %s201
      %s218 = sphi 0, %s202
      %s224 = sphi 0, %s226
      %s227 = sphi 0, %s224
      %s228 = sphi 0, %s227
      %s244 = sphi 0, %s228
      %s248 = sphi 0, %s248
      %s250 = sphi 0, %s248
      %s251 = sphi 0, %s250
      %s265 = sphi 0, %s251
      %s269 = sphi 0, %s269
      %s271 = sphi 0, %s269
      %s272 = sphi 0, %s271
      %s286 = sphi 0, %s272
      %s292 = sphi 0, %s294
      %s295 = sphi 0, %s292
      %s296 = sphi 0, %s295
      %s312 = sphi 0, %s296
      %s318 = sphi 0, %s320
      %s321 = sphi 0, %s318
      %s322 = sphi 0, %s321
      %s338 = sphi 0, %s322
      %s344 = sphi 0, %s346
      %s347 = sphi 0, %s344
      %s348 = sphi 0, %s347
      %s364 = sphi 0, %s348
      %s370 = sphi 0, %s372
      %s373 = sphi 0, %s370
      %s374 = sphi 0, %s373
      %s390 = sphi 0, %s374
      %s396 = sphi 0, %s398
      %s399 = sphi 0, %s396
      %s400 = sphi 0, %s399
      %s416 = sphi 0, %s400
      %s422 = sphi 0, %s424
      %s425 = sphi 0, %s422
      %s426 = sphi 0, %s425
      %s442 = sphi 0, %s426
      %s448 = sphi 0, %s450
      %s451 = sphi 0, %s448
      %s452 = sphi 0, %s451
      %s468 = sphi 0, %s452
      %s474 = sphi 0, %s476
      %s477 = sphi 0, %s474
      %s478 = sphi 0, %s477
      %s494 = sphi 0, %s478
      %s500 = sphi 0, %s502
      %s503 = sphi 0, %s500
      %s504 = sphi 0, %s503
      %s520 = sphi 0, %s504
      %s526 = sphi 0, %s528
      %s529 = sphi 0, %s526
      %s530 = sphi 0, %s529
      %s546 = sphi 0, %s530
      %s552 = sphi 0, %s554
      %s555 = sphi 0, %s552
      %s556 = sphi 0, %s555
      %s572 = sphi 0, %s556
      %s578 = sphi 0, %s580
      %s581 = sphi 0, %s578
      %s582 = sphi 0, %s581
      %s598 = sphi 0, %s582
      %s604 = sphi 0, %s606
      %s607 = sphi 0, %s604
      %s608 = sphi 0, %s607
      %s624 = sphi 0, %s608
      %s630 = sphi 0, %s632
      %s633 = sphi 0, %s630
      %s634 = sphi 0, %s633
      %s650 = sphi 0, %s634
      %s656 = sphi 0, %s658
      %s659 = sphi 0, %s656
      %s660 = sphi 0, %s659
      %s676 = sphi 0, %s660
      %s682 = sphi 0, %s684
      %s685 = sphi 0, %s682
      %s686 = sphi 0, %s685
      %s702 = sphi 0, %s686
      %s708 = sphi 0, %s710
      %s711 = sphi 0, %s708
      %s712 = sphi 0, %s711
      %s728 = sphi 0, %s712
      %s734 = sphi 0, %s736
      %s737 = sphi 0, %s734
      %s738 = sphi 0, %s737
      %s754 = sphi 0, %s738
      %s760 = sphi 0, %s762
      %s763 = sphi 0, %s760
      %s764 = sphi 0, %s763
      %s780 = sphi 0, %s764
      %s786 = sphi 0, %s788
      %s789 = sphi 0, %s786
      %s790 = sphi 0, %s789
      %s806 = sphi 0, %s790
      %s812 = sphi 0, %s814
      %s815 = sphi 0, %s812
      %s816 = sphi 0, %s815
      %s832 = sphi 0, %s816
      %s838 = sphi 0, %s840
      %s841 = sphi 0, %s838
      %s842 = sphi 0, %s841
      %s858 = sphi 0, %s842
      %s864 = sphi 0, %s866
      %s867 = sphi 0, %s864
      %s868 = sphi 0, %s867
      %s884 = sphi 0, %s868
      %s890 = sphi 0, %s892
      %s893 = sphi 0, %s890
      %s894 = sphi 0, %s893
      %s910 = sphi 0, %s894
      %s916 = sphi 0, %s918
      %s919 = sphi 0, %s916
      %s920 = sphi 0, %s919
      %s936 = sphi 0, %s920
      %s942 = sphi 0, %s944
      %s945 = sphi 0, %s942
      %s946 = sphi 0, %s945
      %s962 = sphi 0, %s946
      %s968 = sphi 0, %s970
      %s971 = sphi 0, %s968
      %s972 = sphi 0, %s971
      %s988 = sphi 0, %s972
    $region4: #{tpu_custom_call.1} parent=1 // loop_header_branch
      %101 = sbr.rel (%p99) target = $region8
    $region5: #{tpu_custom_call.1} parent=1 // loop_body
      %s103 = ssub.s32 %s98, 1
      %s104 = ssub.s32 %s98, 2
      %s111 = sadd.s32 1, %s106
      %p112 = scmp.ge.s32.totalorder %s111, 2
      %s113 = scalar_select %p112, 0, %s111
      %s114 = sadd.s32 1, %s105
      %s115 = scalar_select %p112, %s114, %s105
      %p116 = scmp.ge.s32.totalorder %s115, 1
      %s117 = scalar_select %p116, 0, %s115
      %s118 = ssub.s32 %s105, %s117
      %p119 = scmp.eq.s32.totalorder %s118, 0
      %s121 = sadd.s32 %s120, 1
      %s122 = scalar_select %p119, %s120, %s121
      %p125 = pneg %p119
      %p126 = scmp.eq.s32.totalorder %s98, 1
      %p127 = por %p125, %p126
      %p128 = scmp.ne.s32.totalorder %s120, %s123
      %p129 = scmp.eq.s32.totalorder %s98, 0
      %p130 = por %p128, %p129
      %p131 = scmp.ne.s32.totalorder %s120, %s123
      %p132 = scmp.eq.s32.totalorder %s103, 1
      %p133 = por %p131, %p132
      %p134 = scmp.ne.s32.totalorder %s123, %s124
      %p135 = scmp.eq.s32.totalorder %s103, 0
      %p136 = por %p134, %p135
      %p137 = scmp.ne.s32.totalorder %s123, %s124
      %p138 = scmp.eq.s32.totalorder %s104, 1
      %p139 = por %p137, %p138
      %p141 = scmp.ne.s32.totalorder %s124, %s140
      %p142 = scmp.eq.s32.totalorder %s104, 0
      %p143 = por %p141, %p142
      %s144 = ssub.s32 %s105, %s117
      %p145 = scmp.eq.s32.totalorder %s144, 0
      %s147 = sadd.s32 %s146, 1
      %s148 = scalar_select %p145, %s146, %s147
      %p151 = pneg %p145
      %p152 = scmp.eq.s32.totalorder %s98, 1
      %p153 = por %p151, %p152
      %p154 = scmp.ne.s32.totalorder %s146, %s149
      %p155 = scmp.eq.s32.totalorder %s98, 0
      %p156 = por %p154, %p155
      %p157 = scmp.ne.s32.totalorder %s146, %s149
      %p158 = scmp.eq.s32.totalorder %s103, 1
      %p159 = por %p157, %p158
      %p160 = scmp.ne.s32.totalorder %s149, %s150
      %p161 = scmp.eq.s32.totalorder %s103, 0
      %p162 = por %p160, %p161
      %p163 = scmp.ne.s32.totalorder %s149, %s150
      %p164 = scmp.eq.s32.totalorder %s104, 1
      %p165 = por %p163, %p164
      %p167 = scmp.ne.s32.totalorder %s150, %s166
      %p168 = scmp.eq.s32.totalorder %s104, 0
      %p169 = por %p167, %p168
      %s170 = ssub.s32 %s105, %s117
      %p171 = scmp.eq.s32.totalorder %s170, 0
      %s173 = sadd.s32 %s172, 1
      %s174 = scalar_select %p171, %s172, %s173
      %p177 = pneg %p171
      %p178 = scmp.eq.s32.totalorder %s98, 1
      %p179 = por %p177, %p178
      %p180 = scmp.ne.s32.totalorder %s172, %s175
      %p181 = scmp.eq.s32.totalorder %s98, 0
      %p182 = por %p180, %p181
      %p183 = scmp.ne.s32.totalorder %s172, %s175
      %p184 = scmp.eq.s32.totalorder %s103, 1
      %p185 = por %p183, %p184
      %p186 = scmp.ne.s32.totalorder %s175, %s176
      %p187 = scmp.eq.s32.totalorder %s103, 0
      %p188 = por %p186, %p187
      %p189 = scmp.ne.s32.totalorder %s175, %s176
      %p190 = scmp.eq.s32.totalorder %s104, 1
      %p191 = por %p189, %p190
      %p193 = scmp.ne.s32.totalorder %s176, %s192
      %p194 = scmp.eq.s32.totalorder %s104, 0
      %p195 = por %p193, %p194
      %s196 = ssub.s32 %s105, %s117
      %p197 = scmp.eq.s32.totalorder %s196, 0
      %s199 = sadd.s32 %s198, 1
      %s200 = scalar_select %p197, %s198, %s199
      %p203 = pneg %p197
      %p204 = scmp.eq.s32.totalorder %s98, 1
      %p205 = por %p203, %p204
      %p206 = scmp.ne.s32.totalorder %s198, %s201
      %p207 = scmp.eq.s32.totalorder %s98, 0
      %p208 = por %p206, %p207
      %p209 = scmp.ne.s32.totalorder %s198, %s201
      %p210 = scmp.eq.s32.totalorder %s103, 1
      %p211 = por %p209, %p210
      %p212 = scmp.ne.s32.totalorder %s201, %s202
      %p213 = scmp.eq.s32.totalorder %s103, 0
      %p214 = por %p212, %p213
      %p215 = scmp.ne.s32.totalorder %s201, %s202
      %p216 = scmp.eq.s32.totalorder %s104, 1
      %p217 = por %p215, %p216
      %p219 = scmp.ne.s32.totalorder %s202, %s218
      %p220 = scmp.eq.s32.totalorder %s104, 0
      %p221 = por %p219, %p220
      %s222 = ssub.s32 %s105, %s117
      %p223 = scmp.eq.s32.totalorder %s222, 0
      %s225 = sadd.s32 %s224, 1
      %s226 = scalar_select %p223, %s224, %s225
      %p229 = pneg %p223
      %p230 = scmp.eq.s32.totalorder %s98, 1
      %p231 = por %p229, %p230
      %p232 = scmp.ne.s32.totalorder %s224, %s227
      %p233 = scmp.eq.s32.totalorder %s98, 0
      %p234 = por %p232, %p233
      %p235 = scmp.ne.s32.totalorder %s224, %s227
      %p236 = scmp.eq.s32.totalorder %s103, 1
      %p237 = por %p235, %p236
      %p238 = scmp.ne.s32.totalorder %s227, %s228
      %p239 = scmp.eq.s32.totalorder %s103, 0
      %p240 = por %p238, %p239
      %p241 = scmp.ne.s32.totalorder %s227, %s228
      %p242 = scmp.eq.s32.totalorder %s104, 1
      %p243 = por %p241, %p242
      %p245 = scmp.ne.s32.totalorder %s228, %s244
      %p246 = scmp.eq.s32.totalorder %s104, 0
      %p247 = por %p245, %p246
      %s249 = sadd.s32 %s248, 1
      %p252 = scmp.eq.s32.totalorder %s98, 1
      %p253 = scmp.ne.s32.totalorder %s248, %s250
      %p254 = scmp.eq.s32.totalorder %s98, 0
      %p255 = por %p253, %p254
      %p256 = scmp.ne.s32.totalorder %s248, %s250
      %p257 = scmp.eq.s32.totalorder %s103, 1
      %p258 = por %p256, %p257
      %p259 = scmp.ne.s32.totalorder %s250, %s251
      %p260 = scmp.eq.s32.totalorder %s103, 0
      %p261 = por %p259, %p260
      %p262 = scmp.ne.s32.totalorder %s250, %s251
      %p263 = scmp.eq.s32.totalorder %s104, 1
      %p264 = por %p262, %p263
      %p266 = scmp.ne.s32.totalorder %s251, %s265
      %p267 = scmp.eq.s32.totalorder %s104, 0
      %p268 = por %p266, %p267
      %s270 = sadd.s32 %s269, 1
      %p273 = scmp.eq.s32.totalorder %s98, 1
      %p274 = scmp.ne.s32.totalorder %s269, %s271
      %p275 = scmp.eq.s32.totalorder %s98, 0
      %p276 = por %p274, %p275
      %p277 = scmp.ne.s32.totalorder %s269, %s271
      %p278 = scmp.eq.s32.totalorder %s103, 1
      %p279 = por %p277, %p278
      %p280 = scmp.ne.s32.totalorder %s271, %s272
      %p281 = scmp.eq.s32.totalorder %s103, 0
      %p282 = por %p280, %p281
      %p283 = scmp.ne.s32.totalorder %s271, %s272
      %p284 = scmp.eq.s32.totalorder %s104, 1
      %p285 = por %p283, %p284
      %p287 = scmp.ne.s32.totalorder %s272, %s286
      %p288 = scmp.eq.s32.totalorder %s104, 0
      %p289 = por %p287, %p288
      %s290 = ssub.s32 %s106, %s113
      %p291 = scmp.eq.s32.totalorder %s290, 0
      %s293 = sadd.s32 %s292, 1
      %s294 = scalar_select %p291, %s292, %s293
      %p297 = pneg %p291
      %p298 = scmp.eq.s32.totalorder %s98, 1
      %p299 = por %p297, %p298
      %p300 = scmp.ne.s32.totalorder %s292, %s295
      %p301 = scmp.eq.s32.totalorder %s98, 0
      %p302 = por %p300, %p301
      %p303 = scmp.ne.s32.totalorder %s292, %s295
      %p304 = scmp.eq.s32.totalorder %s103, 1
      %p305 = por %p303, %p304
      %p306 = scmp.ne.s32.totalorder %s295, %s296
      %p307 = scmp.eq.s32.totalorder %s103, 0
      %p308 = por %p306, %p307
      %p309 = scmp.ne.s32.totalorder %s295, %s296
      %p310 = scmp.eq.s32.totalorder %s104, 1
      %p311 = por %p309, %p310
      %p313 = scmp.ne.s32.totalorder %s296, %s312
      %p314 = scmp.eq.s32.totalorder %s104, 0
      %p315 = por %p313, %p314
      %s316 = ssub.s32 %s106, %s113
      %p317 = scmp.eq.s32.totalorder %s316, 0
      %s319 = sadd.s32 %s318, 1
      %s320 = scalar_select %p317, %s318, %s319
      %p323 = pneg %p317
      %p324 = scmp.eq.s32.totalorder %s98, 1
      %p325 = por %p323, %p324
      %p326 = scmp.ne.s32.totalorder %s318, %s321
      %p327 = scmp.eq.s32.totalorder %s98, 0
      %p328 = por %p326, %p327
      %p329 = scmp.ne.s32.totalorder %s318, %s321
      %p330 = scmp.eq.s32.totalorder %s103, 1
      %p331 = por %p329, %p330
      %p332 = scmp.ne.s32.totalorder %s321, %s322
      %p333 = scmp.eq.s32.totalorder %s103, 0
      %p334 = por %p332, %p333
      %p335 = scmp.ne.s32.totalorder %s321, %s322
      %p336 = scmp.eq.s32.totalorder %s104, 1
      %p337 = por %p335, %p336
      %p339 = scmp.ne.s32.totalorder %s322, %s338
      %p340 = scmp.eq.s32.totalorder %s104, 0
      %p341 = por %p339, %p340
      %s342 = ssub.s32 %s106, %s113
      %p343 = scmp.eq.s32.totalorder %s342, 0
      %s345 = sadd.s32 %s344, 1
      %s346 = scalar_select %p343, %s344, %s345
      %p349 = pneg %p343
      %p350 = scmp.eq.s32.totalorder %s98, 1
      %p351 = por %p349, %p350
      %p352 = scmp.ne.s32.totalorder %s344, %s347
      %p353 = scmp.eq.s32.totalorder %s98, 0
      %p354 = por %p352, %p353
      %p355 = scmp.ne.s32.totalorder %s344, %s347
      %p356 = scmp.eq.s32.totalorder %s103, 1
      %p357 = por %p355, %p356
      %p358 = scmp.ne.s32.totalorder %s347, %s348
      %p359 = scmp.eq.s32.totalorder %s103, 0
      %p360 = por %p358, %p359
      %p361 = scmp.ne.s32.totalorder %s347, %s348
      %p362 = scmp.eq.s32.totalorder %s104, 1
      %p363 = por %p361, %p362
      %p365 = scmp.ne.s32.totalorder %s348, %s364
      %p366 = scmp.eq.s32.totalorder %s104, 0
      %p367 = por %p365, %p366
      %s368 = ssub.s32 %s106, %s113
      %p369 = scmp.eq.s32.totalorder %s368, 0
      %s371 = sadd.s32 %s370, 1
      %s372 = scalar_select %p369, %s370, %s371
      %p375 = pneg %p369
      %p376 = scmp.eq.s32.totalorder %s98, 1
      %p377 = por %p375, %p376
      %p378 = scmp.ne.s32.totalorder %s370, %s373
      %p379 = scmp.eq.s32.totalorder %s98, 0
      %p380 = por %p378, %p379
      %p381 = scmp.ne.s32.totalorder %s370, %s373
      %p382 = scmp.eq.s32.totalorder %s103, 1
      %p383 = por %p381, %p382
      %p384 = scmp.ne.s32.totalorder %s373, %s374
      %p385 = scmp.eq.s32.totalorder %s103, 0
      %p386 = por %p384, %p385
      %p387 = scmp.ne.s32.totalorder %s373, %s374
      %p388 = scmp.eq.s32.totalorder %s104, 1
      %p389 = por %p387, %p388
      %p391 = scmp.ne.s32.totalorder %s374, %s390
      %p392 = scmp.eq.s32.totalorder %s104, 0
      %p393 = por %p391, %p392
      %s394 = ssub.s32 %s106, %s113
      %p395 = scmp.eq.s32.totalorder %s394, 0
      %s397 = sadd.s32 %s396, 1
      %s398 = scalar_select %p395, %s396, %s397
      %p401 = pneg %p395
      %p402 = scmp.eq.s32.totalorder %s98, 1
      %p403 = por %p401, %p402
      %p404 = scmp.ne.s32.totalorder %s396, %s399
      %p405 = scmp.eq.s32.totalorder %s98, 0
      %p406 = por %p404, %p405
      %p407 = scmp.ne.s32.totalorder %s396, %s399
      %p408 = scmp.eq.s32.totalorder %s103, 1
      %p409 = por %p407, %p408
      %p410 = scmp.ne.s32.totalorder %s399, %s400
      %p411 = scmp.eq.s32.totalorder %s103, 0
      %p412 = por %p410, %p411
      %p413 = scmp.ne.s32.totalorder %s399, %s400
      %p414 = scmp.eq.s32.totalorder %s104, 1
      %p415 = por %p413, %p414
      %p417 = scmp.ne.s32.totalorder %s400, %s416
      %p418 = scmp.eq.s32.totalorder %s104, 0
      %p419 = por %p417, %p418
      %s420 = ssub.s32 %s106, %s113
      %p421 = scmp.eq.s32.totalorder %s420, 0
      %s423 = sadd.s32 %s422, 1
      %s424 = scalar_select %p421, %s422, %s423
      %p427 = pneg %p421
      %p428 = scmp.eq.s32.totalorder %s98, 1
      %p429 = por %p427, %p428
      %p430 = scmp.ne.s32.totalorder %s422, %s425
      %p431 = scmp.eq.s32.totalorder %s98, 0
      %p432 = por %p430, %p431
      %p433 = scmp.ne.s32.totalorder %s422, %s425
      %p434 = scmp.eq.s32.totalorder %s103, 1
      %p435 = por %p433, %p434
      %p436 = scmp.ne.s32.totalorder %s425, %s426
      %p437 = scmp.eq.s32.totalorder %s103, 0
      %p438 = por %p436, %p437
      %p439 = scmp.ne.s32.totalorder %s425, %s426
      %p440 = scmp.eq.s32.totalorder %s104, 1
      %p441 = por %p439, %p440
      %p443 = scmp.ne.s32.totalorder %s426, %s442
      %p444 = scmp.eq.s32.totalorder %s104, 0
      %p445 = por %p443, %p444
      %s446 = ssub.s32 %s106, %s113
      %p447 = scmp.eq.s32.totalorder %s446, 0
      %s449 = sadd.s32 %s448, 1
      %s450 = scalar_select %p447, %s448, %s449
      %p453 = pneg %p447
      %p454 = scmp.eq.s32.totalorder %s98, 1
      %p455 = por %p453, %p454
      %p456 = scmp.ne.s32.totalorder %s448, %s451
      %p457 = scmp.eq.s32.totalorder %s98, 0
      %p458 = por %p456, %p457
      %p459 = scmp.ne.s32.totalorder %s448, %s451
      %p460 = scmp.eq.s32.totalorder %s103, 1
      %p461 = por %p459, %p460
      %p462 = scmp.ne.s32.totalorder %s451, %s452
      %p463 = scmp.eq.s32.totalorder %s103, 0
      %p464 = por %p462, %p463
      %p465 = scmp.ne.s32.totalorder %s451, %s452
      %p466 = scmp.eq.s32.totalorder %s104, 1
      %p467 = por %p465, %p466
      %p469 = scmp.ne.s32.totalorder %s452, %s468
      %p470 = scmp.eq.s32.totalorder %s104, 0
      %p471 = por %p469, %p470
      %s472 = ssub.s32 %s106, %s113
      %p473 = scmp.eq.s32.totalorder %s472, 0
      %s475 = sadd.s32 %s474, 1
      %s476 = scalar_select %p473, %s474, %s475
      %p479 = pneg %p473
      %p480 = scmp.eq.s32.totalorder %s98, 1
      %p481 = por %p479, %p480
      %p482 = scmp.ne.s32.totalorder %s474, %s477
      %p483 = scmp.eq.s32.totalorder %s98, 0
      %p484 = por %p482, %p483
      %p485 = scmp.ne.s32.totalorder %s474, %s477
      %p486 = scmp.eq.s32.totalorder %s103, 1
      %p487 = por %p485, %p486
      %p488 = scmp.ne.s32.totalorder %s477, %s478
      %p489 = scmp.eq.s32.totalorder %s103, 0
      %p490 = por %p488, %p489
      %p491 = scmp.ne.s32.totalorder %s477, %s478
      %p492 = scmp.eq.s32.totalorder %s104, 1
      %p493 = por %p491, %p492
      %p495 = scmp.ne.s32.totalorder %s478, %s494
      %p496 = scmp.eq.s32.totalorder %s104, 0
      %p497 = por %p495, %p496
      %s498 = ssub.s32 %s106, %s113
      %p499 = scmp.eq.s32.totalorder %s498, 0
      %s501 = sadd.s32 %s500, 1
      %s502 = scalar_select %p499, %s500, %s501
      %p505 = pneg %p499
      %p506 = scmp.eq.s32.totalorder %s98, 1
      %p507 = por %p505, %p506
      %p508 = scmp.ne.s32.totalorder %s500, %s503
      %p509 = scmp.eq.s32.totalorder %s98, 0
      %p510 = por %p508, %p509
      %p511 = scmp.ne.s32.totalorder %s500, %s503
      %p512 = scmp.eq.s32.totalorder %s103, 1
      %p513 = por %p511, %p512
      %p514 = scmp.ne.s32.totalorder %s503, %s504
      %p515 = scmp.eq.s32.totalorder %s103, 0
      %p516 = por %p514, %p515
      %p517 = scmp.ne.s32.totalorder %s503, %s504
      %p518 = scmp.eq.s32.totalorder %s104, 1
      %p519 = por %p517, %p518
      %p521 = scmp.ne.s32.totalorder %s504, %s520
      %p522 = scmp.eq.s32.totalorder %s104, 0
      %p523 = por %p521, %p522
      %s524 = ssub.s32 %s106, %s113
      %p525 = scmp.eq.s32.totalorder %s524, 0
      %s527 = sadd.s32 %s526, 1
      %s528 = scalar_select %p525, %s526, %s527
      %p531 = pneg %p525
      %p532 = scmp.eq.s32.totalorder %s98, 1
      %p533 = por %p531, %p532
      %p534 = scmp.ne.s32.totalorder %s526, %s529
      %p535 = scmp.eq.s32.totalorder %s98, 0
      %p536 = por %p534, %p535
      %p537 = scmp.ne.s32.totalorder %s526, %s529
      %p538 = scmp.eq.s32.totalorder %s103, 1
      %p539 = por %p537, %p538
      %p540 = scmp.ne.s32.totalorder %s529, %s530
      %p541 = scmp.eq.s32.totalorder %s103, 0
      %p542 = por %p540, %p541
      %p543 = scmp.ne.s32.totalorder %s529, %s530
      %p544 = scmp.eq.s32.totalorder %s104, 1
      %p545 = por %p543, %p544
      %p547 = scmp.ne.s32.totalorder %s530, %s546
      %p548 = scmp.eq.s32.totalorder %s104, 0
      %p549 = por %p547, %p548
      %s550 = ssub.s32 %s106, %s113
      %p551 = scmp.eq.s32.totalorder %s550, 0
      %s553 = sadd.s32 %s552, 1
      %s554 = scalar_select %p551, %s552, %s553
      %p557 = pneg %p551
      %p558 = scmp.eq.s32.totalorder %s98, 1
      %p559 = por %p557, %p558
      %p560 = scmp.ne.s32.totalorder %s552, %s555
      %p561 = scmp.eq.s32.totalorder %s98, 0
      %p562 = por %p560, %p561
      %p563 = scmp.ne.s32.totalorder %s552, %s555
      %p564 = scmp.eq.s32.totalorder %s103, 1
      %p565 = por %p563, %p564
      %p566 = scmp.ne.s32.totalorder %s555, %s556
      %p567 = scmp.eq.s32.totalorder %s103, 0
      %p568 = por %p566, %p567
      %p569 = scmp.ne.s32.totalorder %s555, %s556
      %p570 = scmp.eq.s32.totalorder %s104, 1
      %p571 = por %p569, %p570
      %p573 = scmp.ne.s32.totalorder %s556, %s572
      %p574 = scmp.eq.s32.totalorder %s104, 0
      %p575 = por %p573, %p574
      %s576 = ssub.s32 %s106, %s113
      %p577 = scmp.eq.s32.totalorder %s576, 0
      %s579 = sadd.s32 %s578, 1
      %s580 = scalar_select %p577, %s578, %s579
      %p583 = pneg %p577
      %p584 = scmp.eq.s32.totalorder %s98, 1
      %p585 = por %p583, %p584
      %p586 = scmp.ne.s32.totalorder %s578, %s581
      %p587 = scmp.eq.s32.totalorder %s98, 0
      %p588 = por %p586, %p587
      %p589 = scmp.ne.s32.totalorder %s578, %s581
      %p590 = scmp.eq.s32.totalorder %s103, 1
      %p591 = por %p589, %p590
      %p592 = scmp.ne.s32.totalorder %s581, %s582
      %p593 = scmp.eq.s32.totalorder %s103, 0
      %p594 = por %p592, %p593
      %p595 = scmp.ne.s32.totalorder %s581, %s582
      %p596 = scmp.eq.s32.totalorder %s104, 1
      %p597 = por %p595, %p596
      %p599 = scmp.ne.s32.totalorder %s582, %s598
      %p600 = scmp.eq.s32.totalorder %s104, 0
      %p601 = por %p599, %p600
      %s602 = ssub.s32 %s106, %s113
      %p603 = scmp.eq.s32.totalorder %s602, 0
      %s605 = sadd.s32 %s604, 1
      %s606 = scalar_select %p603, %s604, %s605
      %p609 = pneg %p603
      %p610 = scmp.eq.s32.totalorder %s98, 1
      %p611 = por %p609, %p610
      %p612 = scmp.ne.s32.totalorder %s604, %s607
      %p613 = scmp.eq.s32.totalorder %s98, 0
      %p614 = por %p612, %p613
      %p615 = scmp.ne.s32.totalorder %s604, %s607
      %p616 = scmp.eq.s32.totalorder %s103, 1
      %p617 = por %p615, %p616
      %p618 = scmp.ne.s32.totalorder %s607, %s608
      %p619 = scmp.eq.s32.totalorder %s103, 0
      %p620 = por %p618, %p619
      %p621 = scmp.ne.s32.totalorder %s607, %s608
      %p622 = scmp.eq.s32.totalorder %s104, 1
      %p623 = por %p621, %p622
      %p625 = scmp.ne.s32.totalorder %s608, %s624
      %p626 = scmp.eq.s32.totalorder %s104, 0
      %p627 = por %p625, %p626
      %s628 = ssub.s32 %s106, %s113
      %p629 = scmp.eq.s32.totalorder %s628, 0
      %s631 = sadd.s32 %s630, 1
      %s632 = scalar_select %p629, %s630, %s631
      %p635 = pneg %p629
      %p636 = scmp.eq.s32.totalorder %s98, 1
      %p637 = por %p635, %p636
      %p638 = scmp.ne.s32.totalorder %s630, %s633
      %p639 = scmp.eq.s32.totalorder %s98, 0
      %p640 = por %p638, %p639
      %p641 = scmp.ne.s32.totalorder %s630, %s633
      %p642 = scmp.eq.s32.totalorder %s103, 1
      %p643 = por %p641, %p642
      %p644 = scmp.ne.s32.totalorder %s633, %s634
      %p645 = scmp.eq.s32.totalorder %s103, 0
      %p646 = por %p644, %p645
      %p647 = scmp.ne.s32.totalorder %s633, %s634
      %p648 = scmp.eq.s32.totalorder %s104, 1
      %p649 = por %p647, %p648
      %p651 = scmp.ne.s32.totalorder %s634, %s650
      %p652 = scmp.eq.s32.totalorder %s104, 0
      %p653 = por %p651, %p652
      %s654 = ssub.s32 %s106, %s113
      %p655 = scmp.eq.s32.totalorder %s654, 0
      %s657 = sadd.s32 %s656, 1
      %s658 = scalar_select %p655, %s656, %s657
      %p661 = pneg %p655
      %p662 = scmp.eq.s32.totalorder %s98, 1
      %p663 = por %p661, %p662
      %p664 = scmp.ne.s32.totalorder %s656, %s659
      %p665 = scmp.eq.s32.totalorder %s98, 0
      %p666 = por %p664, %p665
      %p667 = scmp.ne.s32.totalorder %s656, %s659
      %p668 = scmp.eq.s32.totalorder %s103, 1
      %p669 = por %p667, %p668
      %p670 = scmp.ne.s32.totalorder %s659, %s660
      %p671 = scmp.eq.s32.totalorder %s103, 0
      %p672 = por %p670, %p671
      %p673 = scmp.ne.s32.totalorder %s659, %s660
      %p674 = scmp.eq.s32.totalorder %s104, 1
      %p675 = por %p673, %p674
      %p677 = scmp.ne.s32.totalorder %s660, %s676
      %p678 = scmp.eq.s32.totalorder %s104, 0
      %p679 = por %p677, %p678
      %s680 = ssub.s32 %s106, %s113
      %p681 = scmp.eq.s32.totalorder %s680, 0
      %s683 = sadd.s32 %s682, 1
      %s684 = scalar_select %p681, %s682, %s683
      %p687 = pneg %p681
      %p688 = scmp.eq.s32.totalorder %s98, 1
      %p689 = por %p687, %p688
      %p690 = scmp.ne.s32.totalorder %s682, %s685
      %p691 = scmp.eq.s32.totalorder %s98, 0
      %p692 = por %p690, %p691
      %p693 = scmp.ne.s32.totalorder %s682, %s685
      %p694 = scmp.eq.s32.totalorder %s103, 1
      %p695 = por %p693, %p694
      %p696 = scmp.ne.s32.totalorder %s685, %s686
      %p697 = scmp.eq.s32.totalorder %s103, 0
      %p698 = por %p696, %p697
      %p699 = scmp.ne.s32.totalorder %s685, %s686
      %p700 = scmp.eq.s32.totalorder %s104, 1
      %p701 = por %p699, %p700
      %p703 = scmp.ne.s32.totalorder %s686, %s702
      %p704 = scmp.eq.s32.totalorder %s104, 0
      %p705 = por %p703, %p704
      %s706 = ssub.s32 %s106, %s113
      %p707 = scmp.eq.s32.totalorder %s706, 0
      %s709 = sadd.s32 %s708, 1
      %s710 = scalar_select %p707, %s708, %s709
      %p713 = pneg %p707
      %p714 = scmp.eq.s32.totalorder %s98, 1
      %p715 = por %p713, %p714
      %p716 = scmp.ne.s32.totalorder %s708, %s711
      %p717 = scmp.eq.s32.totalorder %s98, 0
      %p718 = por %p716, %p717
      %p719 = scmp.ne.s32.totalorder %s708, %s711
      %p720 = scmp.eq.s32.totalorder %s103, 1
      %p721 = por %p719, %p720
      %p722 = scmp.ne.s32.totalorder %s711, %s712
      %p723 = scmp.eq.s32.totalorder %s103, 0
      %p724 = por %p722, %p723
      %p725 = scmp.ne.s32.totalorder %s711, %s712
      %p726 = scmp.eq.s32.totalorder %s104, 1
      %p727 = por %p725, %p726
      %p729 = scmp.ne.s32.totalorder %s712, %s728
      %p730 = scmp.eq.s32.totalorder %s104, 0
      %p731 = por %p729, %p730
      %s732 = ssub.s32 %s106, %s113
      %p733 = scmp.eq.s32.totalorder %s732, 0
      %s735 = sadd.s32 %s734, 1
      %s736 = scalar_select %p733, %s734, %s735
      %p739 = pneg %p733
      %p740 = scmp.eq.s32.totalorder %s98, 1
      %p741 = por %p739, %p740
      %p742 = scmp.ne.s32.totalorder %s734, %s737
      %p743 = scmp.eq.s32.totalorder %s98, 0
      %p744 = por %p742, %p743
      %p745 = scmp.ne.s32.totalorder %s734, %s737
      %p746 = scmp.eq.s32.totalorder %s103, 1
      %p747 = por %p745, %p746
      %p748 = scmp.ne.s32.totalorder %s737, %s738
      %p749 = scmp.eq.s32.totalorder %s103, 0
      %p750 = por %p748, %p749
      %p751 = scmp.ne.s32.totalorder %s737, %s738
      %p752 = scmp.eq.s32.totalorder %s104, 1
      %p753 = por %p751, %p752
      %p755 = scmp.ne.s32.totalorder %s738, %s754
      %p756 = scmp.eq.s32.totalorder %s104, 0
      %p757 = por %p755, %p756
      %s758 = ssub.s32 %s106, %s113
      %p759 = scmp.eq.s32.totalorder %s758, 0
      %s761 = sadd.s32 %s760, 1
      %s762 = scalar_select %p759, %s760, %s761
      %p765 = pneg %p759
      %p766 = scmp.eq.s32.totalorder %s98, 1
      %p767 = por %p765, %p766
      %p768 = scmp.ne.s32.totalorder %s760, %s763
      %p769 = scmp.eq.s32.totalorder %s98, 0
      %p770 = por %p768, %p769
      %p771 = scmp.ne.s32.totalorder %s760, %s763
      %p772 = scmp.eq.s32.totalorder %s103, 1
      %p773 = por %p771, %p772
      %p774 = scmp.ne.s32.totalorder %s763, %s764
      %p775 = scmp.eq.s32.totalorder %s103, 0
      %p776 = por %p774, %p775
      %p777 = scmp.ne.s32.totalorder %s763, %s764
      %p778 = scmp.eq.s32.totalorder %s104, 1
      %p779 = por %p777, %p778
      %p781 = scmp.ne.s32.totalorder %s764, %s780
      %p782 = scmp.eq.s32.totalorder %s104, 0
      %p783 = por %p781, %p782
      %s784 = ssub.s32 %s106, %s113
      %p785 = scmp.eq.s32.totalorder %s784, 0
      %s787 = sadd.s32 %s786, 1
      %s788 = scalar_select %p785, %s786, %s787
      %p791 = pneg %p785
      %p792 = scmp.eq.s32.totalorder %s98, 1
      %p793 = por %p791, %p792
      %p794 = scmp.ne.s32.totalorder %s786, %s789
      %p795 = scmp.eq.s32.totalorder %s98, 0
      %p796 = por %p794, %p795
      %p797 = scmp.ne.s32.totalorder %s786, %s789
      %p798 = scmp.eq.s32.totalorder %s103, 1
      %p799 = por %p797, %p798
      %p800 = scmp.ne.s32.totalorder %s789, %s790
      %p801 = scmp.eq.s32.totalorder %s103, 0
      %p802 = por %p800, %p801
      %p803 = scmp.ne.s32.totalorder %s789, %s790
      %p804 = scmp.eq.s32.totalorder %s104, 1
      %p805 = por %p803, %p804
      %p807 = scmp.ne.s32.totalorder %s790, %s806
      %p808 = scmp.eq.s32.totalorder %s104, 0
      %p809 = por %p807, %p808
      %s810 = ssub.s32 %s106, %s113
      %p811 = scmp.eq.s32.totalorder %s810, 0
      %s813 = sadd.s32 %s812, 1
      %s814 = scalar_select %p811, %s812, %s813
      %p817 = pneg %p811
      %p818 = scmp.eq.s32.totalorder %s98, 1
      %p819 = por %p817, %p818
      %p820 = scmp.ne.s32.totalorder %s812, %s815
      %p821 = scmp.eq.s32.totalorder %s98, 0
      %p822 = por %p820, %p821
      %p823 = scmp.ne.s32.totalorder %s812, %s815
      %p824 = scmp.eq.s32.totalorder %s103, 1
      %p825 = por %p823, %p824
      %p826 = scmp.ne.s32.totalorder %s815, %s816
      %p827 = scmp.eq.s32.totalorder %s103, 0
      %p828 = por %p826, %p827
      %p829 = scmp.ne.s32.totalorder %s815, %s816
      %p830 = scmp.eq.s32.totalorder %s104, 1
      %p831 = por %p829, %p830
      %p833 = scmp.ne.s32.totalorder %s816, %s832
      %p834 = scmp.eq.s32.totalorder %s104, 0
      %p835 = por %p833, %p834
      %s836 = ssub.s32 %s106, %s113
      %p837 = scmp.eq.s32.totalorder %s836, 0
      %s839 = sadd.s32 %s838, 1
      %s840 = scalar_select %p837, %s838, %s839
      %p843 = pneg %p837
      %p844 = scmp.eq.s32.totalorder %s98, 1
      %p845 = por %p843, %p844
      %p846 = scmp.ne.s32.totalorder %s838, %s841
      %p847 = scmp.eq.s32.totalorder %s98, 0
      %p848 = por %p846, %p847
      %p849 = scmp.ne.s32.totalorder %s838, %s841
      %p850 = scmp.eq.s32.totalorder %s103, 1
      %p851 = por %p849, %p850
      %p852 = scmp.ne.s32.totalorder %s841, %s842
      %p853 = scmp.eq.s32.totalorder %s103, 0
      %p854 = por %p852, %p853
      %p855 = scmp.ne.s32.totalorder %s841, %s842
      %p856 = scmp.eq.s32.totalorder %s104, 1
      %p857 = por %p855, %p856
      %p859 = scmp.ne.s32.totalorder %s842, %s858
      %p860 = scmp.eq.s32.totalorder %s104, 0
      %p861 = por %p859, %p860
      %s862 = ssub.s32 %s106, %s113
      %p863 = scmp.eq.s32.totalorder %s862, 0
      %s865 = sadd.s32 %s864, 1
      %s866 = scalar_select %p863, %s864, %s865
      %p869 = pneg %p863
      %p870 = scmp.eq.s32.totalorder %s98, 1
      %p871 = por %p869, %p870
      %p872 = scmp.ne.s32.totalorder %s864, %s867
      %p873 = scmp.eq.s32.totalorder %s98, 0
      %p874 = por %p872, %p873
      %p875 = scmp.ne.s32.totalorder %s864, %s867
      %p876 = scmp.eq.s32.totalorder %s103, 1
      %p877 = por %p875, %p876
      %p878 = scmp.ne.s32.totalorder %s867, %s868
      %p879 = scmp.eq.s32.totalorder %s103, 0
      %p880 = por %p878, %p879
      %p881 = scmp.ne.s32.totalorder %s867, %s868
      %p882 = scmp.eq.s32.totalorder %s104, 1
      %p883 = por %p881, %p882
      %p885 = scmp.ne.s32.totalorder %s868, %s884
      %p886 = scmp.eq.s32.totalorder %s104, 0
      %p887 = por %p885, %p886
      %s888 = ssub.s32 %s106, %s113
      %p889 = scmp.eq.s32.totalorder %s888, 0
      %s891 = sadd.s32 %s890, 1
      %s892 = scalar_select %p889, %s890, %s891
      %p895 = pneg %p889
      %p896 = scmp.eq.s32.totalorder %s98, 1
      %p897 = por %p895, %p896
      %p898 = scmp.ne.s32.totalorder %s890, %s893
      %p899 = scmp.eq.s32.totalorder %s98, 0
      %p900 = por %p898, %p899
      %p901 = scmp.ne.s32.totalorder %s890, %s893
      %p902 = scmp.eq.s32.totalorder %s103, 1
      %p903 = por %p901, %p902
      %p904 = scmp.ne.s32.totalorder %s893, %s894
      %p905 = scmp.eq.s32.totalorder %s103, 0
      %p906 = por %p904, %p905
      %p907 = scmp.ne.s32.totalorder %s893, %s894
      %p908 = scmp.eq.s32.totalorder %s104, 1
      %p909 = por %p907, %p908
      %p911 = scmp.ne.s32.totalorder %s894, %s910
      %p912 = scmp.eq.s32.totalorder %s104, 0
      %p913 = por %p911, %p912
      %s914 = ssub.s32 %s106, %s113
      %p915 = scmp.eq.s32.totalorder %s914, 0
      %s917 = sadd.s32 %s916, 1
      %s918 = scalar_select %p915, %s916, %s917
      %p921 = pneg %p915
      %p922 = scmp.eq.s32.totalorder %s98, 1
      %p923 = por %p921, %p922
      %p924 = scmp.ne.s32.totalorder %s916, %s919
      %p925 = scmp.eq.s32.totalorder %s98, 0
      %p926 = por %p924, %p925
      %p927 = scmp.ne.s32.totalorder %s916, %s919
      %p928 = scmp.eq.s32.totalorder %s103, 1
      %p929 = por %p927, %p928
      %p930 = scmp.ne.s32.totalorder %s919, %s920
      %p931 = scmp.eq.s32.totalorder %s103, 0
      %p932 = por %p930, %p931
      %p933 = scmp.ne.s32.totalorder %s919, %s920
      %p934 = scmp.eq.s32.totalorder %s104, 1
      %p935 = por %p933, %p934
      %p937 = scmp.ne.s32.totalorder %s920, %s936
      %p938 = scmp.eq.s32.totalorder %s104, 0
      %p939 = por %p937, %p938
      %s940 = ssub.s32 %s106, %s113
      %p941 = scmp.eq.s32.totalorder %s940, 0
      %s943 = sadd.s32 %s942, 1
      %s944 = scalar_select %p941, %s942, %s943
      %p947 = pneg %p941
      %p948 = scmp.eq.s32.totalorder %s98, 1
      %p949 = por %p947, %p948
      %p950 = scmp.ne.s32.totalorder %s942, %s945
      %p951 = scmp.eq.s32.totalorder %s98, 0
      %p952 = por %p950, %p951
      %p953 = scmp.ne.s32.totalorder %s942, %s945
      %p954 = scmp.eq.s32.totalorder %s103, 1
      %p955 = por %p953, %p954
      %p956 = scmp.ne.s32.totalorder %s945, %s946
      %p957 = scmp.eq.s32.totalorder %s103, 0
      %p958 = por %p956, %p957
      %p959 = scmp.ne.s32.totalorder %s945, %s946
      %p960 = scmp.eq.s32.totalorder %s104, 1
      %p961 = por %p959, %p960
      %p963 = scmp.ne.s32.totalorder %s946, %s962
      %p964 = scmp.eq.s32.totalorder %s104, 0
      %p965 = por %p963, %p964
      %s966 = ssub.s32 %s105, %s117
      %p967 = scmp.eq.s32.totalorder %s966, 0
      %s969 = sadd.s32 %s968, 1
      %s970 = scalar_select %p967, %s968, %s969
      %p973 = pneg %p967
      %p974 = scmp.eq.s32.totalorder %s98, 1
      %p975 = por %p973, %p974
      %p976 = scmp.ne.s32.totalorder %s968, %s971
      %p977 = scmp.eq.s32.totalorder %s98, 0
      %p978 = por %p976, %p977
      %p979 = scmp.ne.s32.totalorder %s968, %s971
      %p980 = scmp.eq.s32.totalorder %s103, 1
      %p981 = por %p979, %p980
      %p982 = scmp.ne.s32.totalorder %s971, %s972
      %p983 = scmp.eq.s32.totalorder %s103, 0
      %p984 = por %p982, %p983
      %p985 = scmp.ne.s32.totalorder %s971, %s972
      %p986 = scmp.eq.s32.totalorder %s104, 1
      %p987 = por %p985, %p986
      %p989 = scmp.ne.s32.totalorder %s972, %s988
      %p990 = scmp.eq.s32.totalorder %s104, 0
      %p991 = por %p989, %p990
      %p992 = scmp.le.s32.totalorder 1, %s98
      %p993 = scmp.lt.s32.totalorder %s98, 3
      %p994 = pnand %p992, %p993
      %p995 = pneg %p994
      // Predicated region
      $region9: #{tpu_custom_call.1} parent=5 // pred_check
        _
      $region10: #{tpu_custom_call.1} parent=5 // pred_check_branch
        %997 = sbr.rel (%p994) target = $region12
      $region11: #{tpu_custom_call.1} parent=5 // pred_region
        %s998 = ssub.s32 %s98, 1
        // Predicated region
        $region13: #{tpu_custom_call.1} parent=11 // pred_check
          %p999 = pneg %p136
        $region14: #{tpu_custom_call.1} parent=11 // pred_check_branch
          %1001 = sbr.rel (%p999) target = $region16
        $region15: #{tpu_custom_call.1} parent=11 // pred_region
          %s1002 = smul.u32 2, %s107
          %s1004 = ssub.s32 256, 256
          %1005 = vsyncadd [#allocation8], %s1004
          %s1006 = smul.addr %s1002, 128
          %s1007 = scalar_lea.hbm %s1, %s1006
          %s1008 = sshll.u32 [#allocation7], 4
          %s1009 = int_to_ptr.vmem [resolvable:$true] %s1008
          %1014 = dma.hbm_to_vmem [thread:$0]  %s1007, 256, %s1009, [#allocation8], 128, 128, 8
        $region16: #{tpu_custom_call.1} parent=11 // pred_fallthru
          _
        // Predicated region
        $region17: #{tpu_custom_call.1} parent=11 // pred_check
          %p1015 = pneg %p162
        $region18: #{tpu_custom_call.1} parent=11 // pred_check_branch
          %1017 = sbr.rel (%p1015) target = $region20
        $region19: #{tpu_custom_call.1} parent=11 // pred_region
          %s1018 = smul.u32 2, %s107
          %p1019 = scmp.lt.s32.totalorder %s1018, 1
          %s1020 = scalar_select %p1019, %s1018, 1
          %s1021 = smul.addr %s1020, 2
          %s1022 = smul.addr %s1021, 8
          %s1023 = scalar_lea.vmem %s3, %s1022
          %s1024 = smul.u32 2, %s107
        $region20: #{tpu_custom_call.1} parent=11 // pred_fallthru
          _
        // Predicated region
        $region21: #{tpu_custom_call.1} parent=11 // pred_check
          %p1025 = pneg %p188
        $region22: #{tpu_custom_call.1} parent=11 // pred_check_branch
          %1027 = sbr.rel (%p1025) target = $region24
        $region23: #{tpu_custom_call.1} parent=11 // pred_region
          %s1028 = smul.u32 2, %s107
          %p1029 = scmp.lt.s32.totalorder %s1028, 1
          %s1030 = scalar_select %p1029, %s1028, 1
          %s1031 = smul.addr %s1030, 8
          %s1032 = scalar_lea.vmem %s5, %s1031
          %s1033 = smul.u32 2, %s107
        $region24: #{tpu_custom_call.1} parent=11 // pred_fallthru
          _
        // Predicated region
        $region25: #{tpu_custom_call.1} parent=11 // pred_check
          %p1034 = pneg %p214
        $region26: #{tpu_custom_call.1} parent=11 // pred_check_branch
          %1036 = sbr.rel (%p1034) target = $region28
        $region27: #{tpu_custom_call.1} parent=11 // pred_region
          %s1037 = smul.u32 2, %s107
          %s1039 = ssub.s32 32, 32
          %1040 = vsyncadd [#allocation11], %s1039
          %s1041 = smul.addr %s1037, 16
          %s1042 = scalar_lea.hbm %s7, %s1041
          %s1043 = sshll.u32 [#allocation10], 4
          %s1044 = int_to_ptr.vmem [resolvable:$true] %s1043
          %1049 = dma.hbm_to_vmem [thread:$0]  %s1042, 32, %s1044, [#allocation11], 16, 16, 1
        $region28: #{tpu_custom_call.1} parent=11 // pred_fallthru
          _
        // Predicated region
        $region29: #{tpu_custom_call.1} parent=11 // pred_check
          %p1050 = pneg %p240
        $region30: #{tpu_custom_call.1} parent=11 // pred_check_branch
          %1052 = sbr.rel (%p1050) target = $region32
        $region31: #{tpu_custom_call.1} parent=11 // pred_region
          %s1053 = smul.u32 2, %s107
          %s1055 = ssub.s32 32, 32
          %1056 = vsyncadd [#allocation11], %s1055
          %s1057 = smul.addr %s1053, 16
          %s1058 = scalar_lea.hbm %s9, %s1057
          %s1059 = sshll.u32 [#allocation12], 4
          %s1060 = int_to_ptr.vmem [resolvable:$true] %s1059
          %1065 = dma.hbm_to_vmem [thread:$0]  %s1058, 32, %s1060, [#allocation11], 16, 16, 1
        $region32: #{tpu_custom_call.1} parent=11 // pred_fallthru
          _
        // Predicated region
        $region33: #{tpu_custom_call.1} parent=11 // pred_check
          %p1066 = pneg %p261
        $region34: #{tpu_custom_call.1} parent=11 // pred_check_branch
          %1068 = sbr.rel (%p1066) target = $region36
        $region35: #{tpu_custom_call.1} parent=11 // pred_region
          %s1070 = ssub.s32 16, 16
          %1071 = vsyncadd [#allocation14], %s1070
          %s1073 = sshll.u32 [#allocation13], 4
          %s1074 = int_to_ptr.vmem [resolvable:$true] %s1073
          %1076 = dma.hbm_to_vmem [thread:$0]  %s11, 16, %s1074, [#allocation14]
        $region36: #{tpu_custom_call.1} parent=11 // pred_fallthru
          _
        // Predicated region
        $region37: #{tpu_custom_call.1} parent=11 // pred_check
          %p1077 = pneg %p282
        $region38: #{tpu_custom_call.1} parent=11 // pred_check_branch
          %1079 = sbr.rel (%p1077) target = $region40
        $region39: #{tpu_custom_call.1} parent=11 // pred_region
          %s1081 = ssub.s32 16, 16
          %1082 = vsyncadd [#allocation14], %s1081
          %s1084 = sshll.u32 [#allocation15], 4
          %s1085 = int_to_ptr.vmem [resolvable:$true] %s1084
          %1087 = dma.hbm_to_vmem [thread:$0]  %s13, 16, %s1085, [#allocation14]
        $region40: #{tpu_custom_call.1} parent=11 // pred_fallthru
          _
      $region12: #{tpu_custom_call.1} parent=5 // pred_fallthru
        _
      %p1088 = scmp.lt.s32.totalorder %s98, 2
      // Predicated region
      $region41: #{tpu_custom_call.1} parent=5 // pred_check
        %p1089 = pneg %p1088
      $region42: #{tpu_custom_call.1} parent=5 // pred_check_branch
        %1091 = sbr.rel (%p1089) target = $region44
      $region43: #{tpu_custom_call.1} parent=5 // pred_region
        // Predicated region
        $region45: #{tpu_custom_call.1} parent=43 // pred_check
          %p1092 = pneg %p302
        $region46: #{tpu_custom_call.1} parent=43 // pred_check_branch
          %1094 = sbr.rel (%p1092) target = $region48
        $region47: #{tpu_custom_call.1} parent=43 // pred_region
          %p1095 = scmp.lt.s32.totalorder %s106, 1
          %s1096 = scalar_select %p1095, %s106, 1
          %s1097 = smul.addr %s1096, 4
          %s1098 = smul.addr %s1097, 4
          %s1099 = scalar_lea.vmem %s15, %s1098
        $region48: #{tpu_custom_call.1} parent=43 // pred_fallthru
          _
        // Predicated region
        $region49: #{tpu_custom_call.1} parent=43 // pred_check
          %p1100 = pneg %p328
        $region50: #{tpu_custom_call.1} parent=43 // pred_check_branch
          %1102 = sbr.rel (%p1100) target = $region52
        $region51: #{tpu_custom_call.1} parent=43 // pred_region
          %p1103 = scmp.lt.s32.totalorder %s106, 1
          %s1104 = scalar_select %p1103, %s106, 1
          %s1105 = smul.addr %s1104, 4
          %s1106 = smul.addr %s1105, 4
          %s1107 = scalar_lea.vmem %s17, %s1106
        $region52: #{tpu_custom_call.1} parent=43 // pred_fallthru
          _
        // Predicated region
        $region53: #{tpu_custom_call.1} parent=43 // pred_check
          %p1108 = pneg %p354
        $region54: #{tpu_custom_call.1} parent=43 // pred_check_branch
          %1110 = sbr.rel (%p1108) target = $region56
        $region55: #{tpu_custom_call.1} parent=43 // pred_region
          %s1111 = sand.u32 %s98, 1
          %s1112 = scalar_lea.sflag [#allocation17], %s1111
          %s1113 = sand.u32 %s344, 1
          %s1114 = smul.addr %s1113, 16
          %s1115 = scalar_lea.vmem [#allocation16], %s1114
          %s1117 = ssub.s32 256, 256
          %1118 = vsyncadd %s1112, %s1117
          %s1119 = smul.addr %s106, 4
          %s1120 = smul.addr %s1119, 64
          %s1121 = scalar_lea.hbm %s19, %s1120
          %s1122 = sshll.u32 %s1115, 4
          %s1123 = int_to_ptr.vmem [resolvable:$true] %s1122
          %1128 = dma.hbm_to_vmem [thread:$0]  %s1121, 256, %s1123, %s1112, 64, 64, 4
        $region56: #{tpu_custom_call.1} parent=43 // pred_fallthru
          _
        // Predicated region
        $region57: #{tpu_custom_call.1} parent=43 // pred_check
          %p1129 = pneg %p380
        $region58: #{tpu_custom_call.1} parent=43 // pred_check_branch
          %1131 = sbr.rel (%p1129) target = $region60
        $region59: #{tpu_custom_call.1} parent=43 // pred_region
          %s1132 = sand.u32 %s98, 1
          %s1133 = scalar_lea.sflag [#allocation17], %s1132
          %s1134 = sand.u32 %s370, 1
          %s1135 = scalar_lea.vmem [#allocation18], %s1134
          %s1137 = ssub.s32 16, 16
          %1138 = vsyncadd %s1133, %s1137
          %s1139 = smul.addr %s106, 16
          %s1140 = scalar_lea.hbm %s21, %s1139
          %s1142 = sshll.u32 %s1135, 4
          %s1143 = int_to_ptr.vmem [resolvable:$true] %s1142
          %1145 = dma.hbm_to_vmem [thread:$0]  %s1140, 16, %s1143, %s1133
        $region60: #{tpu_custom_call.1} parent=43 // pred_fallthru
          _
        // Predicated region
        $region61: #{tpu_custom_call.1} parent=43 // pred_check
          %p1146 = pneg %p406
        $region62: #{tpu_custom_call.1} parent=43 // pred_check_branch
          %1148 = sbr.rel (%p1146) target = $region64
        $region63: #{tpu_custom_call.1} parent=43 // pred_region
          %s1149 = sand.u32 %s98, 1
          %s1150 = scalar_lea.sflag [#allocation20], %s1149
          %s1151 = sand.u32 %s396, 1
          %s1152 = scalar_lea.vmem [#allocation19], %s1151
          %s1154 = ssub.s32 16, 16
          %1155 = vsyncadd %s1150, %s1154
          %s1156 = smul.addr %s106, 16
          %s1157 = scalar_lea.hbm %s23, %s1156
          %s1159 = sshll.u32 %s1152, 4
          %s1160 = int_to_ptr.vmem [resolvable:$true] %s1159
          %1162 = dma.hbm_to_vmem [thread:$0]  %s1157, 16, %s1160, %s1150
        $region64: #{tpu_custom_call.1} parent=43 // pred_fallthru
          _
        // Predicated region
        $region65: #{tpu_custom_call.1} parent=43 // pred_check
          %p1163 = pneg %p432
        $region66: #{tpu_custom_call.1} parent=43 // pred_check_branch
          %1165 = sbr.rel (%p1163) target = $region68
        $region67: #{tpu_custom_call.1} parent=43 // pred_region
          %s1166 = sand.u32 %s98, 1
          %s1167 = scalar_lea.sflag [#allocation20], %s1166
          %s1168 = sand.u32 %s422, 1
          %s1169 = scalar_lea.vmem [#allocation21], %s1168
          %s1171 = ssub.s32 16, 16
          %1172 = vsyncadd %s1167, %s1171
          %s1173 = smul.addr %s106, 16
          %s1174 = scalar_lea.hbm %s25, %s1173
          %s1176 = sshll.u32 %s1169, 4
          %s1177 = int_to_ptr.vmem [resolvable:$true] %s1176
          %1179 = dma.hbm_to_vmem [thread:$0]  %s1174, 16, %s1177, %s1167
        $region68: #{tpu_custom_call.1} parent=43 // pred_fallthru
          _
        // Predicated region
        $region69: #{tpu_custom_call.1} parent=43 // pred_check
          %p1180 = pneg %p458
        $region70: #{tpu_custom_call.1} parent=43 // pred_check_branch
          %1182 = sbr.rel (%p1180) target = $region72
        $region71: #{tpu_custom_call.1} parent=43 // pred_region
          %p1183 = scmp.lt.s32.totalorder %s106, 1
          %s1184 = scalar_select %p1183, %s106, 1
          %s1185 = smul.addr %s1184, 4
          %s1186 = smul.addr %s1185, 4
          %s1187 = scalar_lea.vmem %s27, %s1186
        $region72: #{tpu_custom_call.1} parent=43 // pred_fallthru
          _
        // Predicated region
        $region73: #{tpu_custom_call.1} parent=43 // pred_check
          %p1188 = pneg %p484
        $region74: #{tpu_custom_call.1} parent=43 // pred_check_branch
          %1190 = sbr.rel (%p1188) target = $region76
        $region75: #{tpu_custom_call.1} parent=43 // pred_region
          %s1191 = sand.u32 %s98, 1
          %s1192 = scalar_lea.sflag [#allocation23], %s1191
          %s1193 = sand.u32 %s474, 1
          %s1194 = scalar_lea.vmem [#allocation22], %s1193
          %s1196 = ssub.s32 16, 16
          %1197 = vsyncadd %s1192, %s1196
          %s1198 = smul.addr %s106, 16
          %s1199 = scalar_lea.hbm %s29, %s1198
          %s1201 = sshll.u32 %s1194, 4
          %s1202 = int_to_ptr.vmem [resolvable:$true] %s1201
          %1204 = dma.hbm_to_vmem [thread:$0]  %s1199, 16, %s1202, %s1192
        $region76: #{tpu_custom_call.1} parent=43 // pred_fallthru
          _
        // Predicated region
        $region77: #{tpu_custom_call.1} parent=43 // pred_check
          %p1205 = pneg %p510
        $region78: #{tpu_custom_call.1} parent=43 // pred_check_branch
          %1207 = sbr.rel (%p1205) target = $region80
        $region79: #{tpu_custom_call.1} parent=43 // pred_region
          %s1208 = sand.u32 %s98, 1
          %s1209 = scalar_lea.sflag [#allocation23], %s1208
          %s1210 = sand.u32 %s500, 1
          %s1211 = scalar_lea.vmem [#allocation24], %s1210
          %s1213 = ssub.s32 16, 16
          %1214 = vsyncadd %s1209, %s1213
          %s1215 = smul.addr %s106, 16
          %s1216 = scalar_lea.hbm %s31, %s1215
          %s1218 = sshll.u32 %s1211, 4
          %s1219 = int_to_ptr.vmem [resolvable:$true] %s1218
          %1221 = dma.hbm_to_vmem [thread:$0]  %s1216, 16, %s1219, %s1209
        $region80: #{tpu_custom_call.1} parent=43 // pred_fallthru
          _
        // Predicated region
        $region81: #{tpu_custom_call.1} parent=43 // pred_check
          %p1222 = pneg %p536
        $region82: #{tpu_custom_call.1} parent=43 // pred_check_branch
          %1224 = sbr.rel (%p1222) target = $region84
        $region83: #{tpu_custom_call.1} parent=43 // pred_region
          %s1225 = sand.u32 %s98, 1
          %s1226 = scalar_lea.sflag [#allocation26], %s1225
          %s1227 = sand.u32 %s526, 1
          %s1228 = scalar_lea.vmem [#allocation25], %s1227
          %s1230 = ssub.s32 16, 16
          %1231 = vsyncadd %s1226, %s1230
          %s1232 = smul.addr %s106, 16
          %s1233 = scalar_lea.hbm %s33, %s1232
          %s1235 = sshll.u32 %s1228, 4
          %s1236 = int_to_ptr.vmem [resolvable:$true] %s1235
          %1238 = dma.hbm_to_vmem [thread:$0]  %s1233, 16, %s1236, %s1226
        $region84: #{tpu_custom_call.1} parent=43 // pred_fallthru
          _
        // Predicated region
        $region85: #{tpu_custom_call.1} parent=43 // pred_check
          %p1239 = pneg %p562
        $region86: #{tpu_custom_call.1} parent=43 // pred_check_branch
          %1241 = sbr.rel (%p1239) target = $region88
        $region87: #{tpu_custom_call.1} parent=43 // pred_region
          %s1242 = sand.u32 %s98, 1
          %s1243 = scalar_lea.sflag [#allocation26], %s1242
          %s1244 = sand.u32 %s552, 1
          %s1245 = smul.addr %s1244, 16
          %s1246 = scalar_lea.vmem [#allocation27], %s1245
          %s1248 = ssub.s32 256, 256
          %1249 = vsyncadd %s1243, %s1248
          %s1250 = smul.addr %s106, 4
          %s1251 = smul.addr %s1250, 64
          %s1252 = scalar_lea.hbm %s35, %s1251
          %s1253 = sshll.u32 %s1246, 4
          %s1254 = int_to_ptr.vmem [resolvable:$true] %s1253
          %1259 = dma.hbm_to_vmem [thread:$0]  %s1252, 256, %s1254, %s1243, 64, 64, 4
        $region88: #{tpu_custom_call.1} parent=43 // pred_fallthru
          _
        // Predicated region
        $region89: #{tpu_custom_call.1} parent=43 // pred_check
          %p1260 = pneg %p588
        $region90: #{tpu_custom_call.1} parent=43 // pred_check_branch
          %1262 = sbr.rel (%p1260) target = $region92
        $region91: #{tpu_custom_call.1} parent=43 // pred_region
          %s1263 = sand.u32 %s98, 1
          %s1264 = scalar_lea.sflag [#allocation29], %s1263
          %s1265 = sand.u32 %s578, 1
          %s1266 = smul.addr %s1265, 16
          %s1267 = scalar_lea.vmem [#allocation28], %s1266
          %s1269 = ssub.s32 256, 256
          %1270 = vsyncadd %s1264, %s1269
          %s1271 = smul.addr %s106, 4
          %s1272 = smul.addr %s1271, 64
          %s1273 = scalar_lea.hbm %s37, %s1272
          %s1274 = sshll.u32 %s1267, 4
          %s1275 = int_to_ptr.vmem [resolvable:$true] %s1274
          %1280 = dma.hbm_to_vmem [thread:$0]  %s1273, 256, %s1275, %s1264, 64, 64, 4
        $region92: #{tpu_custom_call.1} parent=43 // pred_fallthru
          _
        // Predicated region
        $region93: #{tpu_custom_call.1} parent=43 // pred_check
          %p1281 = pneg %p614
        $region94: #{tpu_custom_call.1} parent=43 // pred_check_branch
          %1283 = sbr.rel (%p1281) target = $region96
        $region95: #{tpu_custom_call.1} parent=43 // pred_region
          %s1284 = sand.u32 %s98, 1
          %s1285 = scalar_lea.sflag [#allocation29], %s1284
          %s1286 = sand.u32 %s604, 1
          %s1287 = smul.addr %s1286, 16
          %s1288 = scalar_lea.vmem [#allocation30], %s1287
          %s1290 = ssub.s32 256, 256
          %1291 = vsyncadd %s1285, %s1290
          %s1292 = smul.addr %s106, 4
          %s1293 = smul.addr %s1292, 64
          %s1294 = scalar_lea.hbm %s39, %s1293
          %s1295 = sshll.u32 %s1288, 4
          %s1296 = int_to_ptr.vmem [resolvable:$true] %s1295
          %1301 = dma.hbm_to_vmem [thread:$0]  %s1294, 256, %s1296, %s1285, 64, 64, 4
        $region96: #{tpu_custom_call.1} parent=43 // pred_fallthru
          _
        // Predicated region
        $region97: #{tpu_custom_call.1} parent=43 // pred_check
          %p1302 = pneg %p640
        $region98: #{tpu_custom_call.1} parent=43 // pred_check_branch
          %1304 = sbr.rel (%p1302) target = $region100
        $region99: #{tpu_custom_call.1} parent=43 // pred_region
          %s1305 = sand.u32 %s98, 1
          %s1306 = scalar_lea.sflag [#allocation32], %s1305
          %s1307 = sand.u32 %s630, 1
          %s1308 = scalar_lea.vmem [#allocation31], %s1307
          %s1310 = ssub.s32 16, 16
          %1311 = vsyncadd %s1306, %s1310
          %s1312 = smul.addr %s106, 16
          %s1313 = scalar_lea.hbm %s41, %s1312
          %s1315 = sshll.u32 %s1308, 4
          %s1316 = int_to_ptr.vmem [resolvable:$true] %s1315
          %1318 = dma.hbm_to_vmem [thread:$0]  %s1313, 16, %s1316, %s1306
        $region100: #{tpu_custom_call.1} parent=43 // pred_fallthru
          _
        // Predicated region
        $region101: #{tpu_custom_call.1} parent=43 // pred_check
          %p1319 = pneg %p666
        $region102: #{tpu_custom_call.1} parent=43 // pred_check_branch
          %1321 = sbr.rel (%p1319) target = $region104
        $region103: #{tpu_custom_call.1} parent=43 // pred_region
          %s1322 = sand.u32 %s98, 1
          %s1323 = scalar_lea.sflag [#allocation32], %s1322
          %s1324 = sand.u32 %s656, 1
          %s1325 = scalar_lea.vmem [#allocation33], %s1324
          %s1327 = ssub.s32 16, 16
          %1328 = vsyncadd %s1323, %s1327
          %s1329 = smul.addr %s106, 16
          %s1330 = scalar_lea.hbm %s43, %s1329
          %s1332 = sshll.u32 %s1325, 4
          %s1333 = int_to_ptr.vmem [resolvable:$true] %s1332
          %1335 = dma.hbm_to_vmem [thread:$0]  %s1330, 16, %s1333, %s1323
        $region104: #{tpu_custom_call.1} parent=43 // pred_fallthru
          _
        // Predicated region
        $region105: #{tpu_custom_call.1} parent=43 // pred_check
          %p1336 = pneg %p692
        $region106: #{tpu_custom_call.1} parent=43 // pred_check_branch
          %1338 = sbr.rel (%p1336) target = $region108
        $region107: #{tpu_custom_call.1} parent=43 // pred_region
          %p1339 = scmp.lt.s32.totalorder %s106, 1
          %s1340 = scalar_select %p1339, %s106, 1
          %s1341 = scalar_lea.vmem %s45, %s1340
        $region108: #{tpu_custom_call.1} parent=43 // pred_fallthru
          _
        // Predicated region
        $region109: #{tpu_custom_call.1} parent=43 // pred_check
          %p1342 = pneg %p718
        $region110: #{tpu_custom_call.1} parent=43 // pred_check_branch
          %1344 = sbr.rel (%p1342) target = $region112
        $region111: #{tpu_custom_call.1} parent=43 // pred_region
          %p1345 = scmp.lt.s32.totalorder %s106, 1
          %s1346 = scalar_select %p1345, %s106, 1
          %s1347 = smul.addr %s1346, 4
          %s1348 = smul.addr %s1347, 4
          %s1349 = scalar_lea.vmem %s47, %s1348
        $region112: #{tpu_custom_call.1} parent=43 // pred_fallthru
          _
        // Predicated region
        $region113: #{tpu_custom_call.1} parent=43 // pred_check
          %p1350 = pneg %p744
        $region114: #{tpu_custom_call.1} parent=43 // pred_check_branch
          %1352 = sbr.rel (%p1350) target = $region116
        $region115: #{tpu_custom_call.1} parent=43 // pred_region
          %p1353 = scmp.lt.s32.totalorder %s106, 1
          %s1354 = scalar_select %p1353, %s106, 1
          %s1355 = scalar_lea.vmem %s49, %s1354
        $region116: #{tpu_custom_call.1} parent=43 // pred_fallthru
          _
        // Predicated region
        $region117: #{tpu_custom_call.1} parent=43 // pred_check
          %p1356 = pneg %p770
        $region118: #{tpu_custom_call.1} parent=43 // pred_check_branch
          %1358 = sbr.rel (%p1356) target = $region120
        $region119: #{tpu_custom_call.1} parent=43 // pred_region
          %p1359 = scmp.lt.s32.totalorder %s106, 1
          %s1360 = scalar_select %p1359, %s106, 1
          %s1361 = scalar_lea.vmem %s51, %s1360
        $region120: #{tpu_custom_call.1} parent=43 // pred_fallthru
          _
        // Predicated region
        $region121: #{tpu_custom_call.1} parent=43 // pred_check
          %p1362 = pneg %p796
        $region122: #{tpu_custom_call.1} parent=43 // pred_check_branch
          %1364 = sbr.rel (%p1362) target = $region124
        $region123: #{tpu_custom_call.1} parent=43 // pred_region
          %p1365 = scmp.lt.s32.totalorder %s106, 1
          %s1366 = scalar_select %p1365, %s106, 1
          %s1367 = scalar_lea.vmem %s53, %s1366
        $region124: #{tpu_custom_call.1} parent=43 // pred_fallthru
          _
        // Predicated region
        $region125: #{tpu_custom_call.1} parent=43 // pred_check
          %p1368 = pneg %p822
        $region126: #{tpu_custom_call.1} parent=43 // pred_check_branch
          %1370 = sbr.rel (%p1368) target = $region128
        $region127: #{tpu_custom_call.1} parent=43 // pred_region
          %s1371 = sand.u32 %s812, 1
          %s1372 = scalar_lea.sflag [#allocation35], %s1371
          %s1373 = sand.u32 %s812, 1
          %s1374 = smul.addr %s1373, 16
          %s1375 = scalar_lea.vmem [#allocation34], %s1374
          %s1377 = ssub.s32 256, 256
          %1378 = vsyncadd %s1372, %s1377
          %s1379 = smul.addr %s106, 4
          %s1380 = smul.addr %s1379, 64
          %s1381 = scalar_lea.hbm %s55, %s1380
          %s1382 = sshll.u32 %s1375, 4
          %s1383 = int_to_ptr.vmem [resolvable:$true] %s1382
          %1388 = dma.hbm_to_vmem [thread:$0]  %s1381, 256, %s1383, %s1372, 64, 64, 4
        $region128: #{tpu_custom_call.1} parent=43 // pred_fallthru
          _
        // Predicated region
        $region129: #{tpu_custom_call.1} parent=43 // pred_check
          %p1389 = pneg %p848
        $region130: #{tpu_custom_call.1} parent=43 // pred_check_branch
          %1391 = sbr.rel (%p1389) target = $region132
        $region131: #{tpu_custom_call.1} parent=43 // pred_region
          %p1392 = scmp.lt.s32.totalorder %s106, 1
          %s1393 = scalar_select %p1392, %s106, 1
          %s1394 = scalar_lea.vmem %s57, %s1393
        $region132: #{tpu_custom_call.1} parent=43 // pred_fallthru
          _
        // Predicated region
        $region133: #{tpu_custom_call.1} parent=43 // pred_check
          %p1395 = pneg %p874
        $region134: #{tpu_custom_call.1} parent=43 // pred_check_branch
          %1397 = sbr.rel (%p1395) target = $region136
        $region135: #{tpu_custom_call.1} parent=43 // pred_region
          %p1398 = scmp.lt.s32.totalorder %s106, 1
          %s1399 = scalar_select %p1398, %s106, 1
          %s1400 = smul.addr %s1399, 8
          %s1401 = smul.addr %s1400, 4
          %s1402 = scalar_lea.vmem %s59, %s1401
        $region136: #{tpu_custom_call.1} parent=43 // pred_fallthru
          _
        // Predicated region
        $region137: #{tpu_custom_call.1} parent=43 // pred_check
          %p1403 = pneg %p900
        $region138: #{tpu_custom_call.1} parent=43 // pred_check_branch
          %1405 = sbr.rel (%p1403) target = $region140
        $region139: #{tpu_custom_call.1} parent=43 // pred_region
          %p1406 = scmp.lt.s32.totalorder %s106, 1
          %s1407 = scalar_select %p1406, %s106, 1
          %s1408 = scalar_lea.vmem %s61, %s1407
        $region140: #{tpu_custom_call.1} parent=43 // pred_fallthru
          _
        // Predicated region
        $region141: #{tpu_custom_call.1} parent=43 // pred_check
          %p1409 = pneg %p926
        $region142: #{tpu_custom_call.1} parent=43 // pred_check_branch
          %1411 = sbr.rel (%p1409) target = $region144
        $region143: #{tpu_custom_call.1} parent=43 // pred_region
          %p1412 = scmp.lt.s32.totalorder %s106, 1
          %s1413 = scalar_select %p1412, %s106, 1
          %s1414 = scalar_lea.vmem %s63, %s1413
        $region144: #{tpu_custom_call.1} parent=43 // pred_fallthru
          _
        // Predicated region
        $region145: #{tpu_custom_call.1} parent=43 // pred_check
          %p1415 = pneg %p952
        $region146: #{tpu_custom_call.1} parent=43 // pred_check_branch
          %1417 = sbr.rel (%p1415) target = $region148
        $region147: #{tpu_custom_call.1} parent=43 // pred_region
          %p1418 = scmp.lt.s32.totalorder %s106, 1
          %s1419 = scalar_select %p1418, %s106, 1
          %s1420 = scalar_lea.vmem %s65, %s1419
        $region148: #{tpu_custom_call.1} parent=43 // pred_fallthru
          _
      $region44: #{tpu_custom_call.1} parent=5 // pred_fallthru
        _
      %p1421 = scmp.le.s32.totalorder 1, %s98
      %p1422 = scmp.lt.s32.totalorder %s98, 3
      %p1423 = pnand %p1421, %p1422
      %p1424 = pneg %p1423
      // Predicated region
      $region149: #{tpu_custom_call.1} parent=5 // pred_check
        _
      $region150: #{tpu_custom_call.1} parent=5 // pred_check_branch
        %1426 = sbr.rel (%p1423) target = $region152
      $region151: #{tpu_custom_call.1} parent=5 // pred_region
        %s1427 = ssub.s32 %s98, 1
        // Predicated region
        $region153: #{tpu_custom_call.1} parent=151 // pred_check
          %p1428 = pneg %p136
        $region154: #{tpu_custom_call.1} parent=151 // pred_check_branch
          %1430 = sbr.rel (%p1428) target = $region156
        $region155: #{tpu_custom_call.1} parent=151 // pred_region
          %1431 = dma.done [#allocation8], 256
        $region156: #{tpu_custom_call.1} parent=151 // pred_fallthru
          _
        // Predicated region
        $region157: #{tpu_custom_call.1} parent=151 // pred_check
          %p1432 = pneg %p214
        $region158: #{tpu_custom_call.1} parent=151 // pred_check_branch
          %1434 = sbr.rel (%p1432) target = $region160
        $region159: #{tpu_custom_call.1} parent=151 // pred_region
          %1435 = dma.done [#allocation11], 32
        $region160: #{tpu_custom_call.1} parent=151 // pred_fallthru
          _
        // Predicated region
        $region161: #{tpu_custom_call.1} parent=151 // pred_check
          %p1436 = pneg %p240
        $region162: #{tpu_custom_call.1} parent=151 // pred_check_branch
          %1438 = sbr.rel (%p1436) target = $region164
        $region163: #{tpu_custom_call.1} parent=151 // pred_region
          %1439 = dma.done [#allocation11], 32
        $region164: #{tpu_custom_call.1} parent=151 // pred_fallthru
          _
        // Predicated region
        $region165: #{tpu_custom_call.1} parent=151 // pred_check
          %p1440 = pneg %p261
        $region166: #{tpu_custom_call.1} parent=151 // pred_check_branch
          %1442 = sbr.rel (%p1440) target = $region168
        $region167: #{tpu_custom_call.1} parent=151 // pred_region
          %1443 = dma.done [#allocation14], 16
        $region168: #{tpu_custom_call.1} parent=151 // pred_fallthru
          _
        // Predicated region
        $region169: #{tpu_custom_call.1} parent=151 // pred_check
          %p1444 = pneg %p282
        $region170: #{tpu_custom_call.1} parent=151 // pred_check_branch
          %1446 = sbr.rel (%p1444) target = $region172
        $region171: #{tpu_custom_call.1} parent=151 // pred_region
          %1447 = dma.done [#allocation14], 16
        $region172: #{tpu_custom_call.1} parent=151 // pred_fallthru
          _
        %s1448 = sand.u32 %s103, 1
        %s1449 = scalar_lea.sflag [#allocation17], %s1448
        %s1450 = sand.u32 %s347, 1
        %s1451 = smul.addr %s1450, 16
        %s1452 = scalar_lea.vmem [#allocation16], %s1451
        // Predicated region
        $region173: #{tpu_custom_call.1} parent=151 // pred_check
          %p1453 = pneg %p360
        $region174: #{tpu_custom_call.1} parent=151 // pred_check_branch
          %1455 = sbr.rel (%p1453) target = $region176
        $region175: #{tpu_custom_call.1} parent=151 // pred_region
          %1456 = dma.done %s1449, 256
        $region176: #{tpu_custom_call.1} parent=151 // pred_fallthru
          _
        %s1457 = sand.u32 %s103, 1
        %s1458 = scalar_lea.sflag [#allocation17], %s1457
        %s1459 = sand.u32 %s373, 1
        %s1460 = scalar_lea.vmem [#allocation18], %s1459
        // Predicated region
        $region177: #{tpu_custom_call.1} parent=151 // pred_check
          %p1461 = pneg %p386
        $region178: #{tpu_custom_call.1} parent=151 // pred_check_branch
          %1463 = sbr.rel (%p1461) target = $region180
        $region179: #{tpu_custom_call.1} parent=151 // pred_region
          %1464 = dma.done %s1458, 16
        $region180: #{tpu_custom_call.1} parent=151 // pred_fallthru
          _
        %s1465 = sand.u32 %s103, 1
        %s1466 = scalar_lea.sflag [#allocation20], %s1465
        %s1467 = sand.u32 %s399, 1
        %s1468 = scalar_lea.vmem [#allocation19], %s1467
        // Predicated region
        $region181: #{tpu_custom_call.1} parent=151 // pred_check
          %p1469 = pneg %p412
        $region182: #{tpu_custom_call.1} parent=151 // pred_check_branch
          %1471 = sbr.rel (%p1469) target = $region184
        $region183: #{tpu_custom_call.1} parent=151 // pred_region
          %1472 = dma.done %s1466, 16
        $region184: #{tpu_custom_call.1} parent=151 // pred_fallthru
          _
        %s1473 = sand.u32 %s103, 1
        %s1474 = scalar_lea.sflag [#allocation20], %s1473
        %s1475 = sand.u32 %s425, 1
        %s1476 = scalar_lea.vmem [#allocation21], %s1475
        // Predicated region
        $region185: #{tpu_custom_call.1} parent=151 // pred_check
          %p1477 = pneg %p438
        $region186: #{tpu_custom_call.1} parent=151 // pred_check_branch
          %1479 = sbr.rel (%p1477) target = $region188
        $region187: #{tpu_custom_call.1} parent=151 // pred_region
          %1480 = dma.done %s1474, 16
        $region188: #{tpu_custom_call.1} parent=151 // pred_fallthru
          _
        %s1481 = sand.u32 %s103, 1
        %s1482 = scalar_lea.sflag [#allocation23], %s1481
        %s1483 = sand.u32 %s477, 1
        %s1484 = scalar_lea.vmem [#allocation22], %s1483
        // Predicated region
        $region189: #{tpu_custom_call.1} parent=151 // pred_check
          %p1485 = pneg %p490
        $region190: #{tpu_custom_call.1} parent=151 // pred_check_branch
          %1487 = sbr.rel (%p1485) target = $region192
        $region191: #{tpu_custom_call.1} parent=151 // pred_region
          %1488 = dma.done %s1482, 16
        $region192: #{tpu_custom_call.1} parent=151 // pred_fallthru
          _
        %s1489 = sand.u32 %s103, 1
        %s1490 = scalar_lea.sflag [#allocation23], %s1489
        %s1491 = sand.u32 %s503, 1
        %s1492 = scalar_lea.vmem [#allocation24], %s1491
        // Predicated region
        $region193: #{tpu_custom_call.1} parent=151 // pred_check
          %p1493 = pneg %p516
        $region194: #{tpu_custom_call.1} parent=151 // pred_check_branch
          %1495 = sbr.rel (%p1493) target = $region196
        $region195: #{tpu_custom_call.1} parent=151 // pred_region
          %1496 = dma.done %s1490, 16
        $region196: #{tpu_custom_call.1} parent=151 // pred_fallthru
          _
        %s1497 = sand.u32 %s103, 1
        %s1498 = scalar_lea.sflag [#allocation26], %s1497
        %s1499 = sand.u32 %s529, 1
        %s1500 = scalar_lea.vmem [#allocation25], %s1499
        // Predicated region
        $region197: #{tpu_custom_call.1} parent=151 // pred_check
          %p1501 = pneg %p542
        $region198: #{tpu_custom_call.1} parent=151 // pred_check_branch
          %1503 = sbr.rel (%p1501) target = $region200
        $region199: #{tpu_custom_call.1} parent=151 // pred_region
          %1504 = dma.done %s1498, 16
        $region200: #{tpu_custom_call.1} parent=151 // pred_fallthru
          _
        %s1505 = sand.u32 %s103, 1
        %s1506 = scalar_lea.sflag [#allocation26], %s1505
        %s1507 = sand.u32 %s555, 1
        %s1508 = smul.addr %s1507, 16
        %s1509 = scalar_lea.vmem [#allocation27], %s1508
        // Predicated region
        $region201: #{tpu_custom_call.1} parent=151 // pred_check
          %p1510 = pneg %p568
        $region202: #{tpu_custom_call.1} parent=151 // pred_check_branch
          %1512 = sbr.rel (%p1510) target = $region204
        $region203: #{tpu_custom_call.1} parent=151 // pred_region
          %1513 = dma.done %s1506, 256
        $region204: #{tpu_custom_call.1} parent=151 // pred_fallthru
          _
        %s1514 = sand.u32 %s103, 1
        %s1515 = scalar_lea.sflag [#allocation29], %s1514
        %s1516 = sand.u32 %s581, 1
        %s1517 = smul.addr %s1516, 16
        %s1518 = scalar_lea.vmem [#allocation28], %s1517
        // Predicated region
        $region205: #{tpu_custom_call.1} parent=151 // pred_check
          %p1519 = pneg %p594
        $region206: #{tpu_custom_call.1} parent=151 // pred_check_branch
          %1521 = sbr.rel (%p1519) target = $region208
        $region207: #{tpu_custom_call.1} parent=151 // pred_region
          %1522 = dma.done %s1515, 256
        $region208: #{tpu_custom_call.1} parent=151 // pred_fallthru
          _
        %s1523 = sand.u32 %s103, 1
        %s1524 = scalar_lea.sflag [#allocation29], %s1523
        %s1525 = sand.u32 %s607, 1
        %s1526 = smul.addr %s1525, 16
        %s1527 = scalar_lea.vmem [#allocation30], %s1526
        // Predicated region
        $region209: #{tpu_custom_call.1} parent=151 // pred_check
          %p1528 = pneg %p620
        $region210: #{tpu_custom_call.1} parent=151 // pred_check_branch
          %1530 = sbr.rel (%p1528) target = $region212
        $region211: #{tpu_custom_call.1} parent=151 // pred_region
          %1531 = dma.done %s1524, 256
        $region212: #{tpu_custom_call.1} parent=151 // pred_fallthru
          _
        %s1532 = sand.u32 %s103, 1
        %s1533 = scalar_lea.sflag [#allocation32], %s1532
        %s1534 = sand.u32 %s633, 1
        %s1535 = scalar_lea.vmem [#allocation31], %s1534
        // Predicated region
        $region213: #{tpu_custom_call.1} parent=151 // pred_check
          %p1536 = pneg %p646
        $region214: #{tpu_custom_call.1} parent=151 // pred_check_branch
          %1538 = sbr.rel (%p1536) target = $region216
        $region215: #{tpu_custom_call.1} parent=151 // pred_region
          %1539 = dma.done %s1533, 16
        $region216: #{tpu_custom_call.1} parent=151 // pred_fallthru
          _
        %s1540 = sand.u32 %s103, 1
        %s1541 = scalar_lea.sflag [#allocation32], %s1540
        %s1542 = sand.u32 %s659, 1
        %s1543 = scalar_lea.vmem [#allocation33], %s1542
        // Predicated region
        $region217: #{tpu_custom_call.1} parent=151 // pred_check
          %p1544 = pneg %p672
        $region218: #{tpu_custom_call.1} parent=151 // pred_check_branch
          %1546 = sbr.rel (%p1544) target = $region220
        $region219: #{tpu_custom_call.1} parent=151 // pred_region
          %1547 = dma.done %s1541, 16
        $region220: #{tpu_custom_call.1} parent=151 // pred_fallthru
          _
        %s1548 = sand.u32 %s815, 1
        %s1549 = scalar_lea.sflag [#allocation35], %s1548
        %s1550 = sand.u32 %s815, 1
        %s1551 = smul.addr %s1550, 16
        %s1552 = scalar_lea.vmem [#allocation34], %s1551
        // Predicated region
        $region221: #{tpu_custom_call.1} parent=151 // pred_check
          %p1553 = pneg %p828
        $region222: #{tpu_custom_call.1} parent=151 // pred_check_branch
          %1555 = sbr.rel (%p1553) target = $region224
        $region223: #{tpu_custom_call.1} parent=151 // pred_region
          %1556 = dma.done %s1549, 256
        $region224: #{tpu_custom_call.1} parent=151 // pred_fallthru
          _
        %p1557 = pneg %p136
        %p1558 = pneg %p133
        %s1559 = smul.u32 2, %s107
        %p1560 = scmp.lt.s32.totalorder %s1559, 1
        %s1561 = scalar_select %p1560, %s1559, 1
        %s1562 = smul.addr %s1561, 2
        %s1563 = smul.addr %s1562, 8
        %s1564 = scalar_lea.vmem %s3, %s1563
        %p1565 = pneg %p162
        %p1566 = pneg %p159
        %s1567 = smul.u32 2, %s107
        %p1568 = scmp.lt.s32.totalorder %s1567, 1
        %s1569 = scalar_select %p1568, %s1567, 1
        %s1570 = smul.addr %s1569, 8
        %s1571 = scalar_lea.vmem %s5, %s1570
        %p1572 = pneg %p188
        %p1573 = pneg %p185
        %p1574 = pneg %p214
        %p1575 = pneg %p211
        %p1576 = pneg %p240
        %p1577 = pneg %p237
        %p1578 = pneg %p261
        %p1579 = pneg %p258
        %p1580 = pneg %p282
        %p1581 = pneg %p279
        %p1582 = scmp.lt.s32.totalorder %s108, 1
        %s1583 = scalar_select %p1582, %s108, 1
        %s1584 = smul.addr %s1583, 4
        %s1585 = smul.addr %s1584, 4
        %s1586 = scalar_lea.vmem %s15, %s1585
        %p1587 = pneg %p308
        %p1588 = pneg %p305
        %p1589 = scmp.lt.s32.totalorder %s108, 1
        %s1590 = scalar_select %p1589, %s108, 1
        %s1591 = smul.addr %s1590, 4
        %s1592 = smul.addr %s1591, 4
        %s1593 = scalar_lea.vmem %s17, %s1592
        %p1594 = pneg %p334
        %p1595 = pneg %p331
        %s1596 = sand.u32 %s103, 1
        %s1597 = scalar_lea.sflag [#allocation17], %s1596
        %s1598 = sand.u32 %s347, 1
        %s1599 = smul.addr %s1598, 16
        %s1600 = scalar_lea.vmem [#allocation16], %s1599
        %p1601 = pneg %p360
        %p1602 = pneg %p357
        %s1603 = sand.u32 %s103, 1
        %s1604 = scalar_lea.sflag [#allocation17], %s1603
        %s1605 = sand.u32 %s373, 1
        %s1606 = scalar_lea.vmem [#allocation18], %s1605
        %p1607 = pneg %p386
        %p1608 = pneg %p383
        %s1609 = sand.u32 %s103, 1
        %s1610 = scalar_lea.sflag [#allocation20], %s1609
        %s1611 = sand.u32 %s399, 1
        %s1612 = scalar_lea.vmem [#allocation19], %s1611
        %p1613 = pneg %p412
        %p1614 = pneg %p409
        %s1615 = sand.u32 %s103, 1
        %s1616 = scalar_lea.sflag [#allocation20], %s1615
        %s1617 = sand.u32 %s425, 1
        %s1618 = scalar_lea.vmem [#allocation21], %s1617
        %p1619 = pneg %p438
        %p1620 = pneg %p435
        %p1621 = scmp.lt.s32.totalorder %s108, 1
        %s1622 = scalar_select %p1621, %s108, 1
        %s1623 = smul.addr %s1622, 4
        %s1624 = smul.addr %s1623, 4
        %s1625 = scalar_lea.vmem %s27, %s1624
        %p1626 = pneg %p464
        %p1627 = pneg %p461
        %s1628 = sand.u32 %s103, 1
        %s1629 = scalar_lea.sflag [#allocation23], %s1628
        %s1630 = sand.u32 %s477, 1
        %s1631 = scalar_lea.vmem [#allocation22], %s1630
        %p1632 = pneg %p490
        %p1633 = pneg %p487
        %s1634 = sand.u32 %s103, 1
        %s1635 = scalar_lea.sflag [#allocation23], %s1634
        %s1636 = sand.u32 %s503, 1
        %s1637 = scalar_lea.vmem [#allocation24], %s1636
        %p1638 = pneg %p516
        %p1639 = pneg %p513
        %s1640 = sand.u32 %s103, 1
        %s1641 = scalar_lea.sflag [#allocation26], %s1640
        %s1642 = sand.u32 %s529, 1
        %s1643 = scalar_lea.vmem [#allocation25], %s1642
        %p1644 = pneg %p542
        %p1645 = pneg %p539
        %s1646 = sand.u32 %s103, 1
        %s1647 = scalar_lea.sflag [#allocation26], %s1646
        %s1648 = sand.u32 %s555, 1
        %s1649 = smul.addr %s1648, 16
        %s1650 = scalar_lea.vmem [#allocation27], %s1649
        %p1651 = pneg %p568
        %p1652 = pneg %p565
        %s1653 = sand.u32 %s103, 1
        %s1654 = scalar_lea.sflag [#allocation29], %s1653
        %s1655 = sand.u32 %s581, 1
        %s1656 = smul.addr %s1655, 16
        %s1657 = scalar_lea.vmem [#allocation28], %s1656
        %p1658 = pneg %p594
        %p1659 = pneg %p591
        %s1660 = sand.u32 %s103, 1
        %s1661 = scalar_lea.sflag [#allocation29], %s1660
        %s1662 = sand.u32 %s607, 1
        %s1663 = smul.addr %s1662, 16
        %s1664 = scalar_lea.vmem [#allocation30], %s1663
        %p1665 = pneg %p620
        %p1666 = pneg %p617
        %s1667 = sand.u32 %s103, 1
        %s1668 = scalar_lea.sflag [#allocation32], %s1667
        %s1669 = sand.u32 %s633, 1
        %s1670 = scalar_lea.vmem [#allocation31], %s1669
        %p1671 = pneg %p646
        %p1672 = pneg %p643
        %s1673 = sand.u32 %s103, 1
        %s1674 = scalar_lea.sflag [#allocation32], %s1673
        %s1675 = sand.u32 %s659, 1
        %s1676 = scalar_lea.vmem [#allocation33], %s1675
        %p1677 = pneg %p672
        %p1678 = pneg %p669
        %p1679 = scmp.lt.s32.totalorder %s108, 1
        %s1680 = scalar_select %p1679, %s108, 1
        %s1681 = scalar_lea.vmem %s45, %s1680
        %p1682 = pneg %p698
        %p1683 = pneg %p695
        %p1684 = scmp.lt.s32.totalorder %s108, 1
        %s1685 = scalar_select %p1684, %s108, 1
        %s1686 = smul.addr %s1685, 4
        %s1687 = smul.addr %s1686, 4
        %s1688 = scalar_lea.vmem %s47, %s1687
        %p1689 = pneg %p724
        %p1690 = pneg %p721
        %p1691 = scmp.lt.s32.totalorder %s108, 1
        %s1692 = scalar_select %p1691, %s108, 1
        %s1693 = scalar_lea.vmem %s49, %s1692
        %p1694 = pneg %p750
        %p1695 = pneg %p747
        %p1696 = scmp.lt.s32.totalorder %s108, 1
        %s1697 = scalar_select %p1696, %s108, 1
        %s1698 = scalar_lea.vmem %s51, %s1697
        %p1699 = pneg %p776
        %p1700 = pneg %p773
        %p1701 = scmp.lt.s32.totalorder %s108, 1
        %s1702 = scalar_select %p1701, %s108, 1
        %s1703 = scalar_lea.vmem %s53, %s1702
        %p1704 = pneg %p802
        %p1705 = pneg %p799
        %s1706 = sand.u32 %s815, 1
        %s1707 = scalar_lea.sflag [#allocation35], %s1706
        %s1708 = sand.u32 %s815, 1
        %s1709 = smul.addr %s1708, 16
        %s1710 = scalar_lea.vmem [#allocation34], %s1709
        %p1711 = pneg %p828
        %p1712 = pneg %p825
        %p1713 = scmp.lt.s32.totalorder %s108, 1
        %s1714 = scalar_select %p1713, %s108, 1
        %s1715 = scalar_lea.vmem %s57, %s1714
        %p1716 = pneg %p854
        %p1717 = pneg %p851
        %p1718 = scmp.lt.s32.totalorder %s108, 1
        %s1719 = scalar_select %p1718, %s108, 1
        %s1720 = smul.addr %s1719, 8
        %s1721 = smul.addr %s1720, 4
        %s1722 = scalar_lea.vmem %s59, %s1721
        %p1723 = pneg %p880
        %p1724 = pneg %p877
        %p1725 = scmp.lt.s32.totalorder %s108, 1
        %s1726 = scalar_select %p1725, %s108, 1
        %s1727 = scalar_lea.vmem %s61, %s1726
        %p1728 = pneg %p906
        %p1729 = pneg %p903
        %p1730 = scmp.lt.s32.totalorder %s108, 1
        %s1731 = scalar_select %p1730, %s108, 1
        %s1732 = scalar_lea.vmem %s63, %s1731
        %p1733 = pneg %p932
        %p1734 = pneg %p929
        %p1735 = scmp.lt.s32.totalorder %s108, 1
        %s1736 = scalar_select %p1735, %s108, 1
        %s1737 = scalar_lea.vmem %s65, %s1736
        %p1738 = pneg %p958
        %p1739 = pneg %p955
        %p1740 = pneg %p984
        %p1741 = pneg %p981
        %s1742 = smul.u32 2, %s107
        %s1743 = smul.u32 2, %s107
        %p1744 = scmp.lt.s32.totalorder %s1743, 1
        %s1745 = scalar_select %p1744, %s1743, 1
        %s1746 = smul.addr %s1745, 2
        %s1747 = smul.addr %s1746, 8
        %s1748 = scalar_lea.vmem %s3, %s1747
        %s1749 = smul.u32 2, %s107
        %s1750 = smul.u32 2, %s107
        %p1751 = scmp.lt.s32.totalorder %s1750, 1
        %s1752 = scalar_select %p1751, %s1750, 1
        %s1753 = smul.addr %s1752, 8
        %s1754 = scalar_lea.vmem %s5, %s1753
        %s1755 = smul.u32 2, %s107
        %s1756 = smul.u32 2, %s107
        %s1757 = smul.u32 2, %s107
        %p1758 = scmp.lt.s32.totalorder %s108, 1
        %s1759 = scalar_select %p1758, %s108, 1
        %s1760 = smul.addr %s1759, 4
        %s1761 = smul.addr %s1760, 4
        %s1762 = scalar_lea.vmem %s15, %s1761
        %p1763 = scmp.lt.s32.totalorder %s108, 1
        %s1764 = scalar_select %p1763, %s108, 1
        %s1765 = smul.addr %s1764, 4
        %s1766 = smul.addr %s1765, 4
        %s1767 = scalar_lea.vmem %s17, %s1766
        %p1768 = scmp.lt.s32.totalorder %s108, 1
        %s1769 = scalar_select %p1768, %s108, 1
        %s1770 = smul.addr %s1769, 4
        %s1771 = smul.addr %s1770, 4
        %s1772 = scalar_lea.vmem %s27, %s1771
        %p1773 = scmp.lt.s32.totalorder %s108, 1
        %s1774 = scalar_select %p1773, %s108, 1
        %s1775 = scalar_lea.vmem %s45, %s1774
        %p1776 = scmp.lt.s32.totalorder %s108, 1
        %s1777 = scalar_select %p1776, %s108, 1
        %s1778 = smul.addr %s1777, 4
        %s1779 = smul.addr %s1778, 4
        %s1780 = scalar_lea.vmem %s47, %s1779
        %p1781 = scmp.lt.s32.totalorder %s108, 1
        %s1782 = scalar_select %p1781, %s108, 1
        %s1783 = scalar_lea.vmem %s49, %s1782
        %p1784 = scmp.lt.s32.totalorder %s108, 1
        %s1785 = scalar_select %p1784, %s108, 1
        %s1786 = scalar_lea.vmem %s51, %s1785
        %p1787 = scmp.lt.s32.totalorder %s108, 1
        %s1788 = scalar_select %p1787, %s108, 1
        %s1789 = scalar_lea.vmem %s53, %s1788
        %p1790 = scmp.lt.s32.totalorder %s108, 1
        %s1791 = scalar_select %p1790, %s108, 1
        %s1792 = scalar_lea.vmem %s57, %s1791
        %p1793 = scmp.lt.s32.totalorder %s108, 1
        %s1794 = scalar_select %p1793, %s108, 1
        %s1795 = smul.addr %s1794, 8
        %s1796 = smul.addr %s1795, 4
        %s1797 = scalar_lea.vmem %s59, %s1796
        %p1798 = scmp.lt.s32.totalorder %s108, 1
        %s1799 = scalar_select %p1798, %s108, 1
        %s1800 = scalar_lea.vmem %s61, %s1799
        %p1801 = scmp.lt.s32.totalorder %s108, 1
        %s1802 = scalar_select %p1801, %s108, 1
        %s1803 = scalar_lea.vmem %s63, %s1802
        %p1804 = scmp.lt.s32.totalorder %s108, 1
        %s1805 = scalar_select %p1804, %s108, 1
        %s1806 = scalar_lea.vmem %s65, %s1805
        %s1807 = smul.u32 2, %s107
        %p1809 = scmp.eq.s32.totalorder %s108, 0
        // Predicated region
        $region225: #{tpu_custom_call.1} parent=151 // pred_check
          %p1810 = pneg %p1809
        $region226: #{tpu_custom_call.1} parent=151 // pred_check_branch
          %1812 = sbr.rel (%p1810) target = $region228
        $region227: #{tpu_custom_call.1} parent=151 // pred_region
          %v1813 = vld [vmem:[%s1748] sm:$0xff]
          %v1814 = vld [vmem:[%s1748 + $0x8] sm:$0xff]
          %v1815 = vld [vmem:[%s1748 + $0x10] sm:$0xff]
          %v1816 = vld [vmem:[%s1748 + $0x18] sm:$0xff]
          %v1817 = vld [vmem:[#allocation13] sm:$0x1]
          %v1818 = vld [vmem:[#allocation15] sm:$0x1]
          %vm1819 = vcmask 261120
          %v1820 = vsel %vm1819, %v1813, 0.0
          %1821 = vadd.xlane.f32.xlu0 %v1820
          %v1822 = vpop.xlane.xlu0 %1821
          %v1823 = vsel %vm1819, %v1814, 0.0
          %1824 = vadd.xlane.f32.xlu0 %v1823
          %v1825 = vpop.xlane.xlu0 %1824
          %v1826 = vsel %vm1819, %v1815, 0.0
          %1827 = vadd.xlane.f32.xlu0 %v1826
          %v1828 = vpop.xlane.xlu0 %1827
          %v1829 = vsel %vm1819, %v1816, 0.0
          %1830 = vadd.xlane.f32.xlu0 %v1829
          %v1831 = vpop.xlane.xlu0 %1830
          %v1832 = vrcp.pop 32.0
          %v1833 = vmul.f32 %v1822, %v1832
          %v1834 = vmul.f32 %v1825, %v1832
          %v1835 = vmul.f32 %v1828, %v1832
          %v1836 = vmul.f32 %v1831, %v1832
          %v1837 = vsub.f32 %v1813, %v1833
          %v1838 = vsub.f32 %v1814, %v1834
          %v1839 = vsub.f32 %v1815, %v1835
          %v1840 = vsub.f32 %v1816, %v1836
          %v1841 = vmul.f32 %v1837, %v1837
          %v1842 = vmul.f32 %v1838, %v1838
          %v1843 = vmul.f32 %v1839, %v1839
          %v1844 = vmul.f32 %v1840, %v1840
          %v1845 = vsel %vm1819, %v1841, 0.0
          %1846 = vadd.xlane.f32.xlu0 %v1845
          %v1847 = vpop.xlane.xlu0 %1846
          %v1848 = vsel %vm1819, %v1842, 0.0
          %1849 = vadd.xlane.f32.xlu0 %v1848
          %v1850 = vpop.xlane.xlu0 %1849
          %v1851 = vsel %vm1819, %v1843, 0.0
          %1852 = vadd.xlane.f32.xlu0 %v1851
          %v1853 = vpop.xlane.xlu0 %1852
          %v1854 = vsel %vm1819, %v1844, 0.0
          %1855 = vadd.xlane.f32.xlu0 %v1854
          %v1856 = vpop.xlane.xlu0 %1855
          %v1857 = vmul.f32 %v1847, %v1832
          %v1858 = vmul.f32 %v1850, %v1832
          %v1859 = vmul.f32 %v1853, %v1832
          %v1860 = vmul.f32 %v1856, %v1832
          %v1861 = vadd.f32 %v1857, 1e-06
          %v1862 = vadd.f32 %v1858, 1e-06
          %v1863 = vadd.f32 %v1859, 1e-06
          %v1864 = vadd.f32 %v1860, 1e-06
          %v1865 = vrsqrt.pop %v1861
          %v1866 = vrsqrt.pop %v1862
          %v1867 = vrsqrt.pop %v1863
          %v1868 = vrsqrt.pop %v1864
          %v1869 = vmul.f32 %v1837, %v1865
          %v1870 = vmul.f32 %v1838, %v1866
          %v1871 = vmul.f32 %v1839, %v1867
          %v1872 = vmul.f32 %v1840, %v1868
          %v1874 = vlaneseq
          %v1875 = vshrl.u32 %v1874, 7
          %v1876 = vsub.s32 0, %v1875
          %v1877 = vrot.slane %v1817, %v1876
          %v1879 = vmul.f32 %v1869, %v1877
          %v1880 = vmul.f32 %v1870, %v1877
          %v1881 = vmul.f32 %v1871, %v1877
          %v1882 = vmul.f32 %v1872, %v1877
          %v1884 = vlaneseq
          %v1885 = vshrl.u32 %v1884, 7
          %v1886 = vsub.s32 0, %v1885
          %v1887 = vrot.slane %v1818, %v1886
          %v1889 = vadd.f32 %v1879, %v1887
          %v1890 = vadd.f32 %v1880, %v1887
          %v1891 = vadd.f32 %v1881, %v1887
          %v1892 = vadd.f32 %v1882, %v1887
          %1893 = vst.msk [vmem:[#allocation3] sm:$0xff] %vm1819, %v1889
          %1894 = vst.msk [vmem:[#allocation3 + $0x8] sm:$0xff] %vm1819, %v1890
          %1895 = vst.msk [vmem:[#allocation3 + $0x10] sm:$0xff] %vm1819, %v1891
          %1896 = vst.msk [vmem:[#allocation3 + $0x18] sm:$0xff] %vm1819, %v1892
          %v1897 = vld [vmem:[#allocation7] sm:$0xff]
          %v1898 = vld [vmem:[#allocation7 + $0x8] sm:$0xff]
          %1899 = vst.msk [vmem:[#allocation2] sm:$0xff] %vm1819, %v1897
          %1900 = vst.msk [vmem:[#allocation2 + $0x8] sm:$0xff] %vm1819, %v1898
          %v1901 = vlaneseq
          %v1902 = vshrl.u32 %v1901, 7
          %v1903 = vlaneseq
          %v1904 = vand.u32 %v1903, 127
          %vm1905 = vcmp.gt.s32.totalorder %v1904, %v1902
          %v1906 = vsel %vm1905, 1, 0
          %v1907 = vcvt.s32.f32 %v1906
          %v1908 = vld [vmem:[#allocation10] sm:$0x1]
          %v1909 = vld [vmem:[#allocation10 + $0x1] sm:$0x1]
          %v1912 = vlaneseq
          %v1913 = vshrl.u32 %v1912, 7
          %v1914 = vsub.s32 0, %v1913
          %v1915 = vrot.slane %v1908, %v1914
          %v1916 = vlaneseq
          %v1917 = vshrl.u32 %v1916, 7
          %v1918 = vsub.s32 0, %v1917
          %v1919 = vrot.slane %v1909, %v1918
          %v1922 = vadd.f32 %v1907, %v1915
          %v1923 = vadd.f32 %v1907, %v1919
          %vm1924 = vcmp.gt.f32.partialorder %v1922, 0.0
          %vm1925 = vcmp.gt.f32.partialorder %v1923, 0.0
          %v1926 = vsel %vm1924, -1e+09, 0.0
          %v1927 = vsel %vm1925, -1e+09, 0.0
          %vm1928 = vcmask 64512
          %1929 = vst.msk [vmem:[#allocation4] sm:$0xff] %vm1928, %v1926
          %1930 = vst.msk [vmem:[#allocation4 + $0x8] sm:$0xff] %vm1928, %v1927
          %v1931 = vld [vmem:[#allocation12] sm:$0x1]
          %v1932 = vld [vmem:[#allocation12 + $0x1] sm:$0x1]
          %vm1933 = vcmp.gt.f32.partialorder %v1931, 0.0
          %vm1934 = vcmp.gt.f32.partialorder %v1932, 0.0
          %v1935 = vsel %vm1933, -1e+09, 0.0
          %v1936 = vsel %vm1934, -1e+09, 0.0
          %vm1937 = vcmask 122880
          %1938 = vst.msk [vmem:[#allocation5] sm:$0x1] %vm1937, %v1935
          %1939 = vst.msk [vmem:[#allocation5 + $0x1] sm:$0x1] %vm1937, %v1936
        $region228: #{tpu_custom_call.1} parent=151 // pred_fallthru
          _
        %v1940 = vld [vmem:[#allocation2] sm:$0xff]
        %v1941 = vld [vmem:[#allocation2 + $0x8] sm:$0xff]
        %v1942 = vld [vmem:[#allocation3] sm:$0xff]
        %v1943 = vld [vmem:[#allocation3 + $0x8] sm:$0xff]
        %v1944 = vld [vmem:[#allocation3 + $0x10] sm:$0xff]
        %v1945 = vld [vmem:[#allocation3 + $0x18] sm:$0xff]
        %v1946 = vld [vmem:[%s1754] sm:$0xff]
        %v1947 = vld [vmem:[%s1754 + $0x8] sm:$0xff]
        %v1948 = vld [vmem:[#allocation4] sm:$0xff]
        %v1949 = vld [vmem:[#allocation4 + $0x8] sm:$0xff]
        %v1950 = vld [vmem:[#allocation5] sm:$0x1]
        %v1951 = vld [vmem:[#allocation5 + $0x1] sm:$0x1]
        %v1952 = vld [vmem:[%s1762] sm:$0xf]
        %v1953 = vld [vmem:[%s1762 + $0x4] sm:$0xf]
        %v1954 = vld [vmem:[%s1762 + $0x8] sm:$0xf]
        %v1955 = vld [vmem:[%s1762 + $0xc] sm:$0xf]
        %v1956 = vld [vmem:[%s1767] sm:$0xf]
        %v1957 = vld [vmem:[%s1767 + $0x4] sm:$0xf]
        %v1958 = vld [vmem:[%s1767 + $0x8] sm:$0xf]
        %v1959 = vld [vmem:[%s1767 + $0xc] sm:$0xf]
        %v1960 = vld [vmem:[%s1452] sm:$0xf]
        %v1961 = vld [vmem:[%s1452 + $0x4] sm:$0xf]
        %v1962 = vld [vmem:[%s1452 + $0x8] sm:$0xf]
        %v1963 = vld [vmem:[%s1452 + $0xc] sm:$0xf]
        %v1964 = vld [vmem:[%s1460] sm:$0x1]
        %v1965 = vld [vmem:[%s1468] sm:$0x1]
        %v1966 = vld [vmem:[%s1476] sm:$0x1]
        %v1967 = vld [vmem:[%s1772] sm:$0xf]
        %v1968 = vld [vmem:[%s1772 + $0x4] sm:$0xf]
        %v1969 = vld [vmem:[%s1772 + $0x8] sm:$0xf]
        %v1970 = vld [vmem:[%s1772 + $0xc] sm:$0xf]
        %v1971 = vld [vmem:[%s1484] sm:$0x1]
        %v1972 = vld [vmem:[%s1492] sm:$0x1]
        %v1973 = vld [vmem:[%s1500] sm:$0x1]
        %v1974 = vpack.c.bf16 %v1941, %v1940
        %v1976 = vlaneseq
        %v1977 = vshrl.u32 %v1976, 7
        %v1978 = vsub.s32 0, %v1977
        %v1979 = vrot.slane %v1964, %v1978
        %v1985 = vunpack.c.l.b16 %v1952
        %v1986 = vunpack.c.l.b16 %v1953
        %v1987 = vunpack.c.l.b16 %v1954
        %v1988 = vunpack.c.l.b16 %v1955
        %v1989 = vpack.c.b16 %v1986, %v1985
        %v1990 = vpack.c.b16 %v1988, %v1987
        %vm1993 = vcmask 261120
        %v1995 = vsel %vm1993, %v1974, 0
        %1997 = vmatprep.subr.bf16.mxu0 0
        %1998 = vmatpush1.bf16.msra.mxu0 %v1989
        %1999 = vmatprep.subr.bf16.mxu0 0
        %2000 = vmatpush1.bf16.msra.mxu0 %v1990
        %2001 = vmatprep.subr.bf16.mxu0 0
        %2002 = vmatpush1.bf16.msra.mxu0 0
        %2003 = vmatprep.subr.bf16.mxu0 0
        %2004 = vmatpush1.bf16.msra.mxu0 0
        %2005 = vmatprep.subr.bf16.mxu0 0
        %2006 = vmatpush1.bf16.msra.mxu0 0
        %2007 = vmatprep.subr.bf16.mxu0 0
        %2008 = vmatpush1.bf16.msra.mxu0 0
        %2009 = vmatprep.subr.bf16.mxu0 0
        %2010 = vmatpush1.bf16.msra.mxu0 0
        %2011 = vmatprep.subr.bf16.mxu0 0
        %2012 = vmatpush1.bf16.msra.mxu0 0
        %2013 = vmatprep.subr.bf16.mxu0 0
        %2014 = vmatpush1.bf16.msra.mxu0 0
        %2015 = vmatprep.subr.bf16.mxu0 0
        %2016 = vmatpush1.bf16.msra.mxu0 0
        %2017 = vmatprep.subr.bf16.mxu0 0
        %2018 = vmatpush1.bf16.msra.mxu0 0
        %2019 = vmatprep.subr.bf16.mxu0 0
        %2020 = vmatpush1.bf16.msra.mxu0 0
        %2021 = vmatprep.subr.bf16.mxu0 0
        %2022 = vmatpush1.bf16.msra.mxu0 0
        %2023 = vmatprep.subr.bf16.mxu0 0
        %2024 = vmatpush1.bf16.msra.mxu0 0
        %2025 = vmatprep.subr.bf16.mxu0 0
        %2026 = vmatpush1.bf16.msra.mxu0 0
        %2027 = vmatprep.subr.bf16.mxu0 0
        %2028 = vmatpush1.bf16.msra.mxu0 0
        %2029 = vmatprep.mubr.bf16.mxu0 0
        %2030 = vmatmul.mubr.bf16.gmra.mrb[0].mxu0 %v1995
        %v2031 = vpop.f32.mrb[0].mxu0
        %v2032 = vadd.f32 %v1979, %v2031
        %v2033 = vpop.f32.mrb[0].mxu0
        %v2034 = vpop.f32.mrb[0].mxu0
        %v2035 = vadd.f32 %v1979, %v2034
        %v2036 = vpop.f32.mrb[0].mxu0
        %2037 = vdwg.mxu0
        %v2039 = vlaneseq
        %v2040 = vshrl.u32 %v2039, 7
        %v2041 = vsub.s32 0, %v2040
        %v2042 = vrot.slane %v1965, %v2041
        %v2048 = vunpack.c.l.b16 %v1956
        %v2049 = vunpack.c.l.b16 %v1957
        %v2050 = vunpack.c.l.b16 %v1958
        %v2051 = vunpack.c.l.b16 %v1959
        %v2052 = vpack.c.b16 %v2049, %v2048
        %v2053 = vpack.c.b16 %v2051, %v2050
        %2056 = vmatprep.subr.bf16.mxu0 0
        %2057 = vmatpush1.bf16.msra.mxu0 %v2052
        %2058 = vmatprep.subr.bf16.mxu0 0
        %2059 = vmatpush1.bf16.msra.mxu0 %v2053
        %2060 = vmatprep.subr.bf16.mxu0 0
        %2061 = vmatpush1.bf16.msra.mxu0 0
        %2062 = vmatprep.subr.bf16.mxu0 0
        %2063 = vmatpush1.bf16.msra.mxu0 0
        %2064 = vmatprep.subr.bf16.mxu0 0
        %2065 = vmatpush1.bf16.msra.mxu0 0
        %2066 = vmatprep.subr.bf16.mxu0 0
        %2067 = vmatpush1.bf16.msra.mxu0 0
        %2068 = vmatprep.subr.bf16.mxu0 0
        %2069 = vmatpush1.bf16.msra.mxu0 0
        %2070 = vmatprep.subr.bf16.mxu0 0
        %2071 = vmatpush1.bf16.msra.mxu0 0
        %2072 = vmatprep.subr.bf16.mxu0 0
        %2073 = vmatpush1.bf16.msra.mxu0 0
        %2074 = vmatprep.subr.bf16.mxu0 0
        %2075 = vmatpush1.bf16.msra.mxu0 0
        %2076 = vmatprep.subr.bf16.mxu0 0
        %2077 = vmatpush1.bf16.msra.mxu0 0
        %2078 = vmatprep.subr.bf16.mxu0 0
        %2079 = vmatpush1.bf16.msra.mxu0 0
        %2080 = vmatprep.subr.bf16.mxu0 0
        %2081 = vmatpush1.bf16.msra.mxu0 0
        %2082 = vmatprep.subr.bf16.mxu0 0
        %2083 = vmatpush1.bf16.msra.mxu0 0
        %2084 = vmatprep.subr.bf16.mxu0 0
        %2085 = vmatpush1.bf16.msra.mxu0 0
        %2086 = vmatprep.subr.bf16.mxu0 0
        %2087 = vmatpush1.bf16.msra.mxu0 0
        %2088 = vmatprep.mubr.bf16.mxu0 0
        %2089 = vmatmul.mubr.bf16.gmra.mrb[0].mxu0 %v1995
        %v2090 = vpop.f32.mrb[0].mxu0
        %v2091 = vadd.f32 %v2042, %v2090
        %v2092 = vpop.f32.mrb[0].mxu0
        %v2093 = vpop.f32.mrb[0].mxu0
        %v2094 = vadd.f32 %v2042, %v2093
        %v2095 = vpop.f32.mrb[0].mxu0
        %2096 = vdwg.mxu0
        %v2098 = vlaneseq
        %v2099 = vshrl.u32 %v2098, 7
        %v2100 = vsub.s32 0, %v2099
        %v2101 = vrot.slane %v1966, %v2100
        %v2107 = vunpack.c.l.b16 %v1960
        %v2108 = vunpack.c.l.b16 %v1961
        %v2109 = vunpack.c.l.b16 %v1962
        %v2110 = vunpack.c.l.b16 %v1963
        %v2111 = vpack.c.b16 %v2108, %v2107
        %v2112 = vpack.c.b16 %v2110, %v2109
        %2115 = vmatprep.subr.bf16.mxu0 0
        %2116 = vmatpush1.bf16.msra.mxu0 %v2111
        %2117 = vmatprep.subr.bf16.mxu0 0
        %2118 = vmatpush1.bf16.msra.mxu0 %v2112
        %2119 = vmatprep.subr.bf16.mxu0 0
        %2120 = vmatpush1.bf16.msra.mxu0 0
        %2121 = vmatprep.subr.bf16.mxu0 0
        %2122 = vmatpush1.bf16.msra.mxu0 0
        %2123 = vmatprep.subr.bf16.mxu0 0
        %2124 = vmatpush1.bf16.msra.mxu0 0
        %2125 = vmatprep.subr.bf16.mxu0 0
        %2126 = vmatpush1.bf16.msra.mxu0 0
        %2127 = vmatprep.subr.bf16.mxu0 0
        %2128 = vmatpush1.bf16.msra.mxu0 0
        %2129 = vmatprep.subr.bf16.mxu0 0
        %2130 = vmatpush1.bf16.msra.mxu0 0
        %2131 = vmatprep.subr.bf16.mxu0 0
        %2132 = vmatpush1.bf16.msra.mxu0 0
        %2133 = vmatprep.subr.bf16.mxu0 0
        %2134 = vmatpush1.bf16.msra.mxu0 0
        %2135 = vmatprep.subr.bf16.mxu0 0
        %2136 = vmatpush1.bf16.msra.mxu0 0
        %2137 = vmatprep.subr.bf16.mxu0 0
        %2138 = vmatpush1.bf16.msra.mxu0 0
        %2139 = vmatprep.subr.bf16.mxu0 0
        %2140 = vmatpush1.bf16.msra.mxu0 0
        %2141 = vmatprep.subr.bf16.mxu0 0
        %2142 = vmatpush1.bf16.msra.mxu0 0
        %2143 = vmatprep.subr.bf16.mxu0 0
        %2144 = vmatpush1.bf16.msra.mxu0 0
        %2145 = vmatprep.subr.bf16.mxu0 0
        %2146 = vmatpush1.bf16.msra.mxu0 0
        %2147 = vmatprep.mubr.bf16.mxu0 0
        %2148 = vmatmul.mubr.bf16.gmra.mrb[0].mxu0 %v1995
        %v2149 = vpop.f32.mrb[0].mxu0
        %v2150 = vadd.f32 %v2101, %v2149
        %v2151 = vpop.f32.mrb[0].mxu0
        %v2152 = vpop.f32.mrb[0].mxu0
        %v2153 = vadd.f32 %v2101, %v2152
        %v2154 = vpop.f32.mrb[0].mxu0
        %2155 = vdwg.mxu0
        %v2156 = vpack.c.bf16 %v2032, %v2032
        %v2157 = vpack.c.bf16 %v2035, %v2035
        %v2158 = vpack.c.bf16 %v2091, %v2091
        %v2159 = vpack.c.bf16 %v2094, %v2094
        %v2160 = vpack.c.bf16 %v2150, %v2150
        %v2161 = vpack.c.bf16 %v2153, %v2153
        %vm2162 = vcmask 64512
        %v2164 = vsel %vm2162, %v2156, 0
        %v2167 = vsel %vm2162, %v2158, 0
        %2169 = vmatprep.subr.bf16.mxu0 0
        %2170 = vmatpush1.bf16.xpose.msra.mxu0 %v2167
        %2171 = vmatprep.subr.bf16.mxu0 0
        %2172 = vmatpush1.bf16.xpose.msra.mxu0 0
        %2173 = vmatprep.subr.bf16.mxu0 0
        %2174 = vmatpush1.bf16.xpose.msra.mxu0 0
        %2175 = vmatprep.subr.bf16.mxu0 0
        %2176 = vmatpush1.bf16.xpose.msra.mxu0 0
        %2177 = vmatprep.subr.bf16.mxu0 0
        %2178 = vmatpush1.bf16.xpose.msra.mxu0 0
        %2179 = vmatprep.subr.bf16.mxu0 0
        %2180 = vmatpush1.bf16.xpose.msra.mxu0 0
        %2181 = vmatprep.subr.bf16.mxu0 0
        %2182 = vmatpush1.bf16.xpose.msra.mxu0 0
        %2183 = vmatprep.subr.bf16.mxu0 0
        %2184 = vmatpush1.bf16.xpose.msra.mxu0 0
        %2185 = vmatprep.subr.bf16.mxu0 0
        %2186 = vmatpush1.bf16.xpose.msra.mxu0 0
        %2187 = vmatprep.subr.bf16.mxu0 0
        %2188 = vmatpush1.bf16.xpose.msra.mxu0 0
        %2189 = vmatprep.subr.bf16.mxu0 0
        %2190 = vmatpush1.bf16.xpose.msra.mxu0 0
        %2191 = vmatprep.subr.bf16.mxu0 0
        %2192 = vmatpush1.bf16.xpose.msra.mxu0 0
        %2193 = vmatprep.subr.bf16.mxu0 0
        %2194 = vmatpush1.bf16.xpose.msra.mxu0 0
        %2195 = vmatprep.subr.bf16.mxu0 0
        %2196 = vmatpush1.bf16.xpose.msra.mxu0 0
        %2197 = vmatprep.subr.bf16.mxu0 0
        %2198 = vmatpush1.bf16.xpose.msra.mxu0 0
        %2199 = vmatprep.subr.bf16.mxu0 0
        %2200 = vmatpush1.bf16.xpose.msra.mxu0 0
        %2201 = vmatprep.mubr.bf16.mxu0 0
        %2202 = vmatmul.mubr.bf16.gmra.mrb[0].mxu0 %v2164
        %v2203 = vpop.f32.mrb[0].mxu0
        %v2204 = vadd.f32 %v1948, %v2203
        %v2205 = vpop.f32.mrb[0].mxu0
        %v2206 = vpop.f32.mrb[0].mxu0
        %v2207 = vpop.f32.mrb[0].mxu0
        %2208 = vdwg.mxu0
        %v2210 = vsel %vm2162, %v2157, 0
        %v2213 = vsel %vm2162, %v2159, 0
        %2215 = vmatprep.subr.bf16.mxu0 0
        %2216 = vmatpush1.bf16.xpose.msra.mxu0 %v2213
        %2217 = vmatprep.subr.bf16.mxu0 0
        %2218 = vmatpush1.bf16.xpose.msra.mxu0 0
        %2219 = vmatprep.subr.bf16.mxu0 0
        %2220 = vmatpush1.bf16.xpose.msra.mxu0 0
        %2221 = vmatprep.subr.bf16.mxu0 0
        %2222 = vmatpush1.bf16.xpose.msra.mxu0 0
        %2223 = vmatprep.subr.bf16.mxu0 0
        %2224 = vmatpush1.bf16.xpose.msra.mxu0 0
        %2225 = vmatprep.subr.bf16.mxu0 0
        %2226 = vmatpush1.bf16.xpose.msra.mxu0 0
        %2227 = vmatprep.subr.bf16.mxu0 0
        %2228 = vmatpush1.bf16.xpose.msra.mxu0 0
        %2229 = vmatprep.subr.bf16.mxu0 0
        %2230 = vmatpush1.bf16.xpose.msra.mxu0 0
        %2231 = vmatprep.subr.bf16.mxu0 0
        %2232 = vmatpush1.bf16.xpose.msra.mxu0 0
        %2233 = vmatprep.subr.bf16.mxu0 0
        %2234 = vmatpush1.bf16.xpose.msra.mxu0 0
        %2235 = vmatprep.subr.bf16.mxu0 0
        %2236 = vmatpush1.bf16.xpose.msra.mxu0 0
        %2237 = vmatprep.subr.bf16.mxu0 0
        %2238 = vmatpush1.bf16.xpose.msra.mxu0 0
        %2239 = vmatprep.subr.bf16.mxu0 0
        %2240 = vmatpush1.bf16.xpose.msra.mxu0 0
        %2241 = vmatprep.subr.bf16.mxu0 0
        %2242 = vmatpush1.bf16.xpose.msra.mxu0 0
        %2243 = vmatprep.subr.bf16.mxu0 0
        %2244 = vmatpush1.bf16.xpose.msra.mxu0 0
        %2245 = vmatprep.subr.bf16.mxu0 0
        %2246 = vmatpush1.bf16.xpose.msra.mxu0 0
        %2247 = vmatprep.mubr.bf16.mxu0 0
        %2248 = vmatmul.mubr.bf16.gmra.mrb[0].mxu0 %v2210
        %v2249 = vpop.f32.mrb[0].mxu0
        %v2250 = vadd.f32 %v1949, %v2249
        %v2251 = vpop.f32.mrb[0].mxu0
        %v2252 = vpop.f32.mrb[0].mxu0
        %v2253 = vpop.f32.mrb[0].mxu0
        %2254 = vdwg.mxu0
        %v2255 = vsel %vm2162, %v2204, -inf
        %2256 = vmax.xlane.f32.xlu0 %v2255
        %v2257 = vpop.xlane.xlu0 %2256
        %v2258 = vsel %vm2162, %v2250, -inf
        %2259 = vmax.xlane.f32.xlu0 %v2258
        %v2260 = vpop.xlane.xlu0 %2259
        %v2261 = vsub.f32 %v2204, %v2257
        %v2262 = vsub.f32 %v2250, %v2260
        %v2263 = vmul.f32 %v2261, 1.442695
        %v2264 = vpow.pop %v2263
        %v2265 = vmul.f32 %v2262, 1.442695
        %v2266 = vpow.pop %v2265
        %v2267 = vsel %vm2162, %v2264, 0.0
        %2268 = vadd.xlane.f32.xlu0 %v2267
        %v2269 = vpop.xlane.xlu0 %2268
        %v2270 = vsel %vm2162, %v2266, 0.0
        %2271 = vadd.xlane.f32.xlu0 %v2270
        %v2272 = vpop.xlane.xlu0 %2271
        %v2273 = vrcp.pop %v2269
        %v2274 = vrcp.pop %v2272
        %v2275 = vmul.f32 %v2264, %v2273
        %v2276 = vmul.f32 %v2266, %v2274
        %v2277 = vpack.c.bf16 %v2275, %v2275
        %v2278 = vpack.c.bf16 %v2276, %v2276
        %v2280 = vsel %vm2162, %v2277, 0
        %vm2282 = vcmask 1043456
        %v2284 = vsel %vm2282, %v2160, 0
        %2286 = vmatprep.subr.bf16.mxu0 0
        %2287 = vmatpush1.bf16.msra.mxu0 %v2284
        %2288 = vmatprep.subr.bf16.mxu0 0
        %2289 = vmatpush1.bf16.msra.mxu0 0
        %2290 = vmatprep.subr.bf16.mxu0 0
        %2291 = vmatpush1.bf16.msra.mxu0 0
        %2292 = vmatprep.subr.bf16.mxu0 0
        %2293 = vmatpush1.bf16.msra.mxu0 0
        %2294 = vmatprep.subr.bf16.mxu0 0
        %2295 = vmatpush1.bf16.msra.mxu0 0
        %2296 = vmatprep.subr.bf16.mxu0 0
        %2297 = vmatpush1.bf16.msra.mxu0 0
        %2298 = vmatprep.subr.bf16.mxu0 0
        %2299 = vmatpush1.bf16.msra.mxu0 0
        %2300 = vmatprep.subr.bf16.mxu0 0
        %2301 = vmatpush1.bf16.msra.mxu0 0
        %2302 = vmatprep.subr.bf16.mxu0 0
        %2303 = vmatpush1.bf16.msra.mxu0 0
        %2304 = vmatprep.subr.bf16.mxu0 0
        %2305 = vmatpush1.bf16.msra.mxu0 0
        %2306 = vmatprep.subr.bf16.mxu0 0
        %2307 = vmatpush1.bf16.msra.mxu0 0
        %2308 = vmatprep.subr.bf16.mxu0 0
        %2309 = vmatpush1.bf16.msra.mxu0 0
        %2310 = vmatprep.subr.bf16.mxu0 0
        %2311 = vmatpush1.bf16.msra.mxu0 0
        %2312 = vmatprep.subr.bf16.mxu0 0
        %2313 = vmatpush1.bf16.msra.mxu0 0
        %2314 = vmatprep.subr.bf16.mxu0 0
        %2315 = vmatpush1.bf16.msra.mxu0 0
        %2316 = vmatprep.subr.bf16.mxu0 0
        %2317 = vmatpush1.bf16.msra.mxu0 0
        %2318 = vmatprep.mubr.bf16.mxu0 0
        %2319 = vmatmul.mubr.bf16.gmra.mrb[0].mxu0 %v2280
        %v2320 = vpop.f32.mrb[0].mxu0
        %v2321 = vadd.f32 0.0, %v2320
        %v2322 = vpop.f32.mrb[0].mxu0
        %v2323 = vpop.f32.mrb[0].mxu0
        %v2324 = vpop.f32.mrb[0].mxu0
        %2325 = vdwg.mxu0
        %v2327 = vsel %vm2162, %v2278, 0
        %v2330 = vsel %vm2282, %v2161, 0
        %2332 = vmatprep.subr.bf16.mxu0 0
        %2333 = vmatpush1.bf16.msra.mxu0 %v2330
        %2334 = vmatprep.subr.bf16.mxu0 0
        %2335 = vmatpush1.bf16.msra.mxu0 0
        %2336 = vmatprep.subr.bf16.mxu0 0
        %2337 = vmatpush1.bf16.msra.mxu0 0
        %2338 = vmatprep.subr.bf16.mxu0 0
        %2339 = vmatpush1.bf16.msra.mxu0 0
        %2340 = vmatprep.subr.bf16.mxu0 0
        %2341 = vmatpush1.bf16.msra.mxu0 0
        %2342 = vmatprep.subr.bf16.mxu0 0
        %2343 = vmatpush1.bf16.msra.mxu0 0
        %2344 = vmatprep.subr.bf16.mxu0 0
        %2345 = vmatpush1.bf16.msra.mxu0 0
        %2346 = vmatprep.subr.bf16.mxu0 0
        %2347 = vmatpush1.bf16.msra.mxu0 0
        %2348 = vmatprep.subr.bf16.mxu0 0
        %2349 = vmatpush1.bf16.msra.mxu0 0
        %2350 = vmatprep.subr.bf16.mxu0 0
        %2351 = vmatpush1.bf16.msra.mxu0 0
        %2352 = vmatprep.subr.bf16.mxu0 0
        %2353 = vmatpush1.bf16.msra.mxu0 0
        %2354 = vmatprep.subr.bf16.mxu0 0
        %2355 = vmatpush1.bf16.msra.mxu0 0
        %2356 = vmatprep.subr.bf16.mxu0 0
        %2357 = vmatpush1.bf16.msra.mxu0 0
        %2358 = vmatprep.subr.bf16.mxu0 0
        %2359 = vmatpush1.bf16.msra.mxu0 0
        %2360 = vmatprep.subr.bf16.mxu0 0
        %2361 = vmatpush1.bf16.msra.mxu0 0
        %2362 = vmatprep.subr.bf16.mxu0 0
        %2363 = vmatpush1.bf16.msra.mxu0 0
        %2364 = vmatprep.mubr.bf16.mxu0 0
        %2365 = vmatmul.mubr.bf16.gmra.mrb[0].mxu0 %v2327
        %v2366 = vpop.f32.mrb[0].mxu0
        %v2367 = vadd.f32 0.0, %v2366
        %v2368 = vpop.f32.mrb[0].mxu0
        %v2369 = vpop.f32.mrb[0].mxu0
        %v2370 = vpop.f32.mrb[0].mxu0
        %2371 = vdwg.mxu0
        %2372 = vst.msk [vmem:[#allocation6] sm:$0xff] %vm2162, %v2321
        %2373 = vst.msk [vmem:[#allocation6 + $0x8] sm:$0xff] %vm2162, %v2367
        %2375 = vrot.lane.b32.xlu0 %v2156, 120
        %v2376 = vpop.permute.xlu0 %2375
        %2378 = vrot.lane.b32.xlu0 %v2158, 120
        %v2379 = vpop.permute.xlu0 %2378
        %v2381 = vsel %vm2162, %v2376, 0
        %v2384 = vsel %vm2162, %v2379, 0
        %2386 = vmatprep.subr.bf16.mxu0 0
        %2387 = vmatpush1.bf16.xpose.msra.mxu0 %v2384
        %2388 = vmatprep.subr.bf16.mxu0 0
        %2389 = vmatpush1.bf16.xpose.msra.mxu0 0
        %2390 = vmatprep.subr.bf16.mxu0 0
        %2391 = vmatpush1.bf16.xpose.msra.mxu0 0
        %2392 = vmatprep.subr.bf16.mxu0 0
        %2393 = vmatpush1.bf16.xpose.msra.mxu0 0
        %2394 = vmatprep.subr.bf16.mxu0 0
        %2395 = vmatpush1.bf16.xpose.msra.mxu0 0
        %2396 = vmatprep.subr.bf16.mxu0 0
        %2397 = vmatpush1.bf16.xpose.msra.mxu0 0
        %2398 = vmatprep.subr.bf16.mxu0 0
        %2399 = vmatpush1.bf16.xpose.msra.mxu0 0
        %2400 = vmatprep.subr.bf16.mxu0 0
        %2401 = vmatpush1.bf16.xpose.msra.mxu0 0
        %2402 = vmatprep.subr.bf16.mxu0 0
        %2403 = vmatpush1.bf16.xpose.msra.mxu0 0
        %2404 = vmatprep.subr.bf16.mxu0 0
        %2405 = vmatpush1.bf16.xpose.msra.mxu0 0
        %2406 = vmatprep.subr.bf16.mxu0 0
        %2407 = vmatpush1.bf16.xpose.msra.mxu0 0
        %2408 = vmatprep.subr.bf16.mxu0 0
        %2409 = vmatpush1.bf16.xpose.msra.mxu0 0
        %2410 = vmatprep.subr.bf16.mxu0 0
        %2411 = vmatpush1.bf16.xpose.msra.mxu0 0
        %2412 = vmatprep.subr.bf16.mxu0 0
        %2413 = vmatpush1.bf16.xpose.msra.mxu0 0
        %2414 = vmatprep.subr.bf16.mxu0 0
        %2415 = vmatpush1.bf16.xpose.msra.mxu0 0
        %2416 = vmatprep.subr.bf16.mxu0 0
        %2417 = vmatpush1.bf16.xpose.msra.mxu0 0
        %2418 = vmatprep.mubr.bf16.mxu0 0
        %2419 = vmatmul.mubr.bf16.gmra.mrb[0].mxu0 %v2381
        %v2420 = vpop.f32.mrb[0].mxu0
        %v2421 = vadd.f32 %v1948, %v2420
        %v2422 = vpop.f32.mrb[0].mxu0
        %v2423 = vpop.f32.mrb[0].mxu0
        %v2424 = vpop.f32.mrb[0].mxu0
        %2425 = vdwg.mxu0
        %2427 = vrot.lane.b32.xlu0 %v2157, 120
        %v2428 = vpop.permute.xlu0 %2427
        %2430 = vrot.lane.b32.xlu0 %v2159, 120
        %v2431 = vpop.permute.xlu0 %2430
        %v2433 = vsel %vm2162, %v2428, 0
        %v2436 = vsel %vm2162, %v2431, 0
        %2438 = vmatprep.subr.bf16.mxu0 0
        %2439 = vmatpush1.bf16.xpose.msra.mxu0 %v2436
        %2440 = vmatprep.subr.bf16.mxu0 0
        %2441 = vmatpush1.bf16.xpose.msra.mxu0 0
        %2442 = vmatprep.subr.bf16.mxu0 0
        %2443 = vmatpush1.bf16.xpose.msra.mxu0 0
        %2444 = vmatprep.subr.bf16.mxu0 0
        %2445 = vmatpush1.bf16.xpose.msra.mxu0 0
        %2446 = vmatprep.subr.bf16.mxu0 0
        %2447 = vmatpush1.bf16.xpose.msra.mxu0 0
        %2448 = vmatprep.subr.bf16.mxu0 0
        %2449 = vmatpush1.bf16.xpose.msra.mxu0 0
        %2450 = vmatprep.subr.bf16.mxu0 0
        %2451 = vmatpush1.bf16.xpose.msra.mxu0 0
        %2452 = vmatprep.subr.bf16.mxu0 0
        %2453 = vmatpush1.bf16.xpose.msra.mxu0 0
        %2454 = vmatprep.subr.bf16.mxu0 0
        %2455 = vmatpush1.bf16.xpose.msra.mxu0 0
        %2456 = vmatprep.subr.bf16.mxu0 0
        %2457 = vmatpush1.bf16.xpose.msra.mxu0 0
        %2458 = vmatprep.subr.bf16.mxu0 0
        %2459 = vmatpush1.bf16.xpose.msra.mxu0 0
        %2460 = vmatprep.subr.bf16.mxu0 0
        %2461 = vmatpush1.bf16.xpose.msra.mxu0 0
        %2462 = vmatprep.subr.bf16.mxu0 0
        %2463 = vmatpush1.bf16.xpose.msra.mxu0 0
        %2464 = vmatprep.subr.bf16.mxu0 0
        %2465 = vmatpush1.bf16.xpose.msra.mxu0 0
        %2466 = vmatprep.subr.bf16.mxu0 0
        %2467 = vmatpush1.bf16.xpose.msra.mxu0 0
        %2468 = vmatprep.subr.bf16.mxu0 0
        %2469 = vmatpush1.bf16.xpose.msra.mxu0 0
        %2470 = vmatprep.mubr.bf16.mxu0 0
        %2471 = vmatmul.mubr.bf16.gmra.mrb[0].mxu0 %v2433
        %v2472 = vpop.f32.mrb[0].mxu0
        %v2473 = vadd.f32 %v1949, %v2472
        %v2474 = vpop.f32.mrb[0].mxu0
        %v2475 = vpop.f32.mrb[0].mxu0
        %v2476 = vpop.f32.mrb[0].mxu0
        %2477 = vdwg.mxu0
        %v2478 = vsel %vm2162, %v2421, -inf
        %2479 = vmax.xlane.f32.xlu0 %v2478
        %v2480 = vpop.xlane.xlu0 %2479
        %v2481 = vsel %vm2162, %v2473, -inf
        %2482 = vmax.xlane.f32.xlu0 %v2481
        %v2483 = vpop.xlane.xlu0 %2482
        %v2484 = vsub.f32 %v2421, %v2480
        %v2485 = vsub.f32 %v2473, %v2483
        %v2486 = vmul.f32 %v2484, 1.442695
        %v2487 = vpow.pop %v2486
        %v2488 = vmul.f32 %v2485, 1.442695
        %v2489 = vpow.pop %v2488
        %v2490 = vsel %vm2162, %v2487, 0.0
        %2491 = vadd.xlane.f32.xlu0 %v2490
        %v2492 = vpop.xlane.xlu0 %2491
        %v2493 = vsel %vm2162, %v2489, 0.0
        %2494 = vadd.xlane.f32.xlu0 %v2493
        %v2495 = vpop.xlane.xlu0 %2494
        %v2496 = vrcp.pop %v2492
        %v2497 = vrcp.pop %v2495
        %v2498 = vmul.f32 %v2487, %v2496
        %v2499 = vmul.f32 %v2489, %v2497
        %v2500 = vpack.c.bf16 %v2498, %v2498
        %v2501 = vpack.c.bf16 %v2499, %v2499
        %2503 = vrot.lane.b32.xlu0 %v2160, 120
        %v2504 = vpop.permute.xlu0 %2503
        %v2506 = vsel %vm2162, %v2500, 0
        %v2509 = vsel %vm2282, %v2504, 0
        %2511 = vmatprep.subr.bf16.mxu0 0
        %2512 = vmatpush1.bf16.msra.mxu0 %v2509
        %2513 = vmatprep.subr.bf16.mxu0 0
        %2514 = vmatpush1.bf16.msra.mxu0 0
        %2515 = vmatprep.subr.bf16.mxu0 0
        %2516 = vmatpush1.bf16.msra.mxu0 0
        %2517 = vmatprep.subr.bf16.mxu0 0
        %2518 = vmatpush1.bf16.msra.mxu0 0
        %2519 = vmatprep.subr.bf16.mxu0 0
        %2520 = vmatpush1.bf16.msra.mxu0 0
        %2521 = vmatprep.subr.bf16.mxu0 0
        %2522 = vmatpush1.bf16.msra.mxu0 0
        %2523 = vmatprep.subr.bf16.mxu0 0
        %2524 = vmatpush1.bf16.msra.mxu0 0
        %2525 = vmatprep.subr.bf16.mxu0 0
        %2526 = vmatpush1.bf16.msra.mxu0 0
        %2527 = vmatprep.subr.bf16.mxu0 0
        %2528 = vmatpush1.bf16.msra.mxu0 0
        %2529 = vmatprep.subr.bf16.mxu0 0
        %2530 = vmatpush1.bf16.msra.mxu0 0
        %2531 = vmatprep.subr.bf16.mxu0 0
        %2532 = vmatpush1.bf16.msra.mxu0 0
        %2533 = vmatprep.subr.bf16.mxu0 0
        %2534 = vmatpush1.bf16.msra.mxu0 0
        %2535 = vmatprep.subr.bf16.mxu0 0
        %2536 = vmatpush1.bf16.msra.mxu0 0
        %2537 = vmatprep.subr.bf16.mxu0 0
        %2538 = vmatpush1.bf16.msra.mxu0 0
        %2539 = vmatprep.subr.bf16.mxu0 0
        %2540 = vmatpush1.bf16.msra.mxu0 0
        %2541 = vmatprep.subr.bf16.mxu0 0
        %2542 = vmatpush1.bf16.msra.mxu0 0
        %2543 = vmatprep.mubr.bf16.mxu0 0
        %2544 = vmatmul.mubr.bf16.gmra.mrb[0].mxu0 %v2506
        %v2545 = vpop.f32.mrb[0].mxu0
        %v2546 = vadd.f32 0.0, %v2545
        %v2547 = vpop.f32.mrb[0].mxu0
        %v2548 = vpop.f32.mrb[0].mxu0
        %v2549 = vpop.f32.mrb[0].mxu0
        %2550 = vdwg.mxu0
        %2552 = vrot.lane.b32.xlu0 %v2161, 120
        %v2553 = vpop.permute.xlu0 %2552
        %v2555 = vsel %vm2162, %v2501, 0
        %v2558 = vsel %vm2282, %v2553, 0
        %2560 = vmatprep.subr.bf16.mxu0 0
        %2561 = vmatpush1.bf16.msra.mxu0 %v2558
        %2562 = vmatprep.subr.bf16.mxu0 0
        %2563 = vmatpush1.bf16.msra.mxu0 0
        %2564 = vmatprep.subr.bf16.mxu0 0
        %2565 = vmatpush1.bf16.msra.mxu0 0
        %2566 = vmatprep.subr.bf16.mxu0 0
        %2567 = vmatpush1.bf16.msra.mxu0 0
        %2568 = vmatprep.subr.bf16.mxu0 0
        %2569 = vmatpush1.bf16.msra.mxu0 0
        %2570 = vmatprep.subr.bf16.mxu0 0
        %2571 = vmatpush1.bf16.msra.mxu0 0
        %2572 = vmatprep.subr.bf16.mxu0 0
        %2573 = vmatpush1.bf16.msra.mxu0 0
        %2574 = vmatprep.subr.bf16.mxu0 0
        %2575 = vmatpush1.bf16.msra.mxu0 0
        %2576 = vmatprep.subr.bf16.mxu0 0
        %2577 = vmatpush1.bf16.msra.mxu0 0
        %2578 = vmatprep.subr.bf16.mxu0 0
        %2579 = vmatpush1.bf16.msra.mxu0 0
        %2580 = vmatprep.subr.bf16.mxu0 0
        %2581 = vmatpush1.bf16.msra.mxu0 0
        %2582 = vmatprep.subr.bf16.mxu0 0
        %2583 = vmatpush1.bf16.msra.mxu0 0
        %2584 = vmatprep.subr.bf16.mxu0 0
        %2585 = vmatpush1.bf16.msra.mxu0 0
        %2586 = vmatprep.subr.bf16.mxu0 0
        %2587 = vmatpush1.bf16.msra.mxu0 0
        %2588 = vmatprep.subr.bf16.mxu0 0
        %2589 = vmatpush1.bf16.msra.mxu0 0
        %2590 = vmatprep.subr.bf16.mxu0 0
        %2591 = vmatpush1.bf16.msra.mxu0 0
        %2592 = vmatprep.mubr.bf16.mxu0 0
        %2593 = vmatmul.mubr.bf16.gmra.mrb[0].mxu0 %v2555
        %v2594 = vpop.f32.mrb[0].mxu0
        %v2595 = vadd.f32 0.0, %v2594
        %v2596 = vpop.f32.mrb[0].mxu0
        %v2597 = vpop.f32.mrb[0].mxu0
        %v2598 = vpop.f32.mrb[0].mxu0
        %2599 = vdwg.mxu0
        %2602 = vrot.lane.b32.xlu0 %v2546, 8
        %v2603 = vpop.permute.xlu0 %2602
        %2604 = vrot.lane.b32.xlu0 %v2595, 8
        %v2605 = vpop.permute.xlu0 %2604
        %vm2608 = vcmask 130112
        %2609 = vst.msk [vmem:[#allocation6] sm:$0xff] %vm2608, %v2603
        %2610 = vst.msk [vmem:[#allocation6 + $0x8] sm:$0xff] %vm2608, %v2605
        %2611 = vrot.lane.b32.xlu0 %v2156, 112
        %v2612 = vpop.permute.xlu0 %2611
        %2613 = vrot.lane.b32.xlu0 %v2158, 112
        %v2614 = vpop.permute.xlu0 %2613
        %v2616 = vsel %vm2162, %v2612, 0
        %v2619 = vsel %vm2162, %v2614, 0
        %2621 = vmatprep.subr.bf16.mxu0 0
        %2622 = vmatpush1.bf16.xpose.msra.mxu0 %v2619
        %2623 = vmatprep.subr.bf16.mxu0 0
        %2624 = vmatpush1.bf16.xpose.msra.mxu0 0
        %2625 = vmatprep.subr.bf16.mxu0 0
        %2626 = vmatpush1.bf16.xpose.msra.mxu0 0
        %2627 = vmatprep.subr.bf16.mxu0 0
        %2628 = vmatpush1.bf16.xpose.msra.mxu0 0
        %2629 = vmatprep.subr.bf16.mxu0 0
        %2630 = vmatpush1.bf16.xpose.msra.mxu0 0
        %2631 = vmatprep.subr.bf16.mxu0 0
        %2632 = vmatpush1.bf16.xpose.msra.mxu0 0
        %2633 = vmatprep.subr.bf16.mxu0 0
        %2634 = vmatpush1.bf16.xpose.msra.mxu0 0
        %2635 = vmatprep.subr.bf16.mxu0 0
        %2636 = vmatpush1.bf16.xpose.msra.mxu0 0
        %2637 = vmatprep.subr.bf16.mxu0 0
        %2638 = vmatpush1.bf16.xpose.msra.mxu0 0
        %2639 = vmatprep.subr.bf16.mxu0 0
        %2640 = vmatpush1.bf16.xpose.msra.mxu0 0
        %2641 = vmatprep.subr.bf16.mxu0 0
        %2642 = vmatpush1.bf16.xpose.msra.mxu0 0
        %2643 = vmatprep.subr.bf16.mxu0 0
        %2644 = vmatpush1.bf16.xpose.msra.mxu0 0
        %2645 = vmatprep.subr.bf16.mxu0 0
        %2646 = vmatpush1.bf16.xpose.msra.mxu0 0
        %2647 = vmatprep.subr.bf16.mxu0 0
        %2648 = vmatpush1.bf16.xpose.msra.mxu0 0
        %2649 = vmatprep.subr.bf16.mxu0 0
        %2650 = vmatpush1.bf16.xpose.msra.mxu0 0
        %2651 = vmatprep.subr.bf16.mxu0 0
        %2652 = vmatpush1.bf16.xpose.msra.mxu0 0
        %2653 = vmatprep.mubr.bf16.mxu0 0
        %2654 = vmatmul.mubr.bf16.gmra.mrb[0].mxu0 %v2616
        %v2655 = vpop.f32.mrb[0].mxu0
        %v2656 = vadd.f32 %v1948, %v2655
        %v2657 = vpop.f32.mrb[0].mxu0
        %v2658 = vpop.f32.mrb[0].mxu0
        %v2659 = vpop.f32.mrb[0].mxu0
        %2660 = vdwg.mxu0
        %2661 = vrot.lane.b32.xlu0 %v2157, 112
        %v2662 = vpop.permute.xlu0 %2661
        %2663 = vrot.lane.b32.xlu0 %v2159, 112
        %v2664 = vpop.permute.xlu0 %2663
        %v2666 = vsel %vm2162, %v2662, 0
        %v2669 = vsel %vm2162, %v2664, 0
        %2671 = vmatprep.subr.bf16.mxu0 0
        %2672 = vmatpush1.bf16.xpose.msra.mxu0 %v2669
        %2673 = vmatprep.subr.bf16.mxu0 0
        %2674 = vmatpush1.bf16.xpose.msra.mxu0 0
        %2675 = vmatprep.subr.bf16.mxu0 0
        %2676 = vmatpush1.bf16.xpose.msra.mxu0 0
        %2677 = vmatprep.subr.bf16.mxu0 0
        %2678 = vmatpush1.bf16.xpose.msra.mxu0 0
        %2679 = vmatprep.subr.bf16.mxu0 0
        %2680 = vmatpush1.bf16.xpose.msra.mxu0 0
        %2681 = vmatprep.subr.bf16.mxu0 0
        %2682 = vmatpush1.bf16.xpose.msra.mxu0 0
        %2683 = vmatprep.subr.bf16.mxu0 0
        %2684 = vmatpush1.bf16.xpose.msra.mxu0 0
        %2685 = vmatprep.subr.bf16.mxu0 0
        %2686 = vmatpush1.bf16.xpose.msra.mxu0 0
        %2687 = vmatprep.subr.bf16.mxu0 0
        %2688 = vmatpush1.bf16.xpose.msra.mxu0 0
        %2689 = vmatprep.subr.bf16.mxu0 0
        %2690 = vmatpush1.bf16.xpose.msra.mxu0 0
        %2691 = vmatprep.subr.bf16.mxu0 0
        %2692 = vmatpush1.bf16.xpose.msra.mxu0 0
        %2693 = vmatprep.subr.bf16.mxu0 0
        %2694 = vmatpush1.bf16.xpose.msra.mxu0 0
        %2695 = vmatprep.subr.bf16.mxu0 0
        %2696 = vmatpush1.bf16.xpose.msra.mxu0 0
        %2697 = vmatprep.subr.bf16.mxu0 0
        %2698 = vmatpush1.bf16.xpose.msra.mxu0 0
        %2699 = vmatprep.subr.bf16.mxu0 0
        %2700 = vmatpush1.bf16.xpose.msra.mxu0 0
        %2701 = vmatprep.subr.bf16.mxu0 0
        %2702 = vmatpush1.bf16.xpose.msra.mxu0 0
        %2703 = vmatprep.mubr.bf16.mxu0 0
        %2704 = vmatmul.mubr.bf16.gmra.mrb[0].mxu0 %v2666
        %v2705 = vpop.f32.mrb[0].mxu0
        %v2706 = vadd.f32 %v1949, %v2705
        %v2707 = vpop.f32.mrb[0].mxu0
        %v2708 = vpop.f32.mrb[0].mxu0
        %v2709 = vpop.f32.mrb[0].mxu0
        %2710 = vdwg.mxu0
        %v2711 = vsel %vm2162, %v2656, -inf
        %2712 = vmax.xlane.f32.xlu0 %v2711
        %v2713 = vpop.xlane.xlu0 %2712
        %v2714 = vsel %vm2162, %v2706, -inf
        %2715 = vmax.xlane.f32.xlu0 %v2714
        %v2716 = vpop.xlane.xlu0 %2715
        %v2717 = vsub.f32 %v2656, %v2713
        %v2718 = vsub.f32 %v2706, %v2716
        %v2719 = vmul.f32 %v2717, 1.442695
        %v2720 = vpow.pop %v2719
        %v2721 = vmul.f32 %v2718, 1.442695
        %v2722 = vpow.pop %v2721
        %v2723 = vsel %vm2162, %v2720, 0.0
        %2724 = vadd.xlane.f32.xlu0 %v2723
        %v2725 = vpop.xlane.xlu0 %2724
        %v2726 = vsel %vm2162, %v2722, 0.0
        %2727 = vadd.xlane.f32.xlu0 %v2726
        %v2728 = vpop.xlane.xlu0 %2727
        %v2729 = vrcp.pop %v2725
        %v2730 = vrcp.pop %v2728
        %v2731 = vmul.f32 %v2720, %v2729
        %v2732 = vmul.f32 %v2722, %v2730
        %v2733 = vpack.c.bf16 %v2731, %v2731
        %v2734 = vpack.c.bf16 %v2732, %v2732
        %2735 = vrot.lane.b32.xlu0 %v2160, 112
        %v2736 = vpop.permute.xlu0 %2735
        %v2738 = vsel %vm2162, %v2733, 0
        %v2741 = vsel %vm2282, %v2736, 0
        %2743 = vmatprep.subr.bf16.mxu0 0
        %2744 = vmatpush1.bf16.msra.mxu0 %v2741
        %2745 = vmatprep.subr.bf16.mxu0 0
        %2746 = vmatpush1.bf16.msra.mxu0 0
        %2747 = vmatprep.subr.bf16.mxu0 0
        %2748 = vmatpush1.bf16.msra.mxu0 0
        %2749 = vmatprep.subr.bf16.mxu0 0
        %2750 = vmatpush1.bf16.msra.mxu0 0
        %2751 = vmatprep.subr.bf16.mxu0 0
        %2752 = vmatpush1.bf16.msra.mxu0 0
        %2753 = vmatprep.subr.bf16.mxu0 0
        %2754 = vmatpush1.bf16.msra.mxu0 0
        %2755 = vmatprep.subr.bf16.mxu0 0
        %2756 = vmatpush1.bf16.msra.mxu0 0
        %2757 = vmatprep.subr.bf16.mxu0 0
        %2758 = vmatpush1.bf16.msra.mxu0 0
        %2759 = vmatprep.subr.bf16.mxu0 0
        %2760 = vmatpush1.bf16.msra.mxu0 0
        %2761 = vmatprep.subr.bf16.mxu0 0
        %2762 = vmatpush1.bf16.msra.mxu0 0
        %2763 = vmatprep.subr.bf16.mxu0 0
        %2764 = vmatpush1.bf16.msra.mxu0 0
        %2765 = vmatprep.subr.bf16.mxu0 0
        %2766 = vmatpush1.bf16.msra.mxu0 0
        %2767 = vmatprep.subr.bf16.mxu0 0
        %2768 = vmatpush1.bf16.msra.mxu0 0
        %2769 = vmatprep.subr.bf16.mxu0 0
        %2770 = vmatpush1.bf16.msra.mxu0 0
        %2771 = vmatprep.subr.bf16.mxu0 0
        %2772 = vmatpush1.bf16.msra.mxu0 0
        %2773 = vmatprep.subr.bf16.mxu0 0
        %2774 = vmatpush1.bf16.msra.mxu0 0
        %2775 = vmatprep.mubr.bf16.mxu0 0
        %2776 = vmatmul.mubr.bf16.gmra.mrb[0].mxu0 %v2738
        %v2777 = vpop.f32.mrb[0].mxu0
        %v2778 = vadd.f32 0.0, %v2777
        %v2779 = vpop.f32.mrb[0].mxu0
        %v2780 = vpop.f32.mrb[0].mxu0
        %v2781 = vpop.f32.mrb[0].mxu0
        %2782 = vdwg.mxu0
        %2783 = vrot.lane.b32.xlu0 %v2161, 112
        %v2784 = vpop.permute.xlu0 %2783
        %v2786 = vsel %vm2162, %v2734, 0
        %v2789 = vsel %vm2282, %v2784, 0
        %2791 = vmatprep.subr.bf16.mxu0 0
        %2792 = vmatpush1.bf16.msra.mxu0 %v2789
        %2793 = vmatprep.subr.bf16.mxu0 0
        %2794 = vmatpush1.bf16.msra.mxu0 0
        %2795 = vmatprep.subr.bf16.mxu0 0
        %2796 = vmatpush1.bf16.msra.mxu0 0
        %2797 = vmatprep.subr.bf16.mxu0 0
        %2798 = vmatpush1.bf16.msra.mxu0 0
        %2799 = vmatprep.subr.bf16.mxu0 0
        %2800 = vmatpush1.bf16.msra.mxu0 0
        %2801 = vmatprep.subr.bf16.mxu0 0
        %2802 = vmatpush1.bf16.msra.mxu0 0
        %2803 = vmatprep.subr.bf16.mxu0 0
        %2804 = vmatpush1.bf16.msra.mxu0 0
        %2805 = vmatprep.subr.bf16.mxu0 0
        %2806 = vmatpush1.bf16.msra.mxu0 0
        %2807 = vmatprep.subr.bf16.mxu0 0
        %2808 = vmatpush1.bf16.msra.mxu0 0
        %2809 = vmatprep.subr.bf16.mxu0 0
        %2810 = vmatpush1.bf16.msra.mxu0 0
        %2811 = vmatprep.subr.bf16.mxu0 0
        %2812 = vmatpush1.bf16.msra.mxu0 0
        %2813 = vmatprep.subr.bf16.mxu0 0
        %2814 = vmatpush1.bf16.msra.mxu0 0
        %2815 = vmatprep.subr.bf16.mxu0 0
        %2816 = vmatpush1.bf16.msra.mxu0 0
        %2817 = vmatprep.subr.bf16.mxu0 0
        %2818 = vmatpush1.bf16.msra.mxu0 0
        %2819 = vmatprep.subr.bf16.mxu0 0
        %2820 = vmatpush1.bf16.msra.mxu0 0
        %2821 = vmatprep.subr.bf16.mxu0 0
        %2822 = vmatpush1.bf16.msra.mxu0 0
        %2823 = vmatprep.mubr.bf16.mxu0 0
        %2824 = vmatmul.mubr.bf16.gmra.mrb[0].mxu0 %v2786
        %v2825 = vpop.f32.mrb[0].mxu0
        %v2826 = vadd.f32 0.0, %v2825
        %v2827 = vpop.f32.mrb[0].mxu0
        %v2828 = vpop.f32.mrb[0].mxu0
        %v2829 = vpop.f32.mrb[0].mxu0
        %2830 = vdwg.mxu0
        %2833 = vrot.lane.b32.xlu0 %v2778, 16
        %v2834 = vpop.permute.xlu0 %2833
        %2835 = vrot.lane.b32.xlu0 %v2826, 16
        %v2836 = vpop.permute.xlu0 %2835
        %vm2839 = vcmask 195712
        %2840 = vst.msk [vmem:[#allocation6] sm:$0xff] %vm2839, %v2834
        %2841 = vst.msk [vmem:[#allocation6 + $0x8] sm:$0xff] %vm2839, %v2836
        %2842 = vrot.lane.b32.xlu0 %v2156, 104
        %v2843 = vpop.permute.xlu0 %2842
        %2844 = vrot.lane.b32.xlu0 %v2158, 104
        %v2845 = vpop.permute.xlu0 %2844
        %v2847 = vsel %vm2162, %v2843, 0
        %v2850 = vsel %vm2162, %v2845, 0
        %2852 = vmatprep.subr.bf16.mxu0 0
        %2853 = vmatpush1.bf16.xpose.msra.mxu0 %v2850
        %2854 = vmatprep.subr.bf16.mxu0 0
        %2855 = vmatpush1.bf16.xpose.msra.mxu0 0
        %2856 = vmatprep.subr.bf16.mxu0 0
        %2857 = vmatpush1.bf16.xpose.msra.mxu0 0
        %2858 = vmatprep.subr.bf16.mxu0 0
        %2859 = vmatpush1.bf16.xpose.msra.mxu0 0
        %2860 = vmatprep.subr.bf16.mxu0 0
        %2861 = vmatpush1.bf16.xpose.msra.mxu0 0
        %2862 = vmatprep.subr.bf16.mxu0 0
        %2863 = vmatpush1.bf16.xpose.msra.mxu0 0
        %2864 = vmatprep.subr.bf16.mxu0 0
        %2865 = vmatpush1.bf16.xpose.msra.mxu0 0
        %2866 = vmatprep.subr.bf16.mxu0 0
        %2867 = vmatpush1.bf16.xpose.msra.mxu0 0
        %2868 = vmatprep.subr.bf16.mxu0 0
        %2869 = vmatpush1.bf16.xpose.msra.mxu0 0
        %2870 = vmatprep.subr.bf16.mxu0 0
        %2871 = vmatpush1.bf16.xpose.msra.mxu0 0
        %2872 = vmatprep.subr.bf16.mxu0 0
        %2873 = vmatpush1.bf16.xpose.msra.mxu0 0
        %2874 = vmatprep.subr.bf16.mxu0 0
        %2875 = vmatpush1.bf16.xpose.msra.mxu0 0
        %2876 = vmatprep.subr.bf16.mxu0 0
        %2877 = vmatpush1.bf16.xpose.msra.mxu0 0
        %2878 = vmatprep.subr.bf16.mxu0 0
        %2879 = vmatpush1.bf16.xpose.msra.mxu0 0
        %2880 = vmatprep.subr.bf16.mxu0 0
        %2881 = vmatpush1.bf16.xpose.msra.mxu0 0
        %2882 = vmatprep.subr.bf16.mxu0 0
        %2883 = vmatpush1.bf16.xpose.msra.mxu0 0
        %2884 = vmatprep.mubr.bf16.mxu0 0
        %2885 = vmatmul.mubr.bf16.gmra.mrb[0].mxu0 %v2847
        %v2886 = vpop.f32.mrb[0].mxu0
        %v2887 = vadd.f32 %v1948, %v2886
        %v2888 = vpop.f32.mrb[0].mxu0
        %v2889 = vpop.f32.mrb[0].mxu0
        %v2890 = vpop.f32.mrb[0].mxu0
        %2891 = vdwg.mxu0
        %2892 = vrot.lane.b32.xlu0 %v2157, 104
        %v2893 = vpop.permute.xlu0 %2892
        %2894 = vrot.lane.b32.xlu0 %v2159, 104
        %v2895 = vpop.permute.xlu0 %2894
        %v2897 = vsel %vm2162, %v2893, 0
        %v2900 = vsel %vm2162, %v2895, 0
        %2902 = vmatprep.subr.bf16.mxu0 0
        %2903 = vmatpush1.bf16.xpose.msra.mxu0 %v2900
        %2904 = vmatprep.subr.bf16.mxu0 0
        %2905 = vmatpush1.bf16.xpose.msra.mxu0 0
        %2906 = vmatprep.subr.bf16.mxu0 0
        %2907 = vmatpush1.bf16.xpose.msra.mxu0 0
        %2908 = vmatprep.subr.bf16.mxu0 0
        %2909 = vmatpush1.bf16.xpose.msra.mxu0 0
        %2910 = vmatprep.subr.bf16.mxu0 0
        %2911 = vmatpush1.bf16.xpose.msra.mxu0 0
        %2912 = vmatprep.subr.bf16.mxu0 0
        %2913 = vmatpush1.bf16.xpose.msra.mxu0 0
        %2914 = vmatprep.subr.bf16.mxu0 0
        %2915 = vmatpush1.bf16.xpose.msra.mxu0 0
        %2916 = vmatprep.subr.bf16.mxu0 0
        %2917 = vmatpush1.bf16.xpose.msra.mxu0 0
        %2918 = vmatprep.subr.bf16.mxu0 0
        %2919 = vmatpush1.bf16.xpose.msra.mxu0 0
        %2920 = vmatprep.subr.bf16.mxu0 0
        %2921 = vmatpush1.bf16.xpose.msra.mxu0 0
        %2922 = vmatprep.subr.bf16.mxu0 0
        %2923 = vmatpush1.bf16.xpose.msra.mxu0 0
        %2924 = vmatprep.subr.bf16.mxu0 0
        %2925 = vmatpush1.bf16.xpose.msra.mxu0 0
        %2926 = vmatprep.subr.bf16.mxu0 0
        %2927 = vmatpush1.bf16.xpose.msra.mxu0 0
        %2928 = vmatprep.subr.bf16.mxu0 0
        %2929 = vmatpush1.bf16.xpose.msra.mxu0 0
        %2930 = vmatprep.subr.bf16.mxu0 0
        %2931 = vmatpush1.bf16.xpose.msra.mxu0 0
        %2932 = vmatprep.subr.bf16.mxu0 0
        %2933 = vmatpush1.bf16.xpose.msra.mxu0 0
        %2934 = vmatprep.mubr.bf16.mxu0 0
        %2935 = vmatmul.mubr.bf16.gmra.mrb[0].mxu0 %v2897
        %v2936 = vpop.f32.mrb[0].mxu0
        %v2937 = vadd.f32 %v1949, %v2936
        %v2938 = vpop.f32.mrb[0].mxu0
        %v2939 = vpop.f32.mrb[0].mxu0
        %v2940 = vpop.f32.mrb[0].mxu0
        %2941 = vdwg.mxu0
        %v2942 = vsel %vm2162, %v2887, -inf
        %2943 = vmax.xlane.f32.xlu0 %v2942
        %v2944 = vpop.xlane.xlu0 %2943
        %v2945 = vsel %vm2162, %v2937, -inf
        %2946 = vmax.xlane.f32.xlu0 %v2945
        %v2947 = vpop.xlane.xlu0 %2946
        %v2948 = vsub.f32 %v2887, %v2944
        %v2949 = vsub.f32 %v2937, %v2947
        %v2950 = vmul.f32 %v2948, 1.442695
        %v2951 = vpow.pop %v2950
        %v2952 = vmul.f32 %v2949, 1.442695
        %v2953 = vpow.pop %v2952
        %v2954 = vsel %vm2162, %v2951, 0.0
        %2955 = vadd.xlane.f32.xlu0 %v2954
        %v2956 = vpop.xlane.xlu0 %2955
        %v2957 = vsel %vm2162, %v2953, 0.0
        %2958 = vadd.xlane.f32.xlu0 %v2957
        %v2959 = vpop.xlane.xlu0 %2958
        %v2960 = vrcp.pop %v2956
        %v2961 = vrcp.pop %v2959
        %v2962 = vmul.f32 %v2951, %v2960
        %v2963 = vmul.f32 %v2953, %v2961
        %v2964 = vpack.c.bf16 %v2962, %v2962
        %v2965 = vpack.c.bf16 %v2963, %v2963
        %2966 = vrot.lane.b32.xlu0 %v2160, 104
        %v2967 = vpop.permute.xlu0 %2966
        %v2969 = vsel %vm2162, %v2964, 0
        %v2972 = vsel %vm2282, %v2967, 0
        %2974 = vmatprep.subr.bf16.mxu0 0
        %2975 = vmatpush1.bf16.msra.mxu0 %v2972
        %2976 = vmatprep.subr.bf16.mxu0 0
        %2977 = vmatpush1.bf16.msra.mxu0 0
        %2978 = vmatprep.subr.bf16.mxu0 0
        %2979 = vmatpush1.bf16.msra.mxu0 0
        %2980 = vmatprep.subr.bf16.mxu0 0
        %2981 = vmatpush1.bf16.msra.mxu0 0
        %2982 = vmatprep.subr.bf16.mxu0 0
        %2983 = vmatpush1.bf16.msra.mxu0 0
        %2984 = vmatprep.subr.bf16.mxu0 0
        %2985 = vmatpush1.bf16.msra.mxu0 0
        %2986 = vmatprep.subr.bf16.mxu0 0
        %2987 = vmatpush1.bf16.msra.mxu0 0
        %2988 = vmatprep.subr.bf16.mxu0 0
        %2989 = vmatpush1.bf16.msra.mxu0 0
        %2990 = vmatprep.subr.bf16.mxu0 0
        %2991 = vmatpush1.bf16.msra.mxu0 0
        %2992 = vmatprep.subr.bf16.mxu0 0
        %2993 = vmatpush1.bf16.msra.mxu0 0
        %2994 = vmatprep.subr.bf16.mxu0 0
        %2995 = vmatpush1.bf16.msra.mxu0 0
        %2996 = vmatprep.subr.bf16.mxu0 0
        %2997 = vmatpush1.bf16.msra.mxu0 0
        %2998 = vmatprep.subr.bf16.mxu0 0
        %2999 = vmatpush1.bf16.msra.mxu0 0
        %3000 = vmatprep.subr.bf16.mxu0 0
        %3001 = vmatpush1.bf16.msra.mxu0 0
        %3002 = vmatprep.subr.bf16.mxu0 0
        %3003 = vmatpush1.bf16.msra.mxu0 0
        %3004 = vmatprep.subr.bf16.mxu0 0
        %3005 = vmatpush1.bf16.msra.mxu0 0
        %3006 = vmatprep.mubr.bf16.mxu0 0
        %3007 = vmatmul.mubr.bf16.gmra.mrb[0].mxu0 %v2969
        %v3008 = vpop.f32.mrb[0].mxu0
        %v3009 = vadd.f32 0.0, %v3008
        %v3010 = vpop.f32.mrb[0].mxu0
        %v3011 = vpop.f32.mrb[0].mxu0
        %v3012 = vpop.f32.mrb[0].mxu0
        %3013 = vdwg.mxu0
        %3014 = vrot.lane.b32.xlu0 %v2161, 104
        %v3015 = vpop.permute.xlu0 %3014
        %v3017 = vsel %vm2162, %v2965, 0
        %v3020 = vsel %vm2282, %v3015, 0
        %3022 = vmatprep.subr.bf16.mxu0 0
        %3023 = vmatpush1.bf16.msra.mxu0 %v3020
        %3024 = vmatprep.subr.bf16.mxu0 0
        %3025 = vmatpush1.bf16.msra.mxu0 0
        %3026 = vmatprep.subr.bf16.mxu0 0
        %3027 = vmatpush1.bf16.msra.mxu0 0
        %3028 = vmatprep.subr.bf16.mxu0 0
        %3029 = vmatpush1.bf16.msra.mxu0 0
        %3030 = vmatprep.subr.bf16.mxu0 0
        %3031 = vmatpush1.bf16.msra.mxu0 0
        %3032 = vmatprep.subr.bf16.mxu0 0
        %3033 = vmatpush1.bf16.msra.mxu0 0
        %3034 = vmatprep.subr.bf16.mxu0 0
        %3035 = vmatpush1.bf16.msra.mxu0 0
        %3036 = vmatprep.subr.bf16.mxu0 0
        %3037 = vmatpush1.bf16.msra.mxu0 0
        %3038 = vmatprep.subr.bf16.mxu0 0
        %3039 = vmatpush1.bf16.msra.mxu0 0
        %3040 = vmatprep.subr.bf16.mxu0 0
        %3041 = vmatpush1.bf16.msra.mxu0 0
        %3042 = vmatprep.subr.bf16.mxu0 0
        %3043 = vmatpush1.bf16.msra.mxu0 0
        %3044 = vmatprep.subr.bf16.mxu0 0
        %3045 = vmatpush1.bf16.msra.mxu0 0
        %3046 = vmatprep.subr.bf16.mxu0 0
        %3047 = vmatpush1.bf16.msra.mxu0 0
        %3048 = vmatprep.subr.bf16.mxu0 0
        %3049 = vmatpush1.bf16.msra.mxu0 0
        %3050 = vmatprep.subr.bf16.mxu0 0
        %3051 = vmatpush1.bf16.msra.mxu0 0
        %3052 = vmatprep.subr.bf16.mxu0 0
        %3053 = vmatpush1.bf16.msra.mxu0 0
        %3054 = vmatprep.mubr.bf16.mxu0 0
        %3055 = vmatmul.mubr.bf16.gmra.mrb[0].mxu0 %v3017
        %v3056 = vpop.f32.mrb[0].mxu0
        %v3057 = vadd.f32 0.0, %v3056
        %v3058 = vpop.f32.mrb[0].mxu0
        %v3059 = vpop.f32.mrb[0].mxu0
        %v3060 = vpop.f32.mrb[0].mxu0
        %3061 = vdwg.mxu0
        %3064 = vrot.lane.b32.xlu0 %v3009, 24
        %v3065 = vpop.permute.xlu0 %3064
        %3066 = vrot.lane.b32.xlu0 %v3057, 24
        %v3067 = vpop.permute.xlu0 %3066
        %vm3070 = vcmask 261312
        %3071 = vst.msk [vmem:[#allocation6] sm:$0xff] %vm3070, %v3065
        %3072 = vst.msk [vmem:[#allocation6 + $0x8] sm:$0xff] %vm3070, %v3067
        %v3073 = vld [vmem:[#allocation6] sm:$0xff]
        %v3074 = vld [vmem:[#allocation6 + $0x8] sm:$0xff]
        %v3075 = vpack.c.bf16 %v3074, %v3073
        %v3077 = vlaneseq
        %v3078 = vshrl.u32 %v3077, 7
        %v3079 = vsub.s32 0, %v3078
        %v3080 = vrot.slane %v1971, %v3079
        %v3086 = vunpack.c.l.b16 %v1967
        %v3087 = vunpack.c.l.b16 %v1968
        %v3088 = vunpack.c.l.b16 %v1969
        %v3089 = vunpack.c.l.b16 %v1970
        %v3090 = vpack.c.b16 %v3087, %v3086
        %v3091 = vpack.c.b16 %v3089, %v3088
        %v3095 = vsel %vm1993, %v3075, 0
        %3097 = vmatprep.subr.bf16.mxu0 0
        %3098 = vmatpush1.bf16.msra.mxu0 %v3090
        %3099 = vmatprep.subr.bf16.mxu0 0
        %3100 = vmatpush1.bf16.msra.mxu0 %v3091
        %3101 = vmatprep.subr.bf16.mxu0 0
        %3102 = vmatpush1.bf16.msra.mxu0 0
        %3103 = vmatprep.subr.bf16.mxu0 0
        %3104 = vmatpush1.bf16.msra.mxu0 0
        %3105 = vmatprep.subr.bf16.mxu0 0
        %3106 = vmatpush1.bf16.msra.mxu0 0
        %3107 = vmatprep.subr.bf16.mxu0 0
        %3108 = vmatpush1.bf16.msra.mxu0 0
        %3109 = vmatprep.subr.bf16.mxu0 0
        %3110 = vmatpush1.bf16.msra.mxu0 0
        %3111 = vmatprep.subr.bf16.mxu0 0
        %3112 = vmatpush1.bf16.msra.mxu0 0
        %3113 = vmatprep.subr.bf16.mxu0 0
        %3114 = vmatpush1.bf16.msra.mxu0 0
        %3115 = vmatprep.subr.bf16.mxu0 0
        %3116 = vmatpush1.bf16.msra.mxu0 0
        %3117 = vmatprep.subr.bf16.mxu0 0
        %3118 = vmatpush1.bf16.msra.mxu0 0
        %3119 = vmatprep.subr.bf16.mxu0 0
        %3120 = vmatpush1.bf16.msra.mxu0 0
        %3121 = vmatprep.subr.bf16.mxu0 0
        %3122 = vmatpush1.bf16.msra.mxu0 0
        %3123 = vmatprep.subr.bf16.mxu0 0
        %3124 = vmatpush1.bf16.msra.mxu0 0
        %3125 = vmatprep.subr.bf16.mxu0 0
        %3126 = vmatpush1.bf16.msra.mxu0 0
        %3127 = vmatprep.subr.bf16.mxu0 0
        %3128 = vmatpush1.bf16.msra.mxu0 0
        %3129 = vmatprep.mubr.bf16.mxu0 0
        %3130 = vmatmul.mubr.bf16.gmra.mrb[0].mxu0 %v3095
        %v3131 = vpop.f32.mrb[0].mxu0
        %v3132 = vadd.f32 %v3080, %v3131
        %v3133 = vpop.f32.mrb[0].mxu0
        %v3134 = vpop.f32.mrb[0].mxu0
        %v3135 = vadd.f32 %v3080, %v3134
        %v3136 = vpop.f32.mrb[0].mxu0
        %3137 = vdwg.mxu0
        %v3138 = vadd.f32 %v3132, %v1940
        %v3139 = vadd.f32 %v3135, %v1941
        %v3140 = vsel %vm1993, %v3138, 0.0
        %3141 = vadd.xlane.f32.xlu0 %v3140
        %v3142 = vpop.xlane.xlu0 %3141
        %v3143 = vsel %vm1993, %v3139, 0.0
        %3144 = vadd.xlane.f32.xlu0 %v3143
        %v3145 = vpop.xlane.xlu0 %3144
        %v3146 = vrcp.pop 32.0
        %v3147 = vmul.f32 %v3142, %v3146
        %v3148 = vmul.f32 %v3145, %v3146
        %v3149 = vsub.f32 %v3138, %v3147
        %v3150 = vsub.f32 %v3139, %v3148
        %v3151 = vmul.f32 %v3149, %v3149
        %v3152 = vmul.f32 %v3150, %v3150
        %v3153 = vsel %vm1993, %v3151, 0.0
        %3154 = vadd.xlane.f32.xlu0 %v3153
        %v3155 = vpop.xlane.xlu0 %3154
        %v3156 = vsel %vm1993, %v3152, 0.0
        %3157 = vadd.xlane.f32.xlu0 %v3156
        %v3158 = vpop.xlane.xlu0 %3157
        %v3159 = vmul.f32 %v3155, %v3146
        %v3160 = vmul.f32 %v3158, %v3146
        %v3161 = vadd.f32 %v3159, 1e-06
        %v3162 = vadd.f32 %v3160, 1e-06
        %v3163 = vrsqrt.pop %v3161
        %v3164 = vrsqrt.pop %v3162
        %v3165 = vmul.f32 %v3149, %v3163
        %v3166 = vmul.f32 %v3150, %v3164
        %v3168 = vlaneseq
        %v3169 = vshrl.u32 %v3168, 7
        %v3170 = vsub.s32 0, %v3169
        %v3171 = vrot.slane %v1972, %v3170
        %v3173 = vmul.f32 %v3165, %v3171
        %v3174 = vmul.f32 %v3166, %v3171
        %v3176 = vlaneseq
        %v3177 = vshrl.u32 %v3176, 7
        %v3178 = vsub.s32 0, %v3177
        %v3179 = vrot.slane %v1973, %v3178
        %v3181 = vadd.f32 %v3173, %v3179
        %v3182 = vadd.f32 %v3174, %v3179
        %3184 = vset.pattern.permute.xlu0 0
        %3185 = vperm.xlu0 %3184, %v1946
        %v3186 = vpop.permute.xlu0 %3185
        %3189 = vset.pattern.permute.xlu0 0
        %3190 = vperm.xlu0 %3189, %v1947
        %v3191 = vpop.permute.xlu0 %3190
        %v3193 = vmul.f32 %v3181, %v3186
        %v3194 = vmul.f32 %v3182, %v3191
        %v3195 = vld [vmem:[%s1509] sm:$0xf]
        %v3196 = vld [vmem:[%s1509 + $0x4] sm:$0xf]
        %v3197 = vld [vmem:[%s1509 + $0x8] sm:$0xf]
        %v3198 = vld [vmem:[%s1509 + $0xc] sm:$0xf]
        %v3199 = vld [vmem:[%s1518] sm:$0xf]
        %v3200 = vld [vmem:[%s1518 + $0x4] sm:$0xf]
        %v3201 = vld [vmem:[%s1518 + $0x8] sm:$0xf]
        %v3202 = vld [vmem:[%s1518 + $0xc] sm:$0xf]
        %v3203 = vld [vmem:[%s1527] sm:$0xf]
        %v3204 = vld [vmem:[%s1527 + $0x4] sm:$0xf]
        %v3205 = vld [vmem:[%s1527 + $0x8] sm:$0xf]
        %v3206 = vld [vmem:[%s1527 + $0xc] sm:$0xf]
        %v3207 = vld [vmem:[%s1535] sm:$0x1]
        %v3208 = vld [vmem:[%s1543] sm:$0x1]
        %v3209 = vld [vmem:[%s1775] sm:$0x1]
        %v3210 = vld [vmem:[%s1780] sm:$0xf]
        %v3211 = vld [vmem:[%s1780 + $0x4] sm:$0xf]
        %v3212 = vld [vmem:[%s1780 + $0x8] sm:$0xf]
        %v3213 = vld [vmem:[%s1780 + $0xc] sm:$0xf]
        %v3214 = vld [vmem:[%s1783] sm:$0x1]
        %v3215 = vld [vmem:[%s1786] sm:$0x1]
        %v3216 = vld [vmem:[%s1789] sm:$0x1]
        %v3217 = vpack.c.bf16 %v3194, %v3193
        %v3218 = vpack.c.bf16 %v1943, %v1942
        %v3219 = vpack.c.bf16 %v1945, %v1944
        %v3221 = vlaneseq
        %v3222 = vshrl.u32 %v3221, 7
        %v3223 = vsub.s32 0, %v3222
        %v3224 = vrot.slane %v3207, %v3223
        %v3230 = vunpack.c.l.b16 %v3195
        %v3231 = vunpack.c.l.b16 %v3196
        %v3232 = vunpack.c.l.b16 %v3197
        %v3233 = vunpack.c.l.b16 %v3198
        %v3234 = vpack.c.b16 %v3231, %v3230
        %v3235 = vpack.c.b16 %v3233, %v3232
        %v3239 = vsel %vm1993, %v3217, 0
        %3241 = vmatprep.subr.bf16.mxu0 0
        %3242 = vmatpush1.bf16.msra.mxu0 %v3234
        %3243 = vmatprep.subr.bf16.mxu0 0
        %3244 = vmatpush1.bf16.msra.mxu0 %v3235
        %3245 = vmatprep.subr.bf16.mxu0 0
        %3246 = vmatpush1.bf16.msra.mxu0 0
        %3247 = vmatprep.subr.bf16.mxu0 0
        %3248 = vmatpush1.bf16.msra.mxu0 0
        %3249 = vmatprep.subr.bf16.mxu0 0
        %3250 = vmatpush1.bf16.msra.mxu0 0
        %3251 = vmatprep.subr.bf16.mxu0 0
        %3252 = vmatpush1.bf16.msra.mxu0 0
        %3253 = vmatprep.subr.bf16.mxu0 0
        %3254 = vmatpush1.bf16.msra.mxu0 0
        %3255 = vmatprep.subr.bf16.mxu0 0
        %3256 = vmatpush1.bf16.msra.mxu0 0
        %3257 = vmatprep.subr.bf16.mxu0 0
        %3258 = vmatpush1.bf16.msra.mxu0 0
        %3259 = vmatprep.subr.bf16.mxu0 0
        %3260 = vmatpush1.bf16.msra.mxu0 0
        %3261 = vmatprep.subr.bf16.mxu0 0
        %3262 = vmatpush1.bf16.msra.mxu0 0
        %3263 = vmatprep.subr.bf16.mxu0 0
        %3264 = vmatpush1.bf16.msra.mxu0 0
        %3265 = vmatprep.subr.bf16.mxu0 0
        %3266 = vmatpush1.bf16.msra.mxu0 0
        %3267 = vmatprep.subr.bf16.mxu0 0
        %3268 = vmatpush1.bf16.msra.mxu0 0
        %3269 = vmatprep.subr.bf16.mxu0 0
        %3270 = vmatpush1.bf16.msra.mxu0 0
        %3271 = vmatprep.subr.bf16.mxu0 0
        %3272 = vmatpush1.bf16.msra.mxu0 0
        %3273 = vmatprep.mubr.bf16.mxu0 0
        %3274 = vmatmul.mubr.bf16.gmra.mrb[0].mxu0 %v3239
        %v3275 = vpop.f32.mrb[0].mxu0
        %v3276 = vadd.f32 %v3224, %v3275
        %v3277 = vpop.f32.mrb[0].mxu0
        %v3278 = vpop.f32.mrb[0].mxu0
        %v3279 = vadd.f32 %v3224, %v3278
        %v3280 = vpop.f32.mrb[0].mxu0
        %3281 = vdwg.mxu0
        %v3283 = vlaneseq
        %v3284 = vshrl.u32 %v3283, 7
        %v3285 = vsub.s32 0, %v3284
        %v3286 = vrot.slane %v3208, %v3285
        %v3292 = vunpack.c.l.b16 %v3199
        %v3293 = vunpack.c.l.b16 %v3200
        %v3294 = vunpack.c.l.b16 %v3201
        %v3295 = vunpack.c.l.b16 %v3202
        %v3296 = vpack.c.b16 %v3293, %v3292
        %v3297 = vpack.c.b16 %v3295, %v3294
        %v3301 = vsel %vm1993, %v3218, 0
        %v3304 = vsel %vm1993, %v3219, 0
        %3306 = vmatprep.subr.bf16.mxu0 0
        %3307 = vmatpush1.bf16.msra.mxu0 %v3296
        %3308 = vmatprep.subr.bf16.mxu0 0
        %3309 = vmatpush1.bf16.msra.mxu0 %v3297
        %3310 = vmatprep.subr.bf16.mxu0 0
        %3311 = vmatpush1.bf16.msra.mxu0 0
        %3312 = vmatprep.subr.bf16.mxu0 0
        %3313 = vmatpush1.bf16.msra.mxu0 0
        %3314 = vmatprep.subr.bf16.mxu0 0
        %3315 = vmatpush1.bf16.msra.mxu0 0
        %3316 = vmatprep.subr.bf16.mxu0 0
        %3317 = vmatpush1.bf16.msra.mxu0 0
        %3318 = vmatprep.subr.bf16.mxu0 0
        %3319 = vmatpush1.bf16.msra.mxu0 0
        %3320 = vmatprep.subr.bf16.mxu0 0
        %3321 = vmatpush1.bf16.msra.mxu0 0
        %3322 = vmatprep.subr.bf16.mxu0 0
        %3323 = vmatpush1.bf16.msra.mxu0 0
        %3324 = vmatprep.subr.bf16.mxu0 0
        %3325 = vmatpush1.bf16.msra.mxu0 0
        %3326 = vmatprep.subr.bf16.mxu0 0
        %3327 = vmatpush1.bf16.msra.mxu0 0
        %3328 = vmatprep.subr.bf16.mxu0 0
        %3329 = vmatpush1.bf16.msra.mxu0 0
        %3330 = vmatprep.subr.bf16.mxu0 0
        %3331 = vmatpush1.bf16.msra.mxu0 0
        %3332 = vmatprep.subr.bf16.mxu0 0
        %3333 = vmatpush1.bf16.msra.mxu0 0
        %3334 = vmatprep.subr.bf16.mxu0 0
        %3335 = vmatpush1.bf16.msra.mxu0 0
        %3336 = vmatprep.subr.bf16.mxu0 0
        %3337 = vmatpush1.bf16.msra.mxu0 0
        %3338 = vmatprep.mubr.bf16.mxu0 0
        %3339 = vmatmul.mubr.bf16.gmra.mrb[0].mxu0 %v3301
        %v3340 = vpop.f32.mrb[0].mxu0
        %v3341 = vadd.f32 %v3286, %v3340
        %v3342 = vpop.f32.mrb[0].mxu0
        %v3343 = vpop.f32.mrb[0].mxu0
        %v3344 = vadd.f32 %v3286, %v3343
        %v3345 = vpop.f32.mrb[0].mxu0
        %3346 = vmatprep.mubr.bf16.mxu0 0
        %3347 = vmatmul.mubr.bf16.gmra.mrb[0].mxu0 %v3304
        %v3348 = vpop.f32.mrb[0].mxu0
        %v3349 = vadd.f32 %v3286, %v3348
        %v3350 = vpop.f32.mrb[0].mxu0
        %v3351 = vpop.f32.mrb[0].mxu0
        %v3352 = vadd.f32 %v3286, %v3351
        %v3353 = vpop.f32.mrb[0].mxu0
        %3354 = vdwg.mxu0
        %v3356 = vlaneseq
        %v3357 = vshrl.u32 %v3356, 7
        %v3358 = vsub.s32 0, %v3357
        %v3359 = vrot.slane %v3209, %v3358
        %v3365 = vunpack.c.l.b16 %v3203
        %v3366 = vunpack.c.l.b16 %v3204
        %v3367 = vunpack.c.l.b16 %v3205
        %v3368 = vunpack.c.l.b16 %v3206
        %v3369 = vpack.c.b16 %v3366, %v3365
        %v3370 = vpack.c.b16 %v3368, %v3367
        %3373 = vmatprep.subr.bf16.mxu0 0
        %3374 = vmatpush1.bf16.msra.mxu0 %v3369
        %3375 = vmatprep.subr.bf16.mxu0 0
        %3376 = vmatpush1.bf16.msra.mxu0 %v3370
        %3377 = vmatprep.subr.bf16.mxu0 0
        %3378 = vmatpush1.bf16.msra.mxu0 0
        %3379 = vmatprep.subr.bf16.mxu0 0
        %3380 = vmatpush1.bf16.msra.mxu0 0
        %3381 = vmatprep.subr.bf16.mxu0 0
        %3382 = vmatpush1.bf16.msra.mxu0 0
        %3383 = vmatprep.subr.bf16.mxu0 0
        %3384 = vmatpush1.bf16.msra.mxu0 0
        %3385 = vmatprep.subr.bf16.mxu0 0
        %3386 = vmatpush1.bf16.msra.mxu0 0
        %3387 = vmatprep.subr.bf16.mxu0 0
        %3388 = vmatpush1.bf16.msra.mxu0 0
        %3389 = vmatprep.subr.bf16.mxu0 0
        %3390 = vmatpush1.bf16.msra.mxu0 0
        %3391 = vmatprep.subr.bf16.mxu0 0
        %3392 = vmatpush1.bf16.msra.mxu0 0
        %3393 = vmatprep.subr.bf16.mxu0 0
        %3394 = vmatpush1.bf16.msra.mxu0 0
        %3395 = vmatprep.subr.bf16.mxu0 0
        %3396 = vmatpush1.bf16.msra.mxu0 0
        %3397 = vmatprep.subr.bf16.mxu0 0
        %3398 = vmatpush1.bf16.msra.mxu0 0
        %3399 = vmatprep.subr.bf16.mxu0 0
        %3400 = vmatpush1.bf16.msra.mxu0 0
        %3401 = vmatprep.subr.bf16.mxu0 0
        %3402 = vmatpush1.bf16.msra.mxu0 0
        %3403 = vmatprep.subr.bf16.mxu0 0
        %3404 = vmatpush1.bf16.msra.mxu0 0
        %3405 = vmatprep.mubr.bf16.mxu0 0
        %3406 = vmatmul.mubr.bf16.gmra.mrb[0].mxu0 %v3301
        %v3407 = vpop.f32.mrb[0].mxu0
        %v3408 = vadd.f32 %v3359, %v3407
        %v3409 = vpop.f32.mrb[0].mxu0
        %v3410 = vpop.f32.mrb[0].mxu0
        %v3411 = vadd.f32 %v3359, %v3410
        %v3412 = vpop.f32.mrb[0].mxu0
        %3413 = vmatprep.mubr.bf16.mxu0 0
        %3414 = vmatmul.mubr.bf16.gmra.mrb[0].mxu0 %v3304
        %v3415 = vpop.f32.mrb[0].mxu0
        %v3416 = vadd.f32 %v3359, %v3415
        %v3417 = vpop.f32.mrb[0].mxu0
        %v3418 = vpop.f32.mrb[0].mxu0
        %v3419 = vadd.f32 %v3359, %v3418
        %v3420 = vpop.f32.mrb[0].mxu0
        %3421 = vdwg.mxu0
        %v3422 = vpack.c.bf16 %v3276, %v3276
        %v3423 = vpack.c.bf16 %v3279, %v3279
        %v3424 = vpack.c.bf16 %v3344, %v3341
        %v3425 = vpack.c.bf16 %v3352, %v3349
        %v3426 = vpack.c.bf16 %v3411, %v3408
        %v3427 = vpack.c.bf16 %v3419, %v3416
        %v3430 = vlaneseq
        %v3431 = vshrl.u32 %v3430, 7
        %v3432 = vsub.s32 0, %v3431
        %v3433 = vrot.slane %v1950, %v3432
        %v3434 = vlaneseq
        %v3435 = vshrl.u32 %v3434, 7
        %v3436 = vsub.s32 0, %v3435
        %v3437 = vrot.slane %v1951, %v3436
        %v3441 = vsel %vm2162, %v3422, 0
        %v3444 = vsel %vm2162, %v3424, 0
        %3446 = vmatprep.subr.bf16.mxu0 0
        %3447 = vmatpush1.bf16.xpose.msra.mxu0 %v3444
        %3448 = vmatprep.subr.bf16.mxu0 0
        %3449 = vmatpush1.bf16.xpose.msra.mxu0 0
        %3450 = vmatprep.subr.bf16.mxu0 0
        %3451 = vmatpush1.bf16.xpose.msra.mxu0 0
        %3452 = vmatprep.subr.bf16.mxu0 0
        %3453 = vmatpush1.bf16.xpose.msra.mxu0 0
        %3454 = vmatprep.subr.bf16.mxu0 0
        %3455 = vmatpush1.bf16.xpose.msra.mxu0 0
        %3456 = vmatprep.subr.bf16.mxu0 0
        %3457 = vmatpush1.bf16.xpose.msra.mxu0 0
        %3458 = vmatprep.subr.bf16.mxu0 0
        %3459 = vmatpush1.bf16.xpose.msra.mxu0 0
        %3460 = vmatprep.subr.bf16.mxu0 0
        %3461 = vmatpush1.bf16.xpose.msra.mxu0 0
        %3462 = vmatprep.subr.bf16.mxu0 0
        %3463 = vmatpush1.bf16.xpose.msra.mxu0 0
        %3464 = vmatprep.subr.bf16.mxu0 0
        %3465 = vmatpush1.bf16.xpose.msra.mxu0 0
        %3466 = vmatprep.subr.bf16.mxu0 0
        %3467 = vmatpush1.bf16.xpose.msra.mxu0 0
        %3468 = vmatprep.subr.bf16.mxu0 0
        %3469 = vmatpush1.bf16.xpose.msra.mxu0 0
        %3470 = vmatprep.subr.bf16.mxu0 0
        %3471 = vmatpush1.bf16.xpose.msra.mxu0 0
        %3472 = vmatprep.subr.bf16.mxu0 0
        %3473 = vmatpush1.bf16.xpose.msra.mxu0 0
        %3474 = vmatprep.subr.bf16.mxu0 0
        %3475 = vmatpush1.bf16.xpose.msra.mxu0 0
        %3476 = vmatprep.subr.bf16.mxu0 0
        %3477 = vmatpush1.bf16.xpose.msra.mxu0 0
        %3478 = vmatprep.mubr.bf16.mxu0 0
        %3479 = vmatmul.mubr.bf16.gmra.mrb[0].mxu0 %v3441
        %v3480 = vpop.f32.mrb[0].mxu0
        %v3481 = vadd.f32 %v3433, %v3480
        %v3482 = vpop.f32.mrb[0].mxu0
        %v3483 = vpop.f32.mrb[0].mxu0
        %v3484 = vpop.f32.mrb[0].mxu0
        %3485 = vdwg.mxu0
        %v3487 = vsel %vm2162, %v3423, 0
        %v3490 = vsel %vm2162, %v3425, 0
        %3492 = vmatprep.subr.bf16.mxu0 0
        %3493 = vmatpush1.bf16.xpose.msra.mxu0 %v3490
        %3494 = vmatprep.subr.bf16.mxu0 0
        %3495 = vmatpush1.bf16.xpose.msra.mxu0 0
        %3496 = vmatprep.subr.bf16.mxu0 0
        %3497 = vmatpush1.bf16.xpose.msra.mxu0 0
        %3498 = vmatprep.subr.bf16.mxu0 0
        %3499 = vmatpush1.bf16.xpose.msra.mxu0 0
        %3500 = vmatprep.subr.bf16.mxu0 0
        %3501 = vmatpush1.bf16.xpose.msra.mxu0 0
        %3502 = vmatprep.subr.bf16.mxu0 0
        %3503 = vmatpush1.bf16.xpose.msra.mxu0 0
        %3504 = vmatprep.subr.bf16.mxu0 0
        %3505 = vmatpush1.bf16.xpose.msra.mxu0 0
        %3506 = vmatprep.subr.bf16.mxu0 0
        %3507 = vmatpush1.bf16.xpose.msra.mxu0 0
        %3508 = vmatprep.subr.bf16.mxu0 0
        %3509 = vmatpush1.bf16.xpose.msra.mxu0 0
        %3510 = vmatprep.subr.bf16.mxu0 0
        %3511 = vmatpush1.bf16.xpose.msra.mxu0 0
        %3512 = vmatprep.subr.bf16.mxu0 0
        %3513 = vmatpush1.bf16.xpose.msra.mxu0 0
        %3514 = vmatprep.subr.bf16.mxu0 0
        %3515 = vmatpush1.bf16.xpose.msra.mxu0 0
        %3516 = vmatprep.subr.bf16.mxu0 0
        %3517 = vmatpush1.bf16.xpose.msra.mxu0 0
        %3518 = vmatprep.subr.bf16.mxu0 0
        %3519 = vmatpush1.bf16.xpose.msra.mxu0 0
        %3520 = vmatprep.subr.bf16.mxu0 0
        %3521 = vmatpush1.bf16.xpose.msra.mxu0 0
        %3522 = vmatprep.subr.bf16.mxu0 0
        %3523 = vmatpush1.bf16.xpose.msra.mxu0 0
        %3524 = vmatprep.mubr.bf16.mxu0 0
        %3525 = vmatmul.mubr.bf16.gmra.mrb[0].mxu0 %v3487
        %v3526 = vpop.f32.mrb[0].mxu0
        %v3527 = vadd.f32 %v3437, %v3526
        %v3528 = vpop.f32.mrb[0].mxu0
        %v3529 = vpop.f32.mrb[0].mxu0
        %v3530 = vpop.f32.mrb[0].mxu0
        %3531 = vdwg.mxu0
        %vm3532 = vcmask 130048
        %v3533 = vsel %vm3532, %v3481, -inf
        %3534 = vmax.xlane.f32.xlu0 %v3533
        %v3535 = vpop.xlane.xlu0 %3534
        %v3536 = vsel %vm3532, %v3527, -inf
        %3537 = vmax.xlane.f32.xlu0 %v3536
        %v3538 = vpop.xlane.xlu0 %3537
        %v3539 = vsub.f32 %v3481, %v3535
        %v3540 = vsub.f32 %v3527, %v3538
        %v3541 = vmul.f32 %v3539, 1.442695
        %v3542 = vpow.pop %v3541
        %v3543 = vmul.f32 %v3540, 1.442695
        %v3544 = vpow.pop %v3543
        %v3545 = vsel %vm3532, %v3542, 0.0
        %3546 = vadd.xlane.f32.xlu0 %v3545
        %v3547 = vpop.xlane.xlu0 %3546
        %v3548 = vsel %vm3532, %v3544, 0.0
        %3549 = vadd.xlane.f32.xlu0 %v3548
        %v3550 = vpop.xlane.xlu0 %3549
        %v3551 = vrcp.pop %v3547
        %v3552 = vrcp.pop %v3550
        %v3553 = vmul.f32 %v3542, %v3551
        %v3554 = vmul.f32 %v3544, %v3552
        %v3555 = vpack.c.bf16 %v3553, %v3553
        %v3556 = vpack.c.bf16 %v3554, %v3554
        %v3558 = vsel %vm3532, %v3555, 0
        %3560 = vmatprep.subr.bf16.mxu0 0
        %3561 = vmatpush1.bf16.msra.mxu0 %v3426
        %3562 = vmatprep.subr.bf16.mxu0 0
        %3563 = vmatpush1.bf16.msra.mxu0 0
        %3564 = vmatprep.subr.bf16.mxu0 0
        %3565 = vmatpush1.bf16.msra.mxu0 0
        %3566 = vmatprep.subr.bf16.mxu0 0
        %3567 = vmatpush1.bf16.msra.mxu0 0
        %3568 = vmatprep.subr.bf16.mxu0 0
        %3569 = vmatpush1.bf16.msra.mxu0 0
        %3570 = vmatprep.subr.bf16.mxu0 0
        %3571 = vmatpush1.bf16.msra.mxu0 0
        %3572 = vmatprep.subr.bf16.mxu0 0
        %3573 = vmatpush1.bf16.msra.mxu0 0
        %3574 = vmatprep.subr.bf16.mxu0 0
        %3575 = vmatpush1.bf16.msra.mxu0 0
        %3576 = vmatprep.subr.bf16.mxu0 0
        %3577 = vmatpush1.bf16.msra.mxu0 0
        %3578 = vmatprep.subr.bf16.mxu0 0
        %3579 = vmatpush1.bf16.msra.mxu0 0
        %3580 = vmatprep.subr.bf16.mxu0 0
        %3581 = vmatpush1.bf16.msra.mxu0 0
        %3582 = vmatprep.subr.bf16.mxu0 0
        %3583 = vmatpush1.bf16.msra.mxu0 0
        %3584 = vmatprep.subr.bf16.mxu0 0
        %3585 = vmatpush1.bf16.msra.mxu0 0
        %3586 = vmatprep.subr.bf16.mxu0 0
        %3587 = vmatpush1.bf16.msra.mxu0 0
        %3588 = vmatprep.subr.bf16.mxu0 0
        %3589 = vmatpush1.bf16.msra.mxu0 0
        %3590 = vmatprep.subr.bf16.mxu0 0
        %3591 = vmatpush1.bf16.msra.mxu0 0
        %3592 = vmatprep.mubr.bf16.mxu0 0
        %3593 = vmatmul.mubr.bf16.gmra.mrb[0].mxu0 %v3558
        %v3594 = vpop.f32.mrb[0].mxu0
        %v3595 = vadd.f32 0.0, %v3594
        %v3596 = vpop.f32.mrb[0].mxu0
        %v3597 = vpop.f32.mrb[0].mxu0
        %v3598 = vpop.f32.mrb[0].mxu0
        %3599 = vdwg.mxu0
        %v3601 = vsel %vm3532, %v3556, 0
        %3603 = vmatprep.subr.bf16.mxu0 0
        %3604 = vmatpush1.bf16.msra.mxu0 %v3427
        %3605 = vmatprep.subr.bf16.mxu0 0
        %3606 = vmatpush1.bf16.msra.mxu0 0
        %3607 = vmatprep.subr.bf16.mxu0 0
        %3608 = vmatpush1.bf16.msra.mxu0 0
        %3609 = vmatprep.subr.bf16.mxu0 0
        %3610 = vmatpush1.bf16.msra.mxu0 0
        %3611 = vmatprep.subr.bf16.mxu0 0
        %3612 = vmatpush1.bf16.msra.mxu0 0
        %3613 = vmatprep.subr.bf16.mxu0 0
        %3614 = vmatpush1.bf16.msra.mxu0 0
        %3615 = vmatprep.subr.bf16.mxu0 0
        %3616 = vmatpush1.bf16.msra.mxu0 0
        %3617 = vmatprep.subr.bf16.mxu0 0
        %3618 = vmatpush1.bf16.msra.mxu0 0
        %3619 = vmatprep.subr.bf16.mxu0 0
        %3620 = vmatpush1.bf16.msra.mxu0 0
        %3621 = vmatprep.subr.bf16.mxu0 0
        %3622 = vmatpush1.bf16.msra.mxu0 0
        %3623 = vmatprep.subr.bf16.mxu0 0
        %3624 = vmatpush1.bf16.msra.mxu0 0
        %3625 = vmatprep.subr.bf16.mxu0 0
        %3626 = vmatpush1.bf16.msra.mxu0 0
        %3627 = vmatprep.subr.bf16.mxu0 0
        %3628 = vmatpush1.bf16.msra.mxu0 0
        %3629 = vmatprep.subr.bf16.mxu0 0
        %3630 = vmatpush1.bf16.msra.mxu0 0
        %3631 = vmatprep.subr.bf16.mxu0 0
        %3632 = vmatpush1.bf16.msra.mxu0 0
        %3633 = vmatprep.subr.bf16.mxu0 0
        %3634 = vmatpush1.bf16.msra.mxu0 0
        %3635 = vmatprep.mubr.bf16.mxu0 0
        %3636 = vmatmul.mubr.bf16.gmra.mrb[0].mxu0 %v3601
        %v3637 = vpop.f32.mrb[0].mxu0
        %v3638 = vadd.f32 0.0, %v3637
        %v3639 = vpop.f32.mrb[0].mxu0
        %v3640 = vpop.f32.mrb[0].mxu0
        %v3641 = vpop.f32.mrb[0].mxu0
        %3642 = vdwg.mxu0
        %3643 = vst.msk [vmem:[#allocation6] sm:$0xff] %vm2162, %v3595
        %3644 = vst.msk [vmem:[#allocation6 + $0x8] sm:$0xff] %vm2162, %v3638
        %3646 = vrot.lane.b32.xlu0 %v3422, 120
        %v3647 = vpop.permute.xlu0 %3646
        %3649 = vrot.lane.b32.xlu0 %v3424, 120
        %v3650 = vpop.permute.xlu0 %3649
        %v3652 = vsel %vm2162, %v3647, 0
        %v3655 = vsel %vm2162, %v3650, 0
        %3657 = vmatprep.subr.bf16.mxu0 0
        %3658 = vmatpush1.bf16.xpose.msra.mxu0 %v3655
        %3659 = vmatprep.subr.bf16.mxu0 0
        %3660 = vmatpush1.bf16.xpose.msra.mxu0 0
        %3661 = vmatprep.subr.bf16.mxu0 0
        %3662 = vmatpush1.bf16.xpose.msra.mxu0 0
        %3663 = vmatprep.subr.bf16.mxu0 0
        %3664 = vmatpush1.bf16.xpose.msra.mxu0 0
        %3665 = vmatprep.subr.bf16.mxu0 0
        %3666 = vmatpush1.bf16.xpose.msra.mxu0 0
        %3667 = vmatprep.subr.bf16.mxu0 0
        %3668 = vmatpush1.bf16.xpose.msra.mxu0 0
        %3669 = vmatprep.subr.bf16.mxu0 0
        %3670 = vmatpush1.bf16.xpose.msra.mxu0 0
        %3671 = vmatprep.subr.bf16.mxu0 0
        %3672 = vmatpush1.bf16.xpose.msra.mxu0 0
        %3673 = vmatprep.subr.bf16.mxu0 0
        %3674 = vmatpush1.bf16.xpose.msra.mxu0 0
        %3675 = vmatprep.subr.bf16.mxu0 0
        %3676 = vmatpush1.bf16.xpose.msra.mxu0 0
        %3677 = vmatprep.subr.bf16.mxu0 0
        %3678 = vmatpush1.bf16.xpose.msra.mxu0 0
        %3679 = vmatprep.subr.bf16.mxu0 0
        %3680 = vmatpush1.bf16.xpose.msra.mxu0 0
        %3681 = vmatprep.subr.bf16.mxu0 0
        %3682 = vmatpush1.bf16.xpose.msra.mxu0 0
        %3683 = vmatprep.subr.bf16.mxu0 0
        %3684 = vmatpush1.bf16.xpose.msra.mxu0 0
        %3685 = vmatprep.subr.bf16.mxu0 0
        %3686 = vmatpush1.bf16.xpose.msra.mxu0 0
        %3687 = vmatprep.subr.bf16.mxu0 0
        %3688 = vmatpush1.bf16.xpose.msra.mxu0 0
        %3689 = vmatprep.mubr.bf16.mxu0 0
        %3690 = vmatmul.mubr.bf16.gmra.mrb[0].mxu0 %v3652
        %v3691 = vpop.f32.mrb[0].mxu0
        %v3692 = vadd.f32 %v3433, %v3691
        %v3693 = vpop.f32.mrb[0].mxu0
        %v3694 = vpop.f32.mrb[0].mxu0
        %v3695 = vpop.f32.mrb[0].mxu0
        %3696 = vdwg.mxu0
        %3698 = vrot.lane.b32.xlu0 %v3423, 120
        %v3699 = vpop.permute.xlu0 %3698
        %3701 = vrot.lane.b32.xlu0 %v3425, 120
        %v3702 = vpop.permute.xlu0 %3701
        %v3704 = vsel %vm2162, %v3699, 0
        %v3707 = vsel %vm2162, %v3702, 0
        %3709 = vmatprep.subr.bf16.mxu0 0
        %3710 = vmatpush1.bf16.xpose.msra.mxu0 %v3707
        %3711 = vmatprep.subr.bf16.mxu0 0
        %3712 = vmatpush1.bf16.xpose.msra.mxu0 0
        %3713 = vmatprep.subr.bf16.mxu0 0
        %3714 = vmatpush1.bf16.xpose.msra.mxu0 0
        %3715 = vmatprep.subr.bf16.mxu0 0
        %3716 = vmatpush1.bf16.xpose.msra.mxu0 0
        %3717 = vmatprep.subr.bf16.mxu0 0
        %3718 = vmatpush1.bf16.xpose.msra.mxu0 0
        %3719 = vmatprep.subr.bf16.mxu0 0
        %3720 = vmatpush1.bf16.xpose.msra.mxu0 0
        %3721 = vmatprep.subr.bf16.mxu0 0
        %3722 = vmatpush1.bf16.xpose.msra.mxu0 0
        %3723 = vmatprep.subr.bf16.mxu0 0
        %3724 = vmatpush1.bf16.xpose.msra.mxu0 0
        %3725 = vmatprep.subr.bf16.mxu0 0
        %3726 = vmatpush1.bf16.xpose.msra.mxu0 0
        %3727 = vmatprep.subr.bf16.mxu0 0
        %3728 = vmatpush1.bf16.xpose.msra.mxu0 0
        %3729 = vmatprep.subr.bf16.mxu0 0
        %3730 = vmatpush1.bf16.xpose.msra.mxu0 0
        %3731 = vmatprep.subr.bf16.mxu0 0
        %3732 = vmatpush1.bf16.xpose.msra.mxu0 0
        %3733 = vmatprep.subr.bf16.mxu0 0
        %3734 = vmatpush1.bf16.xpose.msra.mxu0 0
        %3735 = vmatprep.subr.bf16.mxu0 0
        %3736 = vmatpush1.bf16.xpose.msra.mxu0 0
        %3737 = vmatprep.subr.bf16.mxu0 0
        %3738 = vmatpush1.bf16.xpose.msra.mxu0 0
        %3739 = vmatprep.subr.bf16.mxu0 0
        %3740 = vmatpush1.bf16.xpose.msra.mxu0 0
        %3741 = vmatprep.mubr.bf16.mxu0 0
        %3742 = vmatmul.mubr.bf16.gmra.mrb[0].mxu0 %v3704
        %v3743 = vpop.f32.mrb[0].mxu0
        %v3744 = vadd.f32 %v3437, %v3743
        %v3745 = vpop.f32.mrb[0].mxu0
        %v3746 = vpop.f32.mrb[0].mxu0
        %v3747 = vpop.f32.mrb[0].mxu0
        %3748 = vdwg.mxu0
        %v3749 = vsel %vm3532, %v3692, -inf
        %3750 = vmax.xlane.f32.xlu0 %v3749
        %v3751 = vpop.xlane.xlu0 %3750
        %v3752 = vsel %vm3532, %v3744, -inf
        %3753 = vmax.xlane.f32.xlu0 %v3752
        %v3754 = vpop.xlane.xlu0 %3753
        %v3755 = vsub.f32 %v3692, %v3751
        %v3756 = vsub.f32 %v3744, %v3754
        %v3757 = vmul.f32 %v3755, 1.442695
        %v3758 = vpow.pop %v3757
        %v3759 = vmul.f32 %v3756, 1.442695
        %v3760 = vpow.pop %v3759
        %v3761 = vsel %vm3532, %v3758, 0.0
        %3762 = vadd.xlane.f32.xlu0 %v3761
        %v3763 = vpop.xlane.xlu0 %3762
        %v3764 = vsel %vm3532, %v3760, 0.0
        %3765 = vadd.xlane.f32.xlu0 %v3764
        %v3766 = vpop.xlane.xlu0 %3765
        %v3767 = vrcp.pop %v3763
        %v3768 = vrcp.pop %v3766
        %v3769 = vmul.f32 %v3758, %v3767
        %v3770 = vmul.f32 %v3760, %v3768
        %v3771 = vpack.c.bf16 %v3769, %v3769
        %v3772 = vpack.c.bf16 %v3770, %v3770
        %3774 = vrot.lane.b32.xlu0 %v3426, 120
        %v3775 = vpop.permute.xlu0 %3774
        %v3778 = vsel %vm3532, %v3771, 0
        %3780 = vmatprep.subr.bf16.mxu0 0
        %3781 = vmatpush1.bf16.msra.mxu0 %v3775
        %3782 = vmatprep.subr.bf16.mxu0 0
        %3783 = vmatpush1.bf16.msra.mxu0 0
        %3784 = vmatprep.subr.bf16.mxu0 0
        %3785 = vmatpush1.bf16.msra.mxu0 0
        %3786 = vmatprep.subr.bf16.mxu0 0
        %3787 = vmatpush1.bf16.msra.mxu0 0
        %3788 = vmatprep.subr.bf16.mxu0 0
        %3789 = vmatpush1.bf16.msra.mxu0 0
        %3790 = vmatprep.subr.bf16.mxu0 0
        %3791 = vmatpush1.bf16.msra.mxu0 0
        %3792 = vmatprep.subr.bf16.mxu0 0
        %3793 = vmatpush1.bf16.msra.mxu0 0
        %3794 = vmatprep.subr.bf16.mxu0 0
        %3795 = vmatpush1.bf16.msra.mxu0 0
        %3796 = vmatprep.subr.bf16.mxu0 0
        %3797 = vmatpush1.bf16.msra.mxu0 0
        %3798 = vmatprep.subr.bf16.mxu0 0
        %3799 = vmatpush1.bf16.msra.mxu0 0
        %3800 = vmatprep.subr.bf16.mxu0 0
        %3801 = vmatpush1.bf16.msra.mxu0 0
        %3802 = vmatprep.subr.bf16.mxu0 0
        %3803 = vmatpush1.bf16.msra.mxu0 0
        %3804 = vmatprep.subr.bf16.mxu0 0
        %3805 = vmatpush1.bf16.msra.mxu0 0
        %3806 = vmatprep.subr.bf16.mxu0 0
        %3807 = vmatpush1.bf16.msra.mxu0 0
        %3808 = vmatprep.subr.bf16.mxu0 0
        %3809 = vmatpush1.bf16.msra.mxu0 0
        %3810 = vmatprep.subr.bf16.mxu0 0
        %3811 = vmatpush1.bf16.msra.mxu0 0
        %3812 = vmatprep.mubr.bf16.mxu0 0
        %3813 = vmatmul.mubr.bf16.gmra.mrb[0].mxu0 %v3778
        %v3814 = vpop.f32.mrb[0].mxu0
        %v3815 = vadd.f32 0.0, %v3814
        %v3816 = vpop.f32.mrb[0].mxu0
        %v3817 = vpop.f32.mrb[0].mxu0
        %v3818 = vpop.f32.mrb[0].mxu0
        %3819 = vdwg.mxu0
        %3821 = vrot.lane.b32.xlu0 %v3427, 120
        %v3822 = vpop.permute.xlu0 %3821
        %v3825 = vsel %vm3532, %v3772, 0
        %3827 = vmatprep.subr.bf16.mxu0 0
        %3828 = vmatpush1.bf16.msra.mxu0 %v3822
        %3829 = vmatprep.subr.bf16.mxu0 0
        %3830 = vmatpush1.bf16.msra.mxu0 0
        %3831 = vmatprep.subr.bf16.mxu0 0
        %3832 = vmatpush1.bf16.msra.mxu0 0
        %3833 = vmatprep.subr.bf16.mxu0 0
        %3834 = vmatpush1.bf16.msra.mxu0 0
        %3835 = vmatprep.subr.bf16.mxu0 0
        %3836 = vmatpush1.bf16.msra.mxu0 0
        %3837 = vmatprep.subr.bf16.mxu0 0
        %3838 = vmatpush1.bf16.msra.mxu0 0
        %3839 = vmatprep.subr.bf16.mxu0 0
        %3840 = vmatpush1.bf16.msra.mxu0 0
        %3841 = vmatprep.subr.bf16.mxu0 0
        %3842 = vmatpush1.bf16.msra.mxu0 0
        %3843 = vmatprep.subr.bf16.mxu0 0
        %3844 = vmatpush1.bf16.msra.mxu0 0
        %3845 = vmatprep.subr.bf16.mxu0 0
        %3846 = vmatpush1.bf16.msra.mxu0 0
        %3847 = vmatprep.subr.bf16.mxu0 0
        %3848 = vmatpush1.bf16.msra.mxu0 0
        %3849 = vmatprep.subr.bf16.mxu0 0
        %3850 = vmatpush1.bf16.msra.mxu0 0
        %3851 = vmatprep.subr.bf16.mxu0 0
        %3852 = vmatpush1.bf16.msra.mxu0 0
        %3853 = vmatprep.subr.bf16.mxu0 0
        %3854 = vmatpush1.bf16.msra.mxu0 0
        %3855 = vmatprep.subr.bf16.mxu0 0
        %3856 = vmatpush1.bf16.msra.mxu0 0
        %3857 = vmatprep.subr.bf16.mxu0 0
        %3858 = vmatpush1.bf16.msra.mxu0 0
        %3859 = vmatprep.mubr.bf16.mxu0 0
        %3860 = vmatmul.mubr.bf16.gmra.mrb[0].mxu0 %v3825
        %v3861 = vpop.f32.mrb[0].mxu0
        %v3862 = vadd.f32 0.0, %v3861
        %v3863 = vpop.f32.mrb[0].mxu0
        %v3864 = vpop.f32.mrb[0].mxu0
        %v3865 = vpop.f32.mrb[0].mxu0
        %3866 = vdwg.mxu0
        %3869 = vrot.lane.b32.xlu0 %v3815, 8
        %v3870 = vpop.permute.xlu0 %3869
        %3871 = vrot.lane.b32.xlu0 %v3862, 8
        %v3872 = vpop.permute.xlu0 %3871
        %3875 = vst.msk [vmem:[#allocation6] sm:$0xff] %vm2608, %v3870
        %3876 = vst.msk [vmem:[#allocation6 + $0x8] sm:$0xff] %vm2608, %v3872
        %3877 = vrot.lane.b32.xlu0 %v3422, 112
        %v3878 = vpop.permute.xlu0 %3877
        %3879 = vrot.lane.b32.xlu0 %v3424, 112
        %v3880 = vpop.permute.xlu0 %3879
        %v3882 = vsel %vm2162, %v3878, 0
        %v3885 = vsel %vm2162, %v3880, 0
        %3887 = vmatprep.subr.bf16.mxu0 0
        %3888 = vmatpush1.bf16.xpose.msra.mxu0 %v3885
        %3889 = vmatprep.subr.bf16.mxu0 0
        %3890 = vmatpush1.bf16.xpose.msra.mxu0 0
        %3891 = vmatprep.subr.bf16.mxu0 0
        %3892 = vmatpush1.bf16.xpose.msra.mxu0 0
        %3893 = vmatprep.subr.bf16.mxu0 0
        %3894 = vmatpush1.bf16.xpose.msra.mxu0 0
        %3895 = vmatprep.subr.bf16.mxu0 0
        %3896 = vmatpush1.bf16.xpose.msra.mxu0 0
        %3897 = vmatprep.subr.bf16.mxu0 0
        %3898 = vmatpush1.bf16.xpose.msra.mxu0 0
        %3899 = vmatprep.subr.bf16.mxu0 0
        %3900 = vmatpush1.bf16.xpose.msra.mxu0 0
        %3901 = vmatprep.subr.bf16.mxu0 0
        %3902 = vmatpush1.bf16.xpose.msra.mxu0 0
        %3903 = vmatprep.subr.bf16.mxu0 0
        %3904 = vmatpush1.bf16.xpose.msra.mxu0 0
        %3905 = vmatprep.subr.bf16.mxu0 0
        %3906 = vmatpush1.bf16.xpose.msra.mxu0 0
        %3907 = vmatprep.subr.bf16.mxu0 0
        %3908 = vmatpush1.bf16.xpose.msra.mxu0 0
        %3909 = vmatprep.subr.bf16.mxu0 0
        %3910 = vmatpush1.bf16.xpose.msra.mxu0 0
        %3911 = vmatprep.subr.bf16.mxu0 0
        %3912 = vmatpush1.bf16.xpose.msra.mxu0 0
        %3913 = vmatprep.subr.bf16.mxu0 0
        %3914 = vmatpush1.bf16.xpose.msra.mxu0 0
        %3915 = vmatprep.subr.bf16.mxu0 0
        %3916 = vmatpush1.bf16.xpose.msra.mxu0 0
        %3917 = vmatprep.subr.bf16.mxu0 0
        %3918 = vmatpush1.bf16.xpose.msra.mxu0 0
        %3919 = vmatprep.mubr.bf16.mxu0 0
        %3920 = vmatmul.mubr.bf16.gmra.mrb[0].mxu0 %v3882
        %v3921 = vpop.f32.mrb[0].mxu0
        %v3922 = vadd.f32 %v3433, %v3921
        %v3923 = vpop.f32.mrb[0].mxu0
        %v3924 = vpop.f32.mrb[0].mxu0
        %v3925 = vpop.f32.mrb[0].mxu0
        %3926 = vdwg.mxu0
        %3927 = vrot.lane.b32.xlu0 %v3423, 112
        %v3928 = vpop.permute.xlu0 %3927
        %3929 = vrot.lane.b32.xlu0 %v3425, 112
        %v3930 = vpop.permute.xlu0 %3929
        %v3932 = vsel %vm2162, %v3928, 0
        %v3935 = vsel %vm2162, %v3930, 0
        %3937 = vmatprep.subr.bf16.mxu0 0
        %3938 = vmatpush1.bf16.xpose.msra.mxu0 %v3935
        %3939 = vmatprep.subr.bf16.mxu0 0
        %3940 = vmatpush1.bf16.xpose.msra.mxu0 0
        %3941 = vmatprep.subr.bf16.mxu0 0
        %3942 = vmatpush1.bf16.xpose.msra.mxu0 0
        %3943 = vmatprep.subr.bf16.mxu0 0
        %3944 = vmatpush1.bf16.xpose.msra.mxu0 0
        %3945 = vmatprep.subr.bf16.mxu0 0
        %3946 = vmatpush1.bf16.xpose.msra.mxu0 0
        %3947 = vmatprep.subr.bf16.mxu0 0
        %3948 = vmatpush1.bf16.xpose.msra.mxu0 0
        %3949 = vmatprep.subr.bf16.mxu0 0
        %3950 = vmatpush1.bf16.xpose.msra.mxu0 0
        %3951 = vmatprep.subr.bf16.mxu0 0
        %3952 = vmatpush1.bf16.xpose.msra.mxu0 0
        %3953 = vmatprep.subr.bf16.mxu0 0
        %3954 = vmatpush1.bf16.xpose.msra.mxu0 0
        %3955 = vmatprep.subr.bf16.mxu0 0
        %3956 = vmatpush1.bf16.xpose.msra.mxu0 0
        %3957 = vmatprep.subr.bf16.mxu0 0
        %3958 = vmatpush1.bf16.xpose.msra.mxu0 0
        %3959 = vmatprep.subr.bf16.mxu0 0
        %3960 = vmatpush1.bf16.xpose.msra.mxu0 0
        %3961 = vmatprep.subr.bf16.mxu0 0
        %3962 = vmatpush1.bf16.xpose.msra.mxu0 0
        %3963 = vmatprep.subr.bf16.mxu0 0
        %3964 = vmatpush1.bf16.xpose.msra.mxu0 0
        %3965 = vmatprep.subr.bf16.mxu0 0
        %3966 = vmatpush1.bf16.xpose.msra.mxu0 0
        %3967 = vmatprep.subr.bf16.mxu0 0
        %3968 = vmatpush1.bf16.xpose.msra.mxu0 0
        %3969 = vmatprep.mubr.bf16.mxu0 0
        %3970 = vmatmul.mubr.bf16.gmra.mrb[0].mxu0 %v3932
        %v3971 = vpop.f32.mrb[0].mxu0
        %v3972 = vadd.f32 %v3437, %v3971
        %v3973 = vpop.f32.mrb[0].mxu0
        %v3974 = vpop.f32.mrb[0].mxu0
        %v3975 = vpop.f32.mrb[0].mxu0
        %3976 = vdwg.mxu0
        %v3977 = vsel %vm3532, %v3922, -inf
        %3978 = vmax.xlane.f32.xlu0 %v3977
        %v3979 = vpop.xlane.xlu0 %3978
        %v3980 = vsel %vm3532, %v3972, -inf
        %3981 = vmax.xlane.f32.xlu0 %v3980
        %v3982 = vpop.xlane.xlu0 %3981
        %v3983 = vsub.f32 %v3922, %v3979
        %v3984 = vsub.f32 %v3972, %v3982
        %v3985 = vmul.f32 %v3983, 1.442695
        %v3986 = vpow.pop %v3985
        %v3987 = vmul.f32 %v3984, 1.442695
        %v3988 = vpow.pop %v3987
        %v3989 = vsel %vm3532, %v3986, 0.0
        %3990 = vadd.xlane.f32.xlu0 %v3989
        %v3991 = vpop.xlane.xlu0 %3990
        %v3992 = vsel %vm3532, %v3988, 0.0
        %3993 = vadd.xlane.f32.xlu0 %v3992
        %v3994 = vpop.xlane.xlu0 %3993
        %v3995 = vrcp.pop %v3991
        %v3996 = vrcp.pop %v3994
        %v3997 = vmul.f32 %v3986, %v3995
        %v3998 = vmul.f32 %v3988, %v3996
        %v3999 = vpack.c.bf16 %v3997, %v3997
        %v4000 = vpack.c.bf16 %v3998, %v3998
        %4001 = vrot.lane.b32.xlu0 %v3426, 112
        %v4002 = vpop.permute.xlu0 %4001
        %v4005 = vsel %vm3532, %v3999, 0
        %4007 = vmatprep.subr.bf16.mxu0 0
        %4008 = vmatpush1.bf16.msra.mxu0 %v4002
        %4009 = vmatprep.subr.bf16.mxu0 0
        %4010 = vmatpush1.bf16.msra.mxu0 0
        %4011 = vmatprep.subr.bf16.mxu0 0
        %4012 = vmatpush1.bf16.msra.mxu0 0
        %4013 = vmatprep.subr.bf16.mxu0 0
        %4014 = vmatpush1.bf16.msra.mxu0 0
        %4015 = vmatprep.subr.bf16.mxu0 0
        %4016 = vmatpush1.bf16.msra.mxu0 0
        %4017 = vmatprep.subr.bf16.mxu0 0
        %4018 = vmatpush1.bf16.msra.mxu0 0
        %4019 = vmatprep.subr.bf16.mxu0 0
        %4020 = vmatpush1.bf16.msra.mxu0 0
        %4021 = vmatprep.subr.bf16.mxu0 0
        %4022 = vmatpush1.bf16.msra.mxu0 0
        %4023 = vmatprep.subr.bf16.mxu0 0
        %4024 = vmatpush1.bf16.msra.mxu0 0
        %4025 = vmatprep.subr.bf16.mxu0 0
        %4026 = vmatpush1.bf16.msra.mxu0 0
        %4027 = vmatprep.subr.bf16.mxu0 0
        %4028 = vmatpush1.bf16.msra.mxu0 0
        %4029 = vmatprep.subr.bf16.mxu0 0
        %4030 = vmatpush1.bf16.msra.mxu0 0
        %4031 = vmatprep.subr.bf16.mxu0 0
        %4032 = vmatpush1.bf16.msra.mxu0 0
        %4033 = vmatprep.subr.bf16.mxu0 0
        %4034 = vmatpush1.bf16.msra.mxu0 0
        %4035 = vmatprep.subr.bf16.mxu0 0
        %4036 = vmatpush1.bf16.msra.mxu0 0
        %4037 = vmatprep.subr.bf16.mxu0 0
        %4038 = vmatpush1.bf16.msra.mxu0 0
        %4039 = vmatprep.mubr.bf16.mxu0 0
        %4040 = vmatmul.mubr.bf16.gmra.mrb[0].mxu0 %v4005
        %v4041 = vpop.f32.mrb[0].mxu0
        %v4042 = vadd.f32 0.0, %v4041
        %v4043 = vpop.f32.mrb[0].mxu0
        %v4044 = vpop.f32.mrb[0].mxu0
        %v4045 = vpop.f32.mrb[0].mxu0
        %4046 = vdwg.mxu0
        %4047 = vrot.lane.b32.xlu0 %v3427, 112
        %v4048 = vpop.permute.xlu0 %4047
        %v4051 = vsel %vm3532, %v4000, 0
        %4053 = vmatprep.subr.bf16.mxu0 0
        %4054 = vmatpush1.bf16.msra.mxu0 %v4048
        %4055 = vmatprep.subr.bf16.mxu0 0
        %4056 = vmatpush1.bf16.msra.mxu0 0
        %4057 = vmatprep.subr.bf16.mxu0 0
        %4058 = vmatpush1.bf16.msra.mxu0 0
        %4059 = vmatprep.subr.bf16.mxu0 0
        %4060 = vmatpush1.bf16.msra.mxu0 0
        %4061 = vmatprep.subr.bf16.mxu0 0
        %4062 = vmatpush1.bf16.msra.mxu0 0
        %4063 = vmatprep.subr.bf16.mxu0 0
        %4064 = vmatpush1.bf16.msra.mxu0 0
        %4065 = vmatprep.subr.bf16.mxu0 0
        %4066 = vmatpush1.bf16.msra.mxu0 0
        %4067 = vmatprep.subr.bf16.mxu0 0
        %4068 = vmatpush1.bf16.msra.mxu0 0
        %4069 = vmatprep.subr.bf16.mxu0 0
        %4070 = vmatpush1.bf16.msra.mxu0 0
        %4071 = vmatprep.subr.bf16.mxu0 0
        %4072 = vmatpush1.bf16.msra.mxu0 0
        %4073 = vmatprep.subr.bf16.mxu0 0
        %4074 = vmatpush1.bf16.msra.mxu0 0
        %4075 = vmatprep.subr.bf16.mxu0 0
        %4076 = vmatpush1.bf16.msra.mxu0 0
        %4077 = vmatprep.subr.bf16.mxu0 0
        %4078 = vmatpush1.bf16.msra.mxu0 0
        %4079 = vmatprep.subr.bf16.mxu0 0
        %4080 = vmatpush1.bf16.msra.mxu0 0
        %4081 = vmatprep.subr.bf16.mxu0 0
        %4082 = vmatpush1.bf16.msra.mxu0 0
        %4083 = vmatprep.subr.bf16.mxu0 0
        %4084 = vmatpush1.bf16.msra.mxu0 0
        %4085 = vmatprep.mubr.bf16.mxu0 0
        %4086 = vmatmul.mubr.bf16.gmra.mrb[0].mxu0 %v4051
        %v4087 = vpop.f32.mrb[0].mxu0
        %v4088 = vadd.f32 0.0, %v4087
        %v4089 = vpop.f32.mrb[0].mxu0
        %v4090 = vpop.f32.mrb[0].mxu0
        %v4091 = vpop.f32.mrb[0].mxu0
        %4092 = vdwg.mxu0
        %4095 = vrot.lane.b32.xlu0 %v4042, 16
        %v4096 = vpop.permute.xlu0 %4095
        %4097 = vrot.lane.b32.xlu0 %v4088, 16
        %v4098 = vpop.permute.xlu0 %4097
        %4101 = vst.msk [vmem:[#allocation6] sm:$0xff] %vm2839, %v4096
        %4102 = vst.msk [vmem:[#allocation6 + $0x8] sm:$0xff] %vm2839, %v4098
        %4103 = vrot.lane.b32.xlu0 %v3422, 104
        %v4104 = vpop.permute.xlu0 %4103
        %4105 = vrot.lane.b32.xlu0 %v3424, 104
        %v4106 = vpop.permute.xlu0 %4105
        %v4108 = vsel %vm2162, %v4104, 0
        %v4111 = vsel %vm2162, %v4106, 0
        %4113 = vmatprep.subr.bf16.mxu0 0
        %4114 = vmatpush1.bf16.xpose.msra.mxu0 %v4111
        %4115 = vmatprep.subr.bf16.mxu0 0
        %4116 = vmatpush1.bf16.xpose.msra.mxu0 0
        %4117 = vmatprep.subr.bf16.mxu0 0
        %4118 = vmatpush1.bf16.xpose.msra.mxu0 0
        %4119 = vmatprep.subr.bf16.mxu0 0
        %4120 = vmatpush1.bf16.xpose.msra.mxu0 0
        %4121 = vmatprep.subr.bf16.mxu0 0
        %4122 = vmatpush1.bf16.xpose.msra.mxu0 0
        %4123 = vmatprep.subr.bf16.mxu0 0
        %4124 = vmatpush1.bf16.xpose.msra.mxu0 0
        %4125 = vmatprep.subr.bf16.mxu0 0
        %4126 = vmatpush1.bf16.xpose.msra.mxu0 0
        %4127 = vmatprep.subr.bf16.mxu0 0
        %4128 = vmatpush1.bf16.xpose.msra.mxu0 0
        %4129 = vmatprep.subr.bf16.mxu0 0
        %4130 = vmatpush1.bf16.xpose.msra.mxu0 0
        %4131 = vmatprep.subr.bf16.mxu0 0
        %4132 = vmatpush1.bf16.xpose.msra.mxu0 0
        %4133 = vmatprep.subr.bf16.mxu0 0
        %4134 = vmatpush1.bf16.xpose.msra.mxu0 0
        %4135 = vmatprep.subr.bf16.mxu0 0
        %4136 = vmatpush1.bf16.xpose.msra.mxu0 0
        %4137 = vmatprep.subr.bf16.mxu0 0
        %4138 = vmatpush1.bf16.xpose.msra.mxu0 0
        %4139 = vmatprep.subr.bf16.mxu0 0
        %4140 = vmatpush1.bf16.xpose.msra.mxu0 0
        %4141 = vmatprep.subr.bf16.mxu0 0
        %4142 = vmatpush1.bf16.xpose.msra.mxu0 0
        %4143 = vmatprep.subr.bf16.mxu0 0
        %4144 = vmatpush1.bf16.xpose.msra.mxu0 0
        %4145 = vmatprep.mubr.bf16.mxu0 0
        %4146 = vmatmul.mubr.bf16.gmra.mrb[0].mxu0 %v4108
        %v4147 = vpop.f32.mrb[0].mxu0
        %v4148 = vadd.f32 %v3433, %v4147
        %v4149 = vpop.f32.mrb[0].mxu0
        %v4150 = vpop.f32.mrb[0].mxu0
        %v4151 = vpop.f32.mrb[0].mxu0
        %4152 = vdwg.mxu0
        %4153 = vrot.lane.b32.xlu0 %v3423, 104
        %v4154 = vpop.permute.xlu0 %4153
        %4155 = vrot.lane.b32.xlu0 %v3425, 104
        %v4156 = vpop.permute.xlu0 %4155
        %v4158 = vsel %vm2162, %v4154, 0
        %v4161 = vsel %vm2162, %v4156, 0
        %4163 = vmatprep.subr.bf16.mxu0 0
        %4164 = vmatpush1.bf16.xpose.msra.mxu0 %v4161
        %4165 = vmatprep.subr.bf16.mxu0 0
        %4166 = vmatpush1.bf16.xpose.msra.mxu0 0
        %4167 = vmatprep.subr.bf16.mxu0 0
        %4168 = vmatpush1.bf16.xpose.msra.mxu0 0
        %4169 = vmatprep.subr.bf16.mxu0 0
        %4170 = vmatpush1.bf16.xpose.msra.mxu0 0
        %4171 = vmatprep.subr.bf16.mxu0 0
        %4172 = vmatpush1.bf16.xpose.msra.mxu0 0
        %4173 = vmatprep.subr.bf16.mxu0 0
        %4174 = vmatpush1.bf16.xpose.msra.mxu0 0
        %4175 = vmatprep.subr.bf16.mxu0 0
        %4176 = vmatpush1.bf16.xpose.msra.mxu0 0
        %4177 = vmatprep.subr.bf16.mxu0 0
        %4178 = vmatpush1.bf16.xpose.msra.mxu0 0
        %4179 = vmatprep.subr.bf16.mxu0 0
        %4180 = vmatpush1.bf16.xpose.msra.mxu0 0
        %4181 = vmatprep.subr.bf16.mxu0 0
        %4182 = vmatpush1.bf16.xpose.msra.mxu0 0
        %4183 = vmatprep.subr.bf16.mxu0 0
        %4184 = vmatpush1.bf16.xpose.msra.mxu0 0
        %4185 = vmatprep.subr.bf16.mxu0 0
        %4186 = vmatpush1.bf16.xpose.msra.mxu0 0
        %4187 = vmatprep.subr.bf16.mxu0 0
        %4188 = vmatpush1.bf16.xpose.msra.mxu0 0
        %4189 = vmatprep.subr.bf16.mxu0 0
        %4190 = vmatpush1.bf16.xpose.msra.mxu0 0
        %4191 = vmatprep.subr.bf16.mxu0 0
        %4192 = vmatpush1.bf16.xpose.msra.mxu0 0
        %4193 = vmatprep.subr.bf16.mxu0 0
        %4194 = vmatpush1.bf16.xpose.msra.mxu0 0
        %4195 = vmatprep.mubr.bf16.mxu0 0
        %4196 = vmatmul.mubr.bf16.gmra.mrb[0].mxu0 %v4158
        %v4197 = vpop.f32.mrb[0].mxu0
        %v4198 = vadd.f32 %v3437, %v4197
        %v4199 = vpop.f32.mrb[0].mxu0
        %v4200 = vpop.f32.mrb[0].mxu0
        %v4201 = vpop.f32.mrb[0].mxu0
        %4202 = vdwg.mxu0
        %v4203 = vsel %vm3532, %v4148, -inf
        %4204 = vmax.xlane.f32.xlu0 %v4203
        %v4205 = vpop.xlane.xlu0 %4204
        %v4206 = vsel %vm3532, %v4198, -inf
        %4207 = vmax.xlane.f32.xlu0 %v4206
        %v4208 = vpop.xlane.xlu0 %4207
        %v4209 = vsub.f32 %v4148, %v4205
        %v4210 = vsub.f32 %v4198, %v4208
        %v4211 = vmul.f32 %v4209, 1.442695
        %v4212 = vpow.pop %v4211
        %v4213 = vmul.f32 %v4210, 1.442695
        %v4214 = vpow.pop %v4213
        %v4215 = vsel %vm3532, %v4212, 0.0
        %4216 = vadd.xlane.f32.xlu0 %v4215
        %v4217 = vpop.xlane.xlu0 %4216
        %v4218 = vsel %vm3532, %v4214, 0.0
        %4219 = vadd.xlane.f32.xlu0 %v4218
        %v4220 = vpop.xlane.xlu0 %4219
        %v4221 = vrcp.pop %v4217
        %v4222 = vrcp.pop %v4220
        %v4223 = vmul.f32 %v4212, %v4221
        %v4224 = vmul.f32 %v4214, %v4222
        %v4225 = vpack.c.bf16 %v4223, %v4223
        %v4226 = vpack.c.bf16 %v4224, %v4224
        %4227 = vrot.lane.b32.xlu0 %v3426, 104
        %v4228 = vpop.permute.xlu0 %4227
        %v4231 = vsel %vm3532, %v4225, 0
        %4233 = vmatprep.subr.bf16.mxu0 0
        %4234 = vmatpush1.bf16.msra.mxu0 %v4228
        %4235 = vmatprep.subr.bf16.mxu0 0
        %4236 = vmatpush1.bf16.msra.mxu0 0
        %4237 = vmatprep.subr.bf16.mxu0 0
        %4238 = vmatpush1.bf16.msra.mxu0 0
        %4239 = vmatprep.subr.bf16.mxu0 0
        %4240 = vmatpush1.bf16.msra.mxu0 0
        %4241 = vmatprep.subr.bf16.mxu0 0
        %4242 = vmatpush1.bf16.msra.mxu0 0
        %4243 = vmatprep.subr.bf16.mxu0 0
        %4244 = vmatpush1.bf16.msra.mxu0 0
        %4245 = vmatprep.subr.bf16.mxu0 0
        %4246 = vmatpush1.bf16.msra.mxu0 0
        %4247 = vmatprep.subr.bf16.mxu0 0
        %4248 = vmatpush1.bf16.msra.mxu0 0
        %4249 = vmatprep.subr.bf16.mxu0 0
        %4250 = vmatpush1.bf16.msra.mxu0 0
        %4251 = vmatprep.subr.bf16.mxu0 0
        %4252 = vmatpush1.bf16.msra.mxu0 0
        %4253 = vmatprep.subr.bf16.mxu0 0
        %4254 = vmatpush1.bf16.msra.mxu0 0
        %4255 = vmatprep.subr.bf16.mxu0 0
        %4256 = vmatpush1.bf16.msra.mxu0 0
        %4257 = vmatprep.subr.bf16.mxu0 0
        %4258 = vmatpush1.bf16.msra.mxu0 0
        %4259 = vmatprep.subr.bf16.mxu0 0
        %4260 = vmatpush1.bf16.msra.mxu0 0
        %4261 = vmatprep.subr.bf16.mxu0 0
        %4262 = vmatpush1.bf16.msra.mxu0 0
        %4263 = vmatprep.subr.bf16.mxu0 0
        %4264 = vmatpush1.bf16.msra.mxu0 0
        %4265 = vmatprep.mubr.bf16.mxu0 0
        %4266 = vmatmul.mubr.bf16.gmra.mrb[0].mxu0 %v4231
        %v4267 = vpop.f32.mrb[0].mxu0
        %v4268 = vadd.f32 0.0, %v4267
        %v4269 = vpop.f32.mrb[0].mxu0
        %v4270 = vpop.f32.mrb[0].mxu0
        %v4271 = vpop.f32.mrb[0].mxu0
        %4272 = vdwg.mxu0
        %4273 = vrot.lane.b32.xlu0 %v3427, 104
        %v4274 = vpop.permute.xlu0 %4273
        %v4277 = vsel %vm3532, %v4226, 0
        %4279 = vmatprep.subr.bf16.mxu0 0
        %4280 = vmatpush1.bf16.msra.mxu0 %v4274
        %4281 = vmatprep.subr.bf16.mxu0 0
        %4282 = vmatpush1.bf16.msra.mxu0 0
        %4283 = vmatprep.subr.bf16.mxu0 0
        %4284 = vmatpush1.bf16.msra.mxu0 0
        %4285 = vmatprep.subr.bf16.mxu0 0
        %4286 = vmatpush1.bf16.msra.mxu0 0
        %4287 = vmatprep.subr.bf16.mxu0 0
        %4288 = vmatpush1.bf16.msra.mxu0 0
        %4289 = vmatprep.subr.bf16.mxu0 0
        %4290 = vmatpush1.bf16.msra.mxu0 0
        %4291 = vmatprep.subr.bf16.mxu0 0
        %4292 = vmatpush1.bf16.msra.mxu0 0
        %4293 = vmatprep.subr.bf16.mxu0 0
        %4294 = vmatpush1.bf16.msra.mxu0 0
        %4295 = vmatprep.subr.bf16.mxu0 0
        %4296 = vmatpush1.bf16.msra.mxu0 0
        %4297 = vmatprep.subr.bf16.mxu0 0
        %4298 = vmatpush1.bf16.msra.mxu0 0
        %4299 = vmatprep.subr.bf16.mxu0 0
        %4300 = vmatpush1.bf16.msra.mxu0 0
        %4301 = vmatprep.subr.bf16.mxu0 0
        %4302 = vmatpush1.bf16.msra.mxu0 0
        %4303 = vmatprep.subr.bf16.mxu0 0
        %4304 = vmatpush1.bf16.msra.mxu0 0
        %4305 = vmatprep.subr.bf16.mxu0 0
        %4306 = vmatpush1.bf16.msra.mxu0 0
        %4307 = vmatprep.subr.bf16.mxu0 0
        %4308 = vmatpush1.bf16.msra.mxu0 0
        %4309 = vmatprep.subr.bf16.mxu0 0
        %4310 = vmatpush1.bf16.msra.mxu0 0
        %4311 = vmatprep.mubr.bf16.mxu0 0
        %4312 = vmatmul.mubr.bf16.gmra.mrb[0].mxu0 %v4277
        %v4313 = vpop.f32.mrb[0].mxu0
        %v4314 = vadd.f32 0.0, %v4313
        %v4315 = vpop.f32.mrb[0].mxu0
        %v4316 = vpop.f32.mrb[0].mxu0
        %v4317 = vpop.f32.mrb[0].mxu0
        %4318 = vdwg.mxu0
        %4321 = vrot.lane.b32.xlu0 %v4268, 24
        %v4322 = vpop.permute.xlu0 %4321
        %4323 = vrot.lane.b32.xlu0 %v4314, 24
        %v4324 = vpop.permute.xlu0 %4323
        %4327 = vst.msk [vmem:[#allocation6] sm:$0xff] %vm3070, %v4322
        %4328 = vst.msk [vmem:[#allocation6 + $0x8] sm:$0xff] %vm3070, %v4324
        %v4329 = vld [vmem:[#allocation6] sm:$0xff]
        %v4330 = vld [vmem:[#allocation6 + $0x8] sm:$0xff]
        %v4331 = vpack.c.bf16 %v4330, %v4329
        %v4333 = vlaneseq
        %v4334 = vshrl.u32 %v4333, 7
        %v4335 = vsub.s32 0, %v4334
        %v4336 = vrot.slane %v3214, %v4335
        %v4342 = vunpack.c.l.b16 %v3210
        %v4343 = vunpack.c.l.b16 %v3211
        %v4344 = vunpack.c.l.b16 %v3212
        %v4345 = vunpack.c.l.b16 %v3213
        %v4346 = vpack.c.b16 %v4343, %v4342
        %v4347 = vpack.c.b16 %v4345, %v4344
        %v4351 = vsel %vm1993, %v4331, 0
        %4353 = vmatprep.subr.bf16.mxu0 0
        %4354 = vmatpush1.bf16.msra.mxu0 %v4346
        %4355 = vmatprep.subr.bf16.mxu0 0
        %4356 = vmatpush1.bf16.msra.mxu0 %v4347
        %4357 = vmatprep.subr.bf16.mxu0 0
        %4358 = vmatpush1.bf16.msra.mxu0 0
        %4359 = vmatprep.subr.bf16.mxu0 0
        %4360 = vmatpush1.bf16.msra.mxu0 0
        %4361 = vmatprep.subr.bf16.mxu0 0
        %4362 = vmatpush1.bf16.msra.mxu0 0
        %4363 = vmatprep.subr.bf16.mxu0 0
        %4364 = vmatpush1.bf16.msra.mxu0 0
        %4365 = vmatprep.subr.bf16.mxu0 0
        %4366 = vmatpush1.bf16.msra.mxu0 0
        %4367 = vmatprep.subr.bf16.mxu0 0
        %4368 = vmatpush1.bf16.msra.mxu0 0
        %4369 = vmatprep.subr.bf16.mxu0 0
        %4370 = vmatpush1.bf16.msra.mxu0 0
        %4371 = vmatprep.subr.bf16.mxu0 0
        %4372 = vmatpush1.bf16.msra.mxu0 0
        %4373 = vmatprep.subr.bf16.mxu0 0
        %4374 = vmatpush1.bf16.msra.mxu0 0
        %4375 = vmatprep.subr.bf16.mxu0 0
        %4376 = vmatpush1.bf16.msra.mxu0 0
        %4377 = vmatprep.subr.bf16.mxu0 0
        %4378 = vmatpush1.bf16.msra.mxu0 0
        %4379 = vmatprep.subr.bf16.mxu0 0
        %4380 = vmatpush1.bf16.msra.mxu0 0
        %4381 = vmatprep.subr.bf16.mxu0 0
        %4382 = vmatpush1.bf16.msra.mxu0 0
        %4383 = vmatprep.subr.bf16.mxu0 0
        %4384 = vmatpush1.bf16.msra.mxu0 0
        %4385 = vmatprep.mubr.bf16.mxu0 0
        %4386 = vmatmul.mubr.bf16.gmra.mrb[0].mxu0 %v4351
        %v4387 = vpop.f32.mrb[0].mxu0
        %v4388 = vadd.f32 %v4336, %v4387
        %v4389 = vpop.f32.mrb[0].mxu0
        %v4390 = vpop.f32.mrb[0].mxu0
        %v4391 = vadd.f32 %v4336, %v4390
        %v4392 = vpop.f32.mrb[0].mxu0
        %4393 = vdwg.mxu0
        %v4394 = vadd.f32 %v4388, %v3193
        %v4395 = vadd.f32 %v4391, %v3194
        %v4396 = vsel %vm1993, %v4394, 0.0
        %4397 = vadd.xlane.f32.xlu0 %v4396
        %v4398 = vpop.xlane.xlu0 %4397
        %v4399 = vsel %vm1993, %v4395, 0.0
        %4400 = vadd.xlane.f32.xlu0 %v4399
        %v4401 = vpop.xlane.xlu0 %4400
        %v4402 = vmul.f32 %v4398, %v3146
        %v4403 = vmul.f32 %v4401, %v3146
        %v4404 = vsub.f32 %v4394, %v4402
        %v4405 = vsub.f32 %v4395, %v4403
        %v4406 = vmul.f32 %v4404, %v4404
        %v4407 = vmul.f32 %v4405, %v4405
        %v4408 = vsel %vm1993, %v4406, 0.0
        %4409 = vadd.xlane.f32.xlu0 %v4408
        %v4410 = vpop.xlane.xlu0 %4409
        %v4411 = vsel %vm1993, %v4407, 0.0
        %4412 = vadd.xlane.f32.xlu0 %v4411
        %v4413 = vpop.xlane.xlu0 %4412
        %v4414 = vmul.f32 %v4410, %v3146
        %v4415 = vmul.f32 %v4413, %v3146
        %v4416 = vadd.f32 %v4414, 1e-06
        %v4417 = vadd.f32 %v4415, 1e-06
        %v4418 = vrsqrt.pop %v4416
        %v4419 = vrsqrt.pop %v4417
        %v4420 = vmul.f32 %v4404, %v4418
        %v4421 = vmul.f32 %v4405, %v4419
        %v4423 = vlaneseq
        %v4424 = vshrl.u32 %v4423, 7
        %v4425 = vsub.s32 0, %v4424
        %v4426 = vrot.slane %v3215, %v4425
        %v4428 = vmul.f32 %v4420, %v4426
        %v4429 = vmul.f32 %v4421, %v4426
        %v4431 = vlaneseq
        %v4432 = vshrl.u32 %v4431, 7
        %v4433 = vsub.s32 0, %v4432
        %v4434 = vrot.slane %v3216, %v4433
        %v4436 = vadd.f32 %v4428, %v4434
        %v4437 = vadd.f32 %v4429, %v4434
        %v4438 = vmul.f32 %v4436, %v3186
        %v4439 = vmul.f32 %v4437, %v3191
        %v4440 = vpack.c.bf16 %v4439, %v4438
        %v4441 = vld [vmem:[%s1552] sm:$0xf]
        %v4442 = vld [vmem:[%s1552 + $0x4] sm:$0xf]
        %v4443 = vld [vmem:[%s1552 + $0x8] sm:$0xf]
        %v4444 = vld [vmem:[%s1552 + $0xc] sm:$0xf]
        %v4445 = vld [vmem:[%s1792] sm:$0x1]
        %v4447 = vlaneseq
        %v4448 = vshrl.u32 %v4447, 7
        %v4449 = vsub.s32 0, %v4448
        %v4450 = vrot.slane %v4445, %v4449
        %v4456 = vunpack.c.l.b16 %v4441
        %v4457 = vunpack.c.l.b16 %v4442
        %v4458 = vunpack.c.l.b16 %v4443
        %v4459 = vunpack.c.l.b16 %v4444
        %v4460 = vpack.c.b16 %v4457, %v4456
        %v4461 = vpack.c.b16 %v4459, %v4458
        %v4465 = vsel %vm1993, %v4440, 0
        %4467 = vmatprep.subr.bf16.mxu0 0
        %4468 = vmatpush1.bf16.msra.mxu0 %v4460
        %4469 = vmatprep.subr.bf16.mxu0 0
        %4470 = vmatpush1.bf16.msra.mxu0 %v4461
        %4471 = vmatprep.subr.bf16.mxu0 0
        %4472 = vmatpush1.bf16.msra.mxu0 0
        %4473 = vmatprep.subr.bf16.mxu0 0
        %4474 = vmatpush1.bf16.msra.mxu0 0
        %4475 = vmatprep.subr.bf16.mxu0 0
        %4476 = vmatpush1.bf16.msra.mxu0 0
        %4477 = vmatprep.subr.bf16.mxu0 0
        %4478 = vmatpush1.bf16.msra.mxu0 0
        %4479 = vmatprep.subr.bf16.mxu0 0
        %4480 = vmatpush1.bf16.msra.mxu0 0
        %4481 = vmatprep.subr.bf16.mxu0 0
        %4482 = vmatpush1.bf16.msra.mxu0 0
        %4483 = vmatprep.subr.bf16.mxu0 0
        %4484 = vmatpush1.bf16.msra.mxu0 0
        %4485 = vmatprep.subr.bf16.mxu0 0
        %4486 = vmatpush1.bf16.msra.mxu0 0
        %4487 = vmatprep.subr.bf16.mxu0 0
        %4488 = vmatpush1.bf16.msra.mxu0 0
        %4489 = vmatprep.subr.bf16.mxu0 0
        %4490 = vmatpush1.bf16.msra.mxu0 0
        %4491 = vmatprep.subr.bf16.mxu0 0
        %4492 = vmatpush1.bf16.msra.mxu0 0
        %4493 = vmatprep.subr.bf16.mxu0 0
        %4494 = vmatpush1.bf16.msra.mxu0 0
        %4495 = vmatprep.subr.bf16.mxu0 0
        %4496 = vmatpush1.bf16.msra.mxu0 0
        %4497 = vmatprep.subr.bf16.mxu0 0
        %4498 = vmatpush1.bf16.msra.mxu0 0
        %4499 = vmatprep.mubr.bf16.mxu0 0
        %4500 = vmatmul.mubr.bf16.gmra.mrb[0].mxu0 %v4465
        %v4501 = vpop.f32.mrb[0].mxu0
        %v4502 = vadd.f32 %v4450, %v4501
        %v4503 = vpop.f32.mrb[0].mxu0
        %v4504 = vpop.f32.mrb[0].mxu0
        %v4505 = vadd.f32 %v4450, %v4504
        %v4506 = vpop.f32.mrb[0].mxu0
        %4507 = vdwg.mxu0
        %v4508 = vmax.f32 %v4502, 0.0
        %v4509 = vmax.f32 %v4505, 0.0
        %v4510 = vpack.c.bf16 %v4509, %v4508
        %v4511 = vld [vmem:[%s1797] sm:$0xf]
        %v4512 = vld [vmem:[%s1797 + $0x4] sm:$0xf]
        %v4513 = vld [vmem:[%s1797 + $0x8] sm:$0xf]
        %v4514 = vld [vmem:[%s1797 + $0xc] sm:$0xf]
        %v4515 = vld [vmem:[%s1797 + $0x10] sm:$0xf]
        %v4516 = vld [vmem:[%s1797 + $0x14] sm:$0xf]
        %v4517 = vld [vmem:[%s1797 + $0x18] sm:$0xf]
        %v4518 = vld [vmem:[%s1797 + $0x1c] sm:$0xf]
        %v4519 = vld [vmem:[%s1800] sm:$0x1]
        %v4521 = vlaneseq
        %v4522 = vshrl.u32 %v4521, 7
        %v4523 = vsub.s32 0, %v4522
        %v4524 = vrot.slane %v4519, %v4523
        %v4534 = vunpack.c.l.b16 %v4511
        %v4535 = vunpack.c.l.b16 %v4512
        %v4536 = vunpack.c.l.b16 %v4513
        %v4537 = vunpack.c.l.b16 %v4514
        %v4538 = vunpack.c.l.b16 %v4515
        %v4539 = vunpack.c.l.b16 %v4516
        %v4540 = vunpack.c.l.b16 %v4517
        %v4541 = vunpack.c.l.b16 %v4518
        %v4542 = vpack.c.b16 %v4535, %v4534
        %v4543 = vpack.c.b16 %v4537, %v4536
        %v4544 = vpack.c.b16 %v4539, %v4538
        %v4545 = vpack.c.b16 %v4541, %v4540
        %vm4550 = vcmask 523264
        %v4552 = vsel %vm4550, %v4510, 0
        %4554 = vmatprep.subr.bf16.mxu0 0
        %4555 = vmatpush1.bf16.msra.mxu0 %v4542
        %4556 = vmatprep.subr.bf16.mxu0 0
        %4557 = vmatpush1.bf16.msra.mxu0 %v4543
        %4558 = vmatprep.subr.bf16.mxu0 0
        %4559 = vmatpush1.bf16.msra.mxu0 %v4544
        %4560 = vmatprep.subr.bf16.mxu0 0
        %4561 = vmatpush1.bf16.msra.mxu0 %v4545
        %4562 = vmatprep.subr.bf16.mxu0 0
        %4563 = vmatpush1.bf16.msra.mxu0 0
        %4564 = vmatprep.subr.bf16.mxu0 0
        %4565 = vmatpush1.bf16.msra.mxu0 0
        %4566 = vmatprep.subr.bf16.mxu0 0
        %4567 = vmatpush1.bf16.msra.mxu0 0
        %4568 = vmatprep.subr.bf16.mxu0 0
        %4569 = vmatpush1.bf16.msra.mxu0 0
        %4570 = vmatprep.subr.bf16.mxu0 0
        %4571 = vmatpush1.bf16.msra.mxu0 0
        %4572 = vmatprep.subr.bf16.mxu0 0
        %4573 = vmatpush1.bf16.msra.mxu0 0
        %4574 = vmatprep.subr.bf16.mxu0 0
        %4575 = vmatpush1.bf16.msra.mxu0 0
        %4576 = vmatprep.subr.bf16.mxu0 0
        %4577 = vmatpush1.bf16.msra.mxu0 0
        %4578 = vmatprep.subr.bf16.mxu0 0
        %4579 = vmatpush1.bf16.msra.mxu0 0
        %4580 = vmatprep.subr.bf16.mxu0 0
        %4581 = vmatpush1.bf16.msra.mxu0 0
        %4582 = vmatprep.subr.bf16.mxu0 0
        %4583 = vmatpush1.bf16.msra.mxu0 0
        %4584 = vmatprep.subr.bf16.mxu0 0
        %4585 = vmatpush1.bf16.msra.mxu0 0
        %4586 = vmatprep.mubr.bf16.mxu0 0
        %4587 = vmatmul.mubr.bf16.gmra.mrb[0].mxu0 %v4552
        %v4588 = vpop.f32.mrb[0].mxu0
        %v4589 = vadd.f32 %v4524, %v4588
        %v4590 = vpop.f32.mrb[0].mxu0
        %v4591 = vpop.f32.mrb[0].mxu0
        %v4592 = vadd.f32 %v4524, %v4591
        %v4593 = vpop.f32.mrb[0].mxu0
        %4594 = vdwg.mxu0
        %v4595 = vadd.f32 %v4589, %v4438
        %v4596 = vadd.f32 %v4592, %v4439
        %v4597 = vld [vmem:[%s1803] sm:$0x1]
        %v4598 = vld [vmem:[%s1806] sm:$0x1]
        %v4599 = vsel %vm1993, %v4595, 0.0
        %4600 = vadd.xlane.f32.xlu0 %v4599
        %v4601 = vpop.xlane.xlu0 %4600
        %v4602 = vsel %vm1993, %v4596, 0.0
        %4603 = vadd.xlane.f32.xlu0 %v4602
        %v4604 = vpop.xlane.xlu0 %4603
        %v4605 = vmul.f32 %v4601, %v3146
        %v4606 = vmul.f32 %v4604, %v3146
        %v4607 = vsub.f32 %v4595, %v4605
        %v4608 = vsub.f32 %v4596, %v4606
        %v4609 = vmul.f32 %v4607, %v4607
        %v4610 = vmul.f32 %v4608, %v4608
        %v4611 = vsel %vm1993, %v4609, 0.0
        %4612 = vadd.xlane.f32.xlu0 %v4611
        %v4613 = vpop.xlane.xlu0 %4612
        %v4614 = vsel %vm1993, %v4610, 0.0
        %4615 = vadd.xlane.f32.xlu0 %v4614
        %v4616 = vpop.xlane.xlu0 %4615
        %v4617 = vmul.f32 %v4613, %v3146
        %v4618 = vmul.f32 %v4616, %v3146
        %v4619 = vadd.f32 %v4617, 1e-06
        %v4620 = vadd.f32 %v4618, 1e-06
        %v4621 = vrsqrt.pop %v4619
        %v4622 = vrsqrt.pop %v4620
        %v4623 = vmul.f32 %v4607, %v4621
        %v4624 = vmul.f32 %v4608, %v4622
        %v4626 = vlaneseq
        %v4627 = vshrl.u32 %v4626, 7
        %v4628 = vsub.s32 0, %v4627
        %v4629 = vrot.slane %v4597, %v4628
        %v4631 = vmul.f32 %v4623, %v4629
        %v4632 = vmul.f32 %v4624, %v4629
        %v4634 = vlaneseq
        %v4635 = vshrl.u32 %v4634, 7
        %v4636 = vsub.s32 0, %v4635
        %v4637 = vrot.slane %v4598, %v4636
        %v4639 = vadd.f32 %v4631, %v4637
        %v4640 = vadd.f32 %v4632, %v4637
        %v4641 = vmul.f32 %v4639, %v3186
        %v4642 = vmul.f32 %v4640, %v3191
        %4643 = vst.msk [vmem:[#allocation2] sm:$0xff] %vm1993, %v4641
        %4644 = vst.msk [vmem:[#allocation2 + $0x8] sm:$0xff] %vm1993, %v4642
        %p4645 = scmp.eq.s32.totalorder %s108, 1
        // Predicated region
        $region229: #{tpu_custom_call.1} parent=151 // pred_check
          %p4646 = pneg %p4645
        $region230: #{tpu_custom_call.1} parent=151 // pred_check_branch
          %4648 = sbr.rel (%p4646) target = $region232
        $region231: #{tpu_custom_call.1} parent=151 // pred_region
          %4649 = vst.msk [vmem:[#allocation36] sm:$0xff] %vm1993, %v4641
          %4650 = vst.msk [vmem:[#allocation36 + $0x8] sm:$0xff] %vm1993, %v4642
        $region232: #{tpu_custom_call.1} parent=151 // pred_fallthru
          _
        // Predicated region
        $region233: #{tpu_custom_call.1} parent=151 // pred_check
          %p4651 = pneg %p981
        $region234: #{tpu_custom_call.1} parent=151 // pred_check_branch
          %4653 = sbr.rel (%p4651) target = $region236
        $region235: #{tpu_custom_call.1} parent=151 // pred_region
          %s4654 = smul.u32 2, %s107
          %s4656 = ssub.s32 256, 256
          %4657 = vsyncadd [#allocation9], %s4656
          %s4658 = smul.addr %s4654, 128
          %s4659 = scalar_lea.hbm %s67, %s4658
          %s4660 = sshll.u32 [#allocation36], 4
          %s4661 = int_to_ptr.vmem [resolvable:$true] %s4660
          %4666 = dma.vmem_to_hbm [thread:$0]  %s4661, 256, %s4659, [#allocation9], 128, 128, 8
        $region236: #{tpu_custom_call.1} parent=151 // pred_fallthru
          _
        // Predicated region
        $region237: #{tpu_custom_call.1} parent=151 // pred_check
          %p4667 = pneg %p981
        $region238: #{tpu_custom_call.1} parent=151 // pred_check_branch
          %4669 = sbr.rel (%p4667) target = $region240
        $region239: #{tpu_custom_call.1} parent=151 // pred_region
          %4670 = dma.done [#allocation9], 256
        $region240: #{tpu_custom_call.1} parent=151 // pred_fallthru
          _
      $region152: #{tpu_custom_call.1} parent=5 // pred_fallthru
        _
      %p4671 = scmp.le.s32.totalorder 2, %s98
      // Predicated region
      $region241: #{tpu_custom_call.1} parent=5 // pred_check
        %p4672 = pneg %p4671
      $region242: #{tpu_custom_call.1} parent=5 // pred_check_branch
        %4674 = sbr.rel (%p4672) target = $region244
      $region243: #{tpu_custom_call.1} parent=5 // pred_region
        %s4675 = ssub.s32 %s98, 2
      $region244: #{tpu_custom_call.1} parent=5 // pred_fallthru
        _
    $region6: #{tpu_custom_call.1} parent=1 // loop_footer
      %s102 = sadd.s32 1, %s98
    $region7: #{tpu_custom_call.1} parent=1 // loop_footer_branch
      %97 = sbr.rel target = $region3
    $region8: #{tpu_custom_call.1} parent=1 // loop_exit
      _
    %4676 = vsyncpa [#allocation8], 1
    %s4677 = scalar_lea.sflag [#allocation8], 1
    %4678 = vsyncpa %s4677, 1
    %4679 = vsyncpa [#allocation11], 1
    %4680 = vsyncpa [#allocation14], 1
    %4681 = vsyncpa [#allocation17], 1
    %s4682 = scalar_lea.sflag [#allocation17], 1
    %4683 = vsyncpa %s4682, 1
    %4684 = vsyncpa [#allocation20], 1
    %s4685 = scalar_lea.sflag [#allocation20], 1
    %4686 = vsyncpa %s4685, 1
    %4687 = vsyncpa [#allocation23], 1
    %s4688 = scalar_lea.sflag [#allocation23], 1
    %4689 = vsyncpa %s4688, 1
    %4690 = vsyncpa [#allocation26], 1
    %s4691 = scalar_lea.sflag [#allocation26], 1
    %4692 = vsyncpa %s4691, 1
    %4693 = vsyncpa [#allocation29], 1
    %s4694 = scalar_lea.sflag [#allocation29], 1
    %4695 = vsyncpa %s4694, 1
    %4696 = vsyncpa [#allocation32], 1
    %s4697 = scalar_lea.sflag [#allocation32], 1
    %4698 = vsyncpa %s4697, 1
    %4699 = vsyncpa [#allocation35], 1
    %s4700 = scalar_lea.sflag [#allocation35], 1
    %4701 = vsyncpa %s4700, 1
    %4702 = vsyncpa [#allocation9], 1
    %s4703 = scalar_lea.sflag [#allocation9], 1
    %4704 = vsyncpa %s4703, 1

</llo_original>
